<compile_context>
chip_gen: v5e
topology: v5e:2x2
jax: 0.10.0
libtpu: 0.0.40
codegen_flags: <defaults>
</compile_context>

<pallas_src>
import functools

import jax
import jax.numpy as jnp
from jax.experimental import pallas as pl
from jax.experimental.pallas import tpu as pltpu

EPS = 1e-5


def _conv3x3_same_acc(img, w):
    """3x3 'same' conv via shifted-window MXU dots, f32 accumulation.

    img: (Nb, H, W, C) activations in the MXU compute dtype.
    w  : (9*C, Co) taps, rows ordered (ky, kx, cin)-major.
    Returns (Nb*H*W, Co) float32 accumulator.

    Working set is one halo-padded copy (+ a (.., 3*C) dx-stack when C is small) plus
    the f32 accumulator -- no (H*W, 9*C) im2col slab.
    """
    Nb, H, W, C = img.shape
    z_row = jnp.zeros((Nb, 1, W, C), img.dtype)
    z_col = jnp.zeros((Nb, H + 2, 1, C), img.dtype)
    xp = jnp.concatenate([z_row, img, z_row], axis=1)        # (Nb, H+2, W,   C)
    xp = jnp.concatenate([z_col, xp, z_col], axis=2)         # (Nb, H+2, W+2, C)

    acc = None
    if C >= 128:
        # K=C already fills the MXU: 9 shifted dots straight off the padded copy.
        for t in range(9):
            dy, dx = divmod(t, 3)
            win = xp[:, dy:dy + H, dx:dx + W, :].reshape(Nb * H * W, C)
            d = jnp.dot(win, w[t * C:(t + 1) * C, :],
                        preferred_element_type=jnp.float32)
            acc = d if acc is None else acc + d
    else:
        # Small C: stack the 3 dx taps along channels once (K=3*C), loop dy only.
        xd = jnp.concatenate([xp[:, :, dx:dx + W, :] for dx in range(3)],
                             axis=-1)                        # (Nb, H+2, W, 3*C)
        for dy in range(3):
            win = xd[:, dy:dy + H].reshape(Nb * H * W, 3 * C)
            d = jnp.dot(win, w[dy * 3 * C:(dy + 1) * 3 * C, :],
                        preferred_element_type=jnp.float32)
            acc = d if acc is None else acc + d
    return acc


def _tile_stats(acc):
    """Per-tile [sum, centered sum-of-squares] -> (1, 2, C) f32 (Chan-combinable)."""
    n = acc.shape[0]
    s = jnp.sum(acc, axis=0, keepdims=True)                  # (1, C)
    mu = s * (1.0 / n)
    d = acc - mu
    ssq = jnp.sum(d * d, axis=0, keepdims=True)              # (1, C)
    return jnp.concatenate([s, ssq], axis=0)[None]           # (1, 2, C)


def _conv1_stats_kernel(x_ref, w_ref, y_ref, stats_ref):
    # x_ref: (Nb,H,W,Cin); w_ref: (9*Cin,Cm); y_ref: (Nb,H*W,Cm) compute dtype;
    # stats_ref: (1,2,Cm) f32 per-tile partial BN1 stats.
    Nb, H, W, _ = x_ref.shape
    Cm = w_ref.shape[1]
    acc = _conv3x3_same_acc(x_ref[...], w_ref[...])          # (Nb*H*W, Cm) f32
    y_ref[...] = acc.reshape(Nb, H * W, Cm).astype(y_ref.dtype)
    stats_ref[...] = _tile_stats(acc)


def _bn_relu_conv2_stats_kernel(y1_ref, sc_ref, sh_ref, w_ref, y2_ref, stats_ref,
                                *, H, W):
    # BN1 folded into one per-channel FMA, fused with ReLU (f32 math), then conv2.
    Nb, HW, Cm = y1_ref.shape
    Co = w_ref.shape[1]
    h = jnp.maximum(y1_ref[...].astype(jnp.float32) * sc_ref[...] + sh_ref[...], 0.0)
    h = h.astype(w_ref.dtype).reshape(Nb, H, W, Cm)
    acc = _conv3x3_same_acc(h, w_ref[...])                   # (Nb*H*W, Co) f32
    y2_ref[...] = acc.reshape(Nb, HW, Co).astype(y2_ref.dtype)
    stats_ref[...] = _tile_stats(acc)


def _bn_relu_nchw_kernel(y_ref, sc_ref, sh_ref, o_ref):
    # y_ref: (Nb, H*W, Co) compute dtype; sc/sh: (1, Co) f32; o_ref: (Nb, Co, H*W) f32.
    # The per-image 2D transpose fuses the NHWC->NCHW relayout into this pass; the
    # store stays lane-dense (last dim H*W >= 128).
    Nb = y_ref.shape[0]
    for b in range(Nb):                                      # tiny static unroll
        a = jnp.maximum(y_ref[b].astype(jnp.float32) * sc_ref[...] + sh_ref[...], 0.0)
        o_ref[b] = a.T


def _scale_shift(stats, gamma, beta, tile_count):
    """Reduce per-tile [sum, centered sumsq] to the folded BN affine (scale, shift).

    stats: (T, 2, C) f32; each tile covers `tile_count` activations per channel.
    Uses Chan's parallel-variance combine (avoids E[x^2]-E[x]^2 cancellation).
    """
    s_t = stats[:, 0, :]                                     # (T, C)
    m2_t = stats[:, 1, :]
    n = stats.shape[0] * tile_count
    mean = jnp.sum(s_t, axis=0) / n
    mean_t = s_t / tile_count
    m2 = jnp.sum(m2_t, axis=0) + tile_count * jnp.sum((mean_t - mean) ** 2, axis=0)
    var = jnp.maximum(m2 / n, 0.0)                           # biased var (train-mode BN)
    scale = gamma * jax.lax.rsqrt(var + EPS)
    shift = beta - mean * scale
    return scale.astype(jnp.float32), shift.astype(jnp.float32)


def _vmem_limit_bytes():
    # ~3/4 of physical VMEM: ~96 MiB-class on v5e/v6e (128 MiB), ~48 MiB on v7x (64 MiB).
    try:
        cap = int(pltpu.get_tpu_info().vmem_capacity_bytes)
    except Exception:                                        # unknown chip / interpret
        cap = 64 * 1024 * 1024
    return int(min(cap * 3 // 4, 100 * 1024 * 1024))


def _pick_batch_tile(n, per_image_bytes, budget_bytes):
    """Images per grid step: big enough to amortize the ~0.35us/step overhead and
    reach HBM peak DMAs, small enough for the VMEM budget, and never fewer than 2
    grid steps (so v7x megacore sharding has work for both TensorCores)."""
    nb = int(max(1, min(n, budget_bytes // max(per_image_bytes, 1))))
    while nb > 1 and (n % nb != 0 or n // nb < 2):
        nb -= 1
    return nb


@functools.partial(jax.jit, static_argnames=("compute_dtype",))
def double_conv_forward(x_nchw, w1_oihw, b1, g1, be1, w2_oihw, b2, g2, be2,
                        compute_dtype=jnp.bfloat16):
    """PyTorch DoubleConv forward (NCHW in / NCHW out), training-mode BatchNorm."""
    # Conv bias is cancelled exactly by train-mode BN's mean subtraction; drop it.
    # (Only valid for training-mode BN -- do not reuse with running-stats/eval BN.)
    del b1, b2
    N, Cin, H, W = x_nchw.shape
    Cm = w1_oihw.shape[0]
    Co = w2_oihw.shape[0]
    HW = H * W

    # Layout plumbing (cheap XLA): NCHW -> NHWC input; OIHW -> (9*Ci, Co) weights in
    # (ky, kx, cin)-major row order; MXU inputs in compute_dtype.
    x = jnp.transpose(x_nchw, (0, 2, 3, 1)).astype(compute_dtype)
    w1 = jnp.transpose(w1_oihw, (2, 3, 1, 0)).reshape(9 * Cin, Cm).astype(compute_dtype)
    w2 = jnp.transpose(w2_oihw, (2, 3, 1, 0)).reshape(9 * Cm, Co).astype(compute_dtype)

    it = jnp.dtype(compute_dtype).itemsize
    vmem_limit = _vmem_limit_bytes()

    # Rough per-image VMEM need of the heaviest pass (double-buffered in/out blocks,
    # halo pad + dx stack, f32 accumulator); used to size the batch tile.
    cmax_in, cmax_out = max(Cin, Cm), max(Cm, Co)
    per_img = HW * (2 * cmax_in * it          # input block, double buffered
                    + 4 * cmax_in * it        # halo-padded copy + dx stack
                    + 4 * cmax_out            # f32 accumulator
                    + 2 * cmax_out * it)      # output block, double buffered
    Nb = _pick_batch_tile(N, per_img, budget_bytes=vmem_limit // 3)
    T = N // Nb

    cparams = pltpu.CompilerParams(
        dimension_semantics=("parallel",),     # independent per-tile steps
        vmem_limit_bytes=vmem_limit)

    # TODO(synk): for very large UNet stages (e.g. 256x256x64+) additionally tile the
    # H axis with a 1-row halo (manual make_async_copy of overlapping row windows) so
    # the per-step working set stays within v7x's 64 MiB VMEM even at Nb=1.
    # TODO(synk): single-buffer the grid-invariant w/scale/shift blocks
    # (pipeline_mode=pl.Buffered(1)) once validated on this JAX version.

    # ---- pass A: conv1 + per-tile BN1 partial stats ---------------------------------
    y1, st1 = pl.pallas_call(
        _conv1_stats_kernel,
        grid=(T,),
        in_specs=[pl.BlockSpec((Nb, H, W, Cin), lambda t: (t, 0, 0, 0)),
                  pl.BlockSpec((9 * Cin, Cm), lambda t: (0, 0))],
        out_specs=(pl.BlockSpec((Nb, HW, Cm), lambda t: (t, 0, 0)),
                   pl.BlockSpec((1, 2, Cm), lambda t: (t, 0, 0))),
        out_shape=(jax.ShapeDtypeStruct((N, HW, Cm), compute_dtype),
                   jax.ShapeDtypeStruct((T, 2, Cm), jnp.float32)),
        compiler_params=cparams,
        cost_estimate=pl.CostEstimate(
            flops=2 * N * HW * 9 * Cin * Cm, transcendentals=0,
            bytes_accessed=(N * HW * (Cin + Cm) + 9 * Cin * Cm) * it + 8 * T * Cm),
    )(x, w1)
    sc1, sh1 = _scale_shift(st1, g1, be1, Nb * HW)

    # ---- pass B: BN1 FMA + ReLU + conv2 + per-tile BN2 partial stats -----------------
    y2, st2 = pl.pallas_call(
        functools.partial(_bn_relu_conv2_stats_kernel, H=H, W=W),
        grid=(T,),
        in_specs=[pl.BlockSpec((Nb, HW, Cm), lambda t: (t, 0, 0)),
                  pl.BlockSpec((1, Cm), lambda t: (0, 0)),
                  pl.BlockSpec((1, Cm), lambda t: (0, 0)),
                  pl.BlockSpec((9 * Cm, Co), lambda t: (0, 0))],
        out_specs=(pl.BlockSpec((Nb, HW, Co), lambda t: (t, 0, 0)),
                   pl.BlockSpec((1, 2, Co), lambda t: (t, 0, 0))),
        out_shape=(jax.ShapeDtypeStruct((N, HW, Co), compute_dtype),
                   jax.ShapeDtypeStruct((T, 2, Co), jnp.float32)),
        compiler_params=cparams,
        cost_estimate=pl.CostEstimate(
            flops=2 * N * HW * 9 * Cm * Co + 3 * N * HW * Cm, transcendentals=0,
            bytes_accessed=(N * HW * (Cm + Co) + 9 * Cm * Co) * it
            + 4 * (2 * Cm + 2 * T * Co)),
    )(y1, sc1.reshape(1, Cm), sh1.reshape(1, Cm), w2)
    sc2, sh2 = _scale_shift(st2, g2, be2, Nb * HW)

    # ---- pass C: BN2 FMA + ReLU + fused NHWC->NCHW store (no extra XLA transpose) ----
    out = pl.pallas_call(
        _bn_relu_nchw_kernel,
        grid=(T,),
        in_specs=[pl.BlockSpec((Nb, HW, Co), lambda t: (t, 0, 0)),
                  pl.BlockSpec((1, Co), lambda t: (0, 0)),
                  pl.BlockSpec((1, Co), lambda t: (0, 0))],
        out_specs=pl.BlockSpec((Nb, Co, HW), lambda t: (t, 0, 0)),
        out_shape=jax.ShapeDtypeStruct((N, Co, HW), jnp.float32),
        compiler_params=cparams,
        cost_estimate=pl.CostEstimate(
            flops=2 * N * HW * Co, transcendentals=0,
            bytes_accessed=N * HW * Co * (it + 4) + 8 * Co),
    )(y2, sc2.reshape(1, Co), sh2.reshape(1, Co))

    # Free reshape of contiguous trailing dims back to the module's NCHW contract.
    return out.reshape(N, Co, H, W)


def _reference_nchw(x, w1_oihw, b1, g1, be1, w2_oihw, b2, g2, be2):
    """Pure-JAX replica of the PyTorch DoubleConv forward (training-mode BN)."""
    def conv_bn_relu(x, w, b, g, be):
        y = jax.lax.conv_general_dilated(
            x, w, window_strides=(1, 1), padding=((1, 1), (1, 1)),
            dimension_numbers=("NCHW", "OIHW", "NCHW"),
            precision=jax.lax.Precision.HIGHEST)
        y = y + b[None, :, None, None]
        mean = jnp.mean(y, axis=(0, 2, 3), keepdims=True)
        var = jnp.mean((y - mean) ** 2, axis=(0, 2, 3), keepdims=True)
        y = (y - mean) * jax.lax.rsqrt(var + EPS)
        y = y * g[None, :, None, None] + be[None, :, None, None]
        return jnp.maximum(y, 0.0)

    h = conv_bn_relu(x, w1_oihw, b1, g1, be1)
    return conv_bn_relu(h, w2_oihw, b2, g2, be2)


if __name__ == "__main__":
    N, Cin, H, W = 2, 4, 16, 16
    Cm = Co = 8  # mid_channels defaults to out_channels

    key = jax.random.PRNGKey(0)
    ks = jax.random.split(key, 9)
    x_nchw = jax.random.normal(ks[0], (N, Cin, H, W), jnp.float32)
    w1 = 0.2 * jax.random.normal(ks[1], (Cm, Cin, 3, 3), jnp.float32)
    b1 = 0.1 * jax.random.normal(ks[2], (Cm,), jnp.float32)
    g1 = 1.0 + 0.1 * jax.random.normal(ks[3], (Cm,), jnp.float32)
    be1 = 0.1 * jax.random.normal(ks[4], (Cm,), jnp.float32)
    w2 = 0.2 * jax.random.normal(ks[5], (Co, Cm, 3, 3), jnp.float32)
    b2 = 0.1 * jax.random.normal(ks[6], (Co,), jnp.float32)
    g2 = 1.0 + 0.1 * jax.random.normal(ks[7], (Co,), jnp.float32)
    be2 = 0.1 * jax.random.normal(ks[8], (Co,), jnp.float32)

    ref = _reference_nchw(x_nchw, w1, b1, g1, be1, w2, b2, g2, be2)

    # f32 MXU inputs: strict check against the f32 HIGHEST-precision reference.
    out_f32 = jax.block_until_ready(double_conv_forward(
        x_nchw, w1, b1, g1, be1, w2, b2, g2, be2, compute_dtype=jnp.float32))
    assert out_f32.shape == (N, Co, H, W)
    err_f32 = float(jnp.max(jnp.abs(out_f32 - ref)))
    assert err_f32 < 1e-3, f"f32 max abs error {err_f32}"

    # bf16 MXU inputs + bf16 inter-pass intermediates (production path), f32 accum.
    out_bf16 = jax.block_until_ready(double_conv_forward(
        x_nchw, w1, b1, g1, be1, w2, b2, g2, be2, compute_dtype=jnp.bfloat16))
    err_bf16 = float(jnp.max(jnp.abs(out_bf16 - ref)))
    assert err_bf16 < 0.25, f"bf16 max abs error {err_bf16}"

    print("KERNEL_OK")
</pallas_src>

<mosaic_0001>
module attributes {stable_mosaic.version = 11 : i64} {
  func.func @_conv1_stats_kernel(%arg0: i32, %arg1: memref<1x16x16x4xf32, #tpu.memory_space<vmem>>, %arg2: memref<36x8xf32, #tpu.memory_space<vmem>>, %arg3: memref<1x256x8xf32, #tpu.memory_space<vmem>>, %arg4: memref<1x2x8xf32, #tpu.memory_space<vmem>>) attributes {dimension_semantics = [#tpu.dimension_semantics<parallel>], iteration_bounds = array<i64: 2>, scalar_prefetch = 0 : i64, scratch_operands = 0 : i64, tpu.core_type = #tpu.core_type<tc>, window_params = [{transform_indices = @transform_0, window_bounds = array<i64: 1, 16, 16, 4>}, {pipeline_mode = #tpu.pipeline_mode<synchronous>, transform_indices = @transform_1, window_bounds = array<i64: 36, 8>}, {transform_indices = @transform_2, window_bounds = array<i64: 1, 256, 8>}, {transform_indices = @transform_3, window_bounds = array<i64: 1, 2, 8>}]} {
    %c0 = arith.constant 0 : index
    %c0_0 = arith.constant 0 : index
    %c0_1 = arith.constant 0 : index
    %c0_2 = arith.constant 0 : index
    %0 = vector.load %arg1[%c0, %c0_0, %c0_1, %c0_2] : memref<1x16x16x4xf32, #tpu.memory_space<vmem>>, vector<1x16x16x4xf32>
    %c0_3 = arith.constant 0 : index
    %c0_4 = arith.constant 0 : index
    %1 = vector.load %arg2[%c0_3, %c0_4] : memref<36x8xf32, #tpu.memory_space<vmem>>, vector<36x8xf32>
    %cst = arith.constant 0.000000e+00 : f32
    %2 = vector.broadcast %cst : f32 to vector<1x1x16x4xf32>
    %cst_5 = arith.constant 0.000000e+00 : f32
    %3 = vector.broadcast %cst_5 : f32 to vector<1x18x1x4xf32>
    %4 = tpu.concatenate %2, %0, %2 in 1 : vector<1x1x16x4xf32>, vector<1x16x16x4xf32>, vector<1x1x16x4xf32> -> vector<1x18x16x4xf32>
    %5 = tpu.concatenate %3, %4, %3 in 2 : vector<1x18x1x4xf32>, vector<1x18x16x4xf32>, vector<1x18x1x4xf32> -> vector<1x18x18x4xf32>
    %6 = vector.extract_strided_slice %5 {offsets = [0, 0, 0, 0], sizes = [1, 18, 16, 4], strides = [1, 1, 1, 1]} : vector<1x18x18x4xf32> to vector<1x18x16x4xf32>
    %7 = vector.extract_strided_slice %5 {offsets = [0, 0, 1, 0], sizes = [1, 18, 16, 4], strides = [1, 1, 1, 1]} : vector<1x18x18x4xf32> to vector<1x18x16x4xf32>
    %8 = vector.extract_strided_slice %5 {offsets = [0, 0, 2, 0], sizes = [1, 18, 16, 4], strides = [1, 1, 1, 1]} : vector<1x18x18x4xf32> to vector<1x18x16x4xf32>
    %9 = tpu.concatenate %6, %7, %8 in 3 : vector<1x18x16x4xf32>, vector<1x18x16x4xf32>, vector<1x18x16x4xf32> -> vector<1x18x16x12xf32>
    %10 = vector.extract_strided_slice %9 {offsets = [0, 0, 0, 0], sizes = [1, 16, 16, 12], strides = [1, 1, 1, 1]} : vector<1x18x16x12xf32> to vector<1x16x16x12xf32>
    %11 = vector.shape_cast %10 : vector<1x16x16x12xf32> to vector<256x12xf32>
    %12 = vector.extract_strided_slice %1 {offsets = [0, 0], sizes = [12, 8], strides = [1, 1]} : vector<36x8xf32> to vector<12x8xf32>
    %cst_6 = arith.constant dense<0.000000e+00> : vector<256x8xf32>
    %13 = tpu.matmul %11, %12, %cst_6 {dimension_numbers = #tpu.dot_dimension_numbers<[1], [0], [0], [1], [0, 0, 1, 1], [], []>} : vector<256x12xf32>, vector<12x8xf32>, vector<256x8xf32> -> vector<256x8xf32>
    %14 = vector.extract_strided_slice %9 {offsets = [0, 1, 0, 0], sizes = [1, 16, 16, 12], strides = [1, 1, 1, 1]} : vector<1x18x16x12xf32> to vector<1x16x16x12xf32>
    %15 = vector.shape_cast %14 : vector<1x16x16x12xf32> to vector<256x12xf32>
    %16 = vector.extract_strided_slice %1 {offsets = [12, 0], sizes = [12, 8], strides = [1, 1]} : vector<36x8xf32> to vector<12x8xf32>
    %cst_7 = arith.constant dense<0.000000e+00> : vector<256x8xf32>
    %17 = tpu.matmul %15, %16, %cst_7 {dimension_numbers = #tpu.dot_dimension_numbers<[1], [0], [0], [1], [0, 0, 1, 1], [], []>} : vector<256x12xf32>, vector<12x8xf32>, vector<256x8xf32> -> vector<256x8xf32>
    %18 = arith.addf %13, %17 : vector<256x8xf32>
    %19 = vector.extract_strided_slice %9 {offsets = [0, 2, 0, 0], sizes = [1, 16, 16, 12], strides = [1, 1, 1, 1]} : vector<1x18x16x12xf32> to vector<1x16x16x12xf32>
    %20 = vector.shape_cast %19 : vector<1x16x16x12xf32> to vector<256x12xf32>
    %21 = vector.extract_strided_slice %1 {offsets = [24, 0], sizes = [12, 8], strides = [1, 1]} : vector<36x8xf32> to vector<12x8xf32>
    %cst_8 = arith.constant dense<0.000000e+00> : vector<256x8xf32>
    %22 = tpu.matmul %20, %21, %cst_8 {dimension_numbers = #tpu.dot_dimension_numbers<[1], [0], [0], [1], [0, 0, 1, 1], [], []>} : vector<256x12xf32>, vector<12x8xf32>, vector<256x8xf32> -> vector<256x8xf32>
    %23 = arith.addf %18, %22 : vector<256x8xf32>
    %24 = vector.shape_cast %23 : vector<256x8xf32> to vector<1x256x8xf32>
    %c0_9 = arith.constant 0 : index
    %c0_10 = arith.constant 0 : index
    %c0_11 = arith.constant 0 : index
    %25 = vector.load %arg3[%c0_9, %c0_10, %c0_11] : memref<1x256x8xf32, #tpu.memory_space<vmem>>, vector<1x256x8xf32>
    tpu.vector_store %arg3[%c0_9, %c0_10, %c0_11], %24 {strides = array<i32>} : memref<1x256x8xf32, #tpu.memory_space<vmem>>, vector<1x256x8xf32>,
    %cst_12 = arith.constant dense<0.000000e+00> : vector<8xf32>
    %26 = vector.multi_reduction <add>, %23, %cst_12 [0] : vector<256x8xf32> to vector<8xf32>
    %27 = vector.shape_cast %26 : vector<8xf32> to vector<1x8xf32>
    %cst_13 = arith.constant 3.906250e-03 : f32
    %28 = vector.broadcast %cst_13 : f32 to vector<1x8xf32>
    %29 = arith.mulf %27, %28 : vector<1x8xf32>
    %30 = vector.broadcast %29 : vector<1x8xf32> to vector<256x8xf32>
    %31 = arith.subf %23, %30 : vector<256x8xf32>
    %32 = arith.mulf %31, %31 : vector<256x8xf32>
    %cst_14 = arith.constant dense<0.000000e+00> : vector<8xf32>
    %33 = vector.multi_reduction <add>, %32, %cst_14 [0] : vector<256x8xf32> to vector<8xf32>
    %34 = vector.shape_cast %33 : vector<8xf32> to vector<1x8xf32>
    %35 = tpu.concatenate %27, %34 in 0 : vector<1x8xf32>, vector<1x8xf32> -> vector<2x8xf32>
    %36 = vector.shape_cast %35 : vector<2x8xf32> to vector<1x2x8xf32>
    %c0_15 = arith.constant 0 : index
    %c0_16 = arith.constant 0 : index
    %c0_17 = arith.constant 0 : index
    %37 = vector.load %arg4[%c0_15, %c0_16, %c0_17] : memref<1x2x8xf32, #tpu.memory_space<vmem>>, vector<1x2x8xf32>
    tpu.vector_store %arg4[%c0_15, %c0_16, %c0_17], %36 {strides = array<i32>} : memref<1x2x8xf32, #tpu.memory_space<vmem>>, vector<1x2x8xf32>,
    return
  }
  func.func @transform_0(%arg0: i32) -> (i32, i32, i32, i32) {
    %c0_i32 = arith.constant 0 : i32
    %c0_i32_0 = arith.constant 0 : i32
    %c0_i32_1 = arith.constant 0 : i32
    %c0_i32_2 = arith.constant 0 : i32
    return %arg0, %c0_i32, %c0_i32_0, %c0_i32_1 : i32, i32, i32, i32
  }
  func.func @transform_1(%arg0: i32) -> (i32, i32) {
    %c0_i32 = arith.constant 0 : i32
    %c0_i32_0 = arith.constant 0 : i32
    %c0_i32_1 = arith.constant 0 : i32
    return %c0_i32, %c0_i32_0 : i32, i32
  }
  func.func @transform_2(%arg0: i32) -> (i32, i32, i32) {
    %c0_i32 = arith.constant 0 : i32
    %c0_i32_0 = arith.constant 0 : i32
    %c0_i32_1 = arith.constant 0 : i32
    return %arg0, %c0_i32, %c0_i32_0 : i32, i32, i32
  }
  func.func @transform_3(%arg0: i32) -> (i32, i32, i32) {
    %c0_i32 = arith.constant 0 : i32
    %c0_i32_0 = arith.constant 0 : i32
    %c0_i32_1 = arith.constant 0 : i32
    return %arg0, %c0_i32, %c0_i32_0 : i32, i32, i32
  }
}

module attributes {stable_mosaic.version = 11 : i64} {
  func.func @_bn_relu_nchw_kernel(%arg0: i32, %arg1: memref<1x256x8xf32, #tpu.memory_space<vmem>>, %arg2: memref<1x8xf32, #tpu.memory_space<vmem>>, %arg3: memref<1x8xf32, #tpu.memory_space<vmem>>, %arg4: memref<1x8x256xf32, #tpu.memory_space<vmem>>) attributes {dimension_semantics = [#tpu.dimension_semantics<parallel>], iteration_bounds = array<i64: 2>, scalar_prefetch = 0 : i64, scratch_operands = 0 : i64, tpu.core_type = #tpu.core_type<tc>, window_params = [{transform_indices = @transform_0, window_bounds = array<i64: 1, 256, 8>}, {pipeline_mode = #tpu.pipeline_mode<synchronous>, transform_indices = @transform_1, window_bounds = array<i64: 1, 8>}, {pipeline_mode = #tpu.pipeline_mode<synchronous>, transform_indices = @transform_2, window_bounds = array<i64: 1, 8>}, {transform_indices = @transform_3, window_bounds = array<i64: 1, 8, 256>}]} {
    %c0 = arith.constant 0 : index
    %c0_0 = arith.constant 0 : index
    %c0_1 = arith.constant 0 : index
    %0 = vector.load %arg1[%c0, %c0_0, %c0_1] : memref<1x256x8xf32, #tpu.memory_space<vmem>>, vector<1x256x8xf32>
    %1 = vector.shape_cast %0 : vector<1x256x8xf32> to vector<256x8xf32>
    %c0_2 = arith.constant 0 : index
    %c0_3 = arith.constant 0 : index
    %2 = vector.load %arg2[%c0_2, %c0_3] : memref<1x8xf32, #tpu.memory_space<vmem>>, vector<1x8xf32>
    %3 = vector.broadcast %2 : vector<1x8xf32> to vector<256x8xf32>
    %4 = arith.mulf %1, %3 : vector<256x8xf32>
    %c0_4 = arith.constant 0 : index
    %c0_5 = arith.constant 0 : index
    %5 = vector.load %arg3[%c0_4, %c0_5] : memref<1x8xf32, #tpu.memory_space<vmem>>, vector<1x8xf32>
    %6 = vector.broadcast %5 : vector<1x8xf32> to vector<256x8xf32>
    %7 = arith.addf %4, %6 : vector<256x8xf32>
    %cst = arith.constant 0.000000e+00 : f32
    %8 = vector.broadcast %cst : f32 to vector<256x8xf32>
    %9 = arith.maximumf %7, %8 : vector<256x8xf32>
    %10 = tpu.transpose %9, [1, 0] : vector<256x8xf32> -> vector<8x256xf32>
    %c0_6 = arith.constant 0 : index
    %c0_7 = arith.constant 0 : index
    %c0_8 = arith.constant 0 : index
    %11 = vector.load %arg4[%c0_6, %c0_7, %c0_8] : memref<1x8x256xf32, #tpu.memory_space<vmem>>, vector<1x8x256xf32>
    %12 = vector.shape_cast %11 : vector<1x8x256xf32> to vector<8x256xf32>
    %13 = vector.shape_cast %10 : vector<8x256xf32> to vector<1x8x256xf32>
    tpu.vector_store %arg4[%c0_6, %c0_7, %c0_8], %13 {strides = array<i32>} : memref<1x8x256xf32, #tpu.memory_space<vmem>>, vector<1x8x256xf32>,
    return
  }
  func.func @transform_0(%arg0: i32) -> (i32, i32, i32) {
    %c0_i32 = arith.constant 0 : i32
    %c0_i32_0 = arith.constant 0 : i32
    %c0_i32_1 = arith.constant 0 : i32
    return %arg0, %c0_i32, %c0_i32_0 : i32, i32, i32
  }
  func.func @transform_1(%arg0: i32) -> (i32, i32) {
    %c0_i32 = arith.constant 0 : i32
    %c0_i32_0 = arith.constant 0 : i32
    %c0_i32_1 = arith.constant 0 : i32
    return %c0_i32, %c0_i32_0 : i32, i32
  }
  func.func @transform_2(%arg0: i32) -> (i32, i32) {
    %c0_i32 = arith.constant 0 : i32
    %c0_i32_0 = arith.constant 0 : i32
    %c0_i32_1 = arith.constant 0 : i32
    return %c0_i32, %c0_i32_0 : i32, i32
  }
  func.func @transform_3(%arg0: i32) -> (i32, i32, i32) {
    %c0_i32 = arith.constant 0 : i32
    %c0_i32_0 = arith.constant 0 : i32
    %c0_i32_1 = arith.constant 0 : i32
    return %arg0, %c0_i32, %c0_i32_0 : i32, i32, i32
  }
}

module attributes {stable_mosaic.version = 11 : i64} {
  func.func @_bn_relu_conv2_stats_kernel(%arg0: i32, %arg1: memref<1x256x8xf32, #tpu.memory_space<vmem>>, %arg2: memref<1x8xf32, #tpu.memory_space<vmem>>, %arg3: memref<1x8xf32, #tpu.memory_space<vmem>>, %arg4: memref<72x8xf32, #tpu.memory_space<vmem>>, %arg5: memref<1x256x8xf32, #tpu.memory_space<vmem>>, %arg6: memref<1x2x8xf32, #tpu.memory_space<vmem>>) attributes {dimension_semantics = [#tpu.dimension_semantics<parallel>], iteration_bounds = array<i64: 2>, scalar_prefetch = 0 : i64, scratch_operands = 0 : i64, tpu.core_type = #tpu.core_type<tc>, window_params = [{transform_indices = @transform_0, window_bounds = array<i64: 1, 256, 8>}, {pipeline_mode = #tpu.pipeline_mode<synchronous>, transform_indices = @transform_1, window_bounds = array<i64: 1, 8>}, {pipeline_mode = #tpu.pipeline_mode<synchronous>, transform_indices = @transform_2, window_bounds = array<i64: 1, 8>}, {pipeline_mode = #tpu.pipeline_mode<synchronous>, transform_indices = @transform_3, window_bounds = array<i64: 72, 8>}, {transform_indices = @transform_4, window_bounds = array<i64: 1, 256, 8>}, {transform_indices = @transform_5, window_bounds = array<i64: 1, 2, 8>}]} {
    %c0 = arith.constant 0 : index
    %c0_0 = arith.constant 0 : index
    %c0_1 = arith.constant 0 : index
    %0 = vector.load %arg1[%c0, %c0_0, %c0_1] : memref<1x256x8xf32, #tpu.memory_space<vmem>>, vector<1x256x8xf32>
    %c0_2 = arith.constant 0 : index
    %c0_3 = arith.constant 0 : index
    %1 = vector.load %arg2[%c0_2, %c0_3] : memref<1x8xf32, #tpu.memory_space<vmem>>, vector<1x8xf32>
    %2 = vector.shape_cast %1 : vector<1x8xf32> to vector<1x1x8xf32>
    %3 = vector.broadcast %2 : vector<1x1x8xf32> to vector<1x256x8xf32>
    %4 = arith.mulf %0, %3 : vector<1x256x8xf32>
    %c0_4 = arith.constant 0 : index
    %c0_5 = arith.constant 0 : index
    %5 = vector.load %arg3[%c0_4, %c0_5] : memref<1x8xf32, #tpu.memory_space<vmem>>, vector<1x8xf32>
    %6 = vector.shape_cast %5 : vector<1x8xf32> to vector<1x1x8xf32>
    %7 = vector.broadcast %6 : vector<1x1x8xf32> to vector<1x256x8xf32>
    %8 = arith.addf %4, %7 : vector<1x256x8xf32>
    %cst = arith.constant 0.000000e+00 : f32
    %9 = vector.broadcast %cst : f32 to vector<1x256x8xf32>
    %10 = arith.maximumf %8, %9 : vector<1x256x8xf32>
    %11 = vector.shape_cast %10 : vector<1x256x8xf32> to vector<1x16x16x8xf32>
    %c0_6 = arith.constant 0 : index
    %c0_7 = arith.constant 0 : index
    %12 = vector.load %arg4[%c0_6, %c0_7] : memref<72x8xf32, #tpu.memory_space<vmem>>, vector<72x8xf32>
    %cst_8 = arith.constant 0.000000e+00 : f32
    %13 = vector.broadcast %cst_8 : f32 to vector<1x1x16x8xf32>
    %cst_9 = arith.constant 0.000000e+00 : f32
    %14 = vector.broadcast %cst_9 : f32 to vector<1x18x1x8xf32>
    %15 = tpu.concatenate %13, %11, %13 in 1 : vector<1x1x16x8xf32>, vector<1x16x16x8xf32>, vector<1x1x16x8xf32> -> vector<1x18x16x8xf32>
    %16 = tpu.concatenate %14, %15, %14 in 2 : vector<1x18x1x8xf32>, vector<1x18x16x8xf32>, vector<1x18x1x8xf32> -> vector<1x18x18x8xf32>
    %17 = vector.extract_strided_slice %16 {offsets = [0, 0, 0, 0], sizes = [1, 18, 16, 8], strides = [1, 1, 1, 1]} : vector<1x18x18x8xf32> to vector<1x18x16x8xf32>
    %18 = vector.extract_strided_slice %16 {offsets = [0, 0, 1, 0], sizes = [1, 18, 16, 8], strides = [1, 1, 1, 1]} : vector<1x18x18x8xf32> to vector<1x18x16x8xf32>
    %19 = vector.extract_strided_slice %16 {offsets = [0, 0, 2, 0], sizes = [1, 18, 16, 8], strides = [1, 1, 1, 1]} : vector<1x18x18x8xf32> to vector<1x18x16x8xf32>
    %20 = tpu.concatenate %17, %18, %19 in 3 : vector<1x18x16x8xf32>, vector<1x18x16x8xf32>, vector<1x18x16x8xf32> -> vector<1x18x16x24xf32>
    %21 = vector.extract_strided_slice %20 {offsets = [0, 0, 0, 0], sizes = [1, 16, 16, 24], strides = [1, 1, 1, 1]} : vector<1x18x16x24xf32> to vector<1x16x16x24xf32>
    %22 = vector.shape_cast %21 : vector<1x16x16x24xf32> to vector<256x24xf32>
    %23 = vector.extract_strided_slice %12 {offsets = [0, 0], sizes = [24, 8], strides = [1, 1]} : vector<72x8xf32> to vector<24x8xf32>
    %cst_10 = arith.constant dense<0.000000e+00> : vector<256x8xf32>
    %24 = tpu.matmul %22, %23, %cst_10 {dimension_numbers = #tpu.dot_dimension_numbers<[1], [0], [0], [1], [0, 0, 1, 1], [], []>} : vector<256x24xf32>, vector<24x8xf32>, vector<256x8xf32> -> vector<256x8xf32>
    %25 = vector.extract_strided_slice %20 {offsets = [0, 1, 0, 0], sizes = [1, 16, 16, 24], strides = [1, 1, 1, 1]} : vector<1x18x16x24xf32> to vector<1x16x16x24xf32>
    %26 = vector.shape_cast %25 : vector<1x16x16x24xf32> to vector<256x24xf32>
    %27 = vector.extract_strided_slice %12 {offsets = [24, 0], sizes = [24, 8], strides = [1, 1]} : vector<72x8xf32> to vector<24x8xf32>
    %cst_11 = arith.constant dense<0.000000e+00> : vector<256x8xf32>
    %28 = tpu.matmul %26, %27, %cst_11 {dimension_numbers = #tpu.dot_dimension_numbers<[1], [0], [0], [1], [0, 0, 1, 1], [], []>} : vector<256x24xf32>, vector<24x8xf32>, vector<256x8xf32> -> vector<256x8xf32>
    %29 = arith.addf %24, %28 : vector<256x8xf32>
    %30 = vector.extract_strided_slice %20 {offsets = [0, 2, 0, 0], sizes = [1, 16, 16, 24], strides = [1, 1, 1, 1]} : vector<1x18x16x24xf32> to vector<1x16x16x24xf32>
    %31 = vector.shape_cast %30 : vector<1x16x16x24xf32> to vector<256x24xf32>
    %32 = vector.extract_strided_slice %12 {offsets = [48, 0], sizes = [24, 8], strides = [1, 1]} : vector<72x8xf32> to vector<24x8xf32>
    %cst_12 = arith.constant dense<0.000000e+00> : vector<256x8xf32>
    %33 = tpu.matmul %31, %32, %cst_12 {dimension_numbers = #tpu.dot_dimension_numbers<[1], [0], [0], [1], [0, 0, 1, 1], [], []>} : vector<256x24xf32>, vector<24x8xf32>, vector<256x8xf32> -> vector<256x8xf32>
    %34 = arith.addf %29, %33 : vector<256x8xf32>
    %35 = vector.shape_cast %34 : vector<256x8xf32> to vector<1x256x8xf32>
    %c0_13 = arith.constant 0 : index
    %c0_14 = arith.constant 0 : index
    %c0_15 = arith.constant 0 : index
    %36 = vector.load %arg5[%c0_13, %c0_14, %c0_15] : memref<1x256x8xf32, #tpu.memory_space<vmem>>, vector<1x256x8xf32>
    tpu.vector_store %arg5[%c0_13, %c0_14, %c0_15], %35 {strides = array<i32>} : memref<1x256x8xf32, #tpu.memory_space<vmem>>, vector<1x256x8xf32>,
    %cst_16 = arith.constant dense<0.000000e+00> : vector<8xf32>
    %37 = vector.multi_reduction <add>, %34, %cst_16 [0] : vector<256x8xf32> to vector<8xf32>
    %38 = vector.shape_cast %37 : vector<8xf32> to vector<1x8xf32>
    %cst_17 = arith.constant 3.906250e-03 : f32
    %39 = vector.broadcast %cst_17 : f32 to vector<1x8xf32>
    %40 = arith.mulf %38, %39 : vector<1x8xf32>
    %41 = vector.broadcast %40 : vector<1x8xf32> to vector<256x8xf32>
    %42 = arith.subf %34, %41 : vector<256x8xf32>
    %43 = arith.mulf %42, %42 : vector<256x8xf32>
    %cst_18 = arith.constant dense<0.000000e+00> : vector<8xf32>
    %44 = vector.multi_reduction <add>, %43, %cst_18 [0] : vector<256x8xf32> to vector<8xf32>
    %45 = vector.shape_cast %44 : vector<8xf32> to vector<1x8xf32>
    %46 = tpu.concatenate %38, %45 in 0 : vector<1x8xf32>, vector<1x8xf32> -> vector<2x8xf32>
    %47 = vector.shape_cast %46 : vector<2x8xf32> to vector<1x2x8xf32>
    %c0_19 = arith.constant 0 : index
    %c0_20 = arith.constant 0 : index
    %c0_21 = arith.constant 0 : index
    %48 = vector.load %arg6[%c0_19, %c0_20, %c0_21] : memref<1x2x8xf32, #tpu.memory_space<vmem>>, vector<1x2x8xf32>
    tpu.vector_store %arg6[%c0_19, %c0_20, %c0_21], %47 {strides = array<i32>} : memref<1x2x8xf32, #tpu.memory_space<vmem>>, vector<1x2x8xf32>,
    return
  }
  func.func @transform_0(%arg0: i32) -> (i32, i32, i32) {
    %c0_i32 = arith.constant 0 : i32
    %c0_i32_0 = arith.constant 0 : i32
    %c0_i32_1 = arith.constant 0 : i32
    return %arg0, %c0_i32, %c0_i32_0 : i32, i32, i32
  }
  func.func @transform_1(%arg0: i32) -> (i32, i32) {
    %c0_i32 = arith.constant 0 : i32
    %c0_i32_0 = arith.constant 0 : i32
    %c0_i32_1 = arith.constant 0 : i32
    return %c0_i32, %c0_i32_0 : i32, i32
  }
  func.func @transform_2(%arg0: i32) -> (i32, i32) {
    %c0_i32 = arith.constant 0 : i32
    %c0_i32_0 = arith.constant 0 : i32
    %c0_i32_1 = arith.constant 0 : i32
    return %c0_i32, %c0_i32_0 : i32, i32
  }
  func.func @transform_3(%arg0: i32) -> (i32, i32) {
    %c0_i32 = arith.constant 0 : i32
    %c0_i32_0 = arith.constant 0 : i32
    %c0_i32_1 = arith.constant 0 : i32
    return %c0_i32, %c0_i32_0 : i32, i32
  }
  func.func @transform_4(%arg0: i32) -> (i32, i32, i32) {
    %c0_i32 = arith.constant 0 : i32
    %c0_i32_0 = arith.constant 0 : i32
    %c0_i32_1 = arith.constant 0 : i32
    return %arg0, %c0_i32, %c0_i32_0 : i32, i32, i32
  }
  func.func @transform_5(%arg0: i32) -> (i32, i32, i32) {
    %c0_i32 = arith.constant 0 : i32
    %c0_i32_0 = arith.constant 0 : i32
    %c0_i32_1 = arith.constant 0 : i32
    return %arg0, %c0_i32, %c0_i32_0 : i32, i32, i32
  }
}

</mosaic_0001>

<llo_original>
// kernel: double_conv_forward.5
$region0: #{double_conv_forward.5}
  #allocation0 [shape = 'u32[]', space=smem, size = 0x4, offset = 0x4, fixed_abs, tag = 'smem constant byte address 0x4 - core index']
  #allocation1 [shape = 'u32[72,128]{1,0:T(1,128)}', space=vmem, size = 0x9000, scoped, tag = 'internal scratch']
  %s0 = inlined_call_operand.vmem [shape: f32[2,256,8], index: 0, kind: input, shape index: {}]
  %s1 = inlined_call_operand.vmem [shape: f32[1,8], index: 1, kind: input, shape index: {}]
  %s2 = inlined_call_operand.vmem [shape: f32[1,8], index: 2, kind: input, shape index: {}]
  %s3 = inlined_call_operand.vmem [shape: f32[2,8,256], index: 3, kind: output, shape index: {}]
  %s4 = sld [smem:[#allocation0]]
  $region45: #{double_conv_forward.5} parent=0
    _
  %s6 = ssub.s32 1, %s4
  %s7 = scalar_select 0, %s6, %s4
  loop: start=0, step=1, limit=4
  $region2: #{double_conv_forward.5} parent=0 // loop_pre_header
    _
  $region3: #{double_conv_forward.5} parent=0 // loop_header
    %s9 = sphi 0, %s13
    %p10 = scmp.ge.s32.totalorder %s9, 4
    %s19 = sphi 0, %s21
    %s22 = sphi 0, %s19
    %s23 = sphi 0, %s22
    %s39 = sphi 0, %s23
    %s43 = sphi 0, %s43
    %s45 = sphi 0, %s43
    %s46 = sphi 0, %s45
    %s60 = sphi 0, %s46
    %s64 = sphi 0, %s64
    %s66 = sphi 0, %s64
    %s67 = sphi 0, %s66
    %s81 = sphi 0, %s67
    %s87 = sphi 0, %s89
    %s90 = sphi 0, %s87
    %s91 = sphi 0, %s90
    %s107 = sphi 0, %s91
  $region4: #{double_conv_forward.5} parent=0 // loop_header_branch
    %12 = sbr.rel (%p10) target = $region8
  $region5: #{double_conv_forward.5} parent=0 // loop_body
    %s14 = ssub.s32 %s9, 1
    %s15 = ssub.s32 %s9, 2
    %s16 = sadd.s32 %s9, 1
    %s17 = ssub.s32 %s9, %s16
    %p18 = scmp.eq.s32.totalorder %s17, 0
    %s20 = sadd.s32 %s19, 1
    %s21 = scalar_select %p18, %s19, %s20
    %p24 = pneg %p18
    %p25 = scmp.eq.s32.totalorder %s9, 1
    %p26 = por %p24, %p25
    %p27 = scmp.ne.s32.totalorder %s19, %s22
    %p28 = scmp.eq.s32.totalorder %s9, 0
    %p29 = por %p27, %p28
    %p30 = scmp.ne.s32.totalorder %s19, %s22
    %p31 = scmp.eq.s32.totalorder %s14, 1
    %p32 = por %p30, %p31
    %p33 = scmp.ne.s32.totalorder %s22, %s23
    %p34 = scmp.eq.s32.totalorder %s14, 0
    %p35 = por %p33, %p34
    %p36 = scmp.ne.s32.totalorder %s22, %s23
    %p37 = scmp.eq.s32.totalorder %s15, 1
    %p38 = por %p36, %p37
    %p40 = scmp.ne.s32.totalorder %s23, %s39
    %p41 = scmp.eq.s32.totalorder %s15, 0
    %p42 = por %p40, %p41
    %s44 = sadd.s32 %s43, 1
    %p47 = scmp.eq.s32.totalorder %s9, 1
    %p48 = scmp.ne.s32.totalorder %s43, %s45
    %p49 = scmp.eq.s32.totalorder %s9, 0
    %p50 = por %p48, %p49
    %p51 = scmp.ne.s32.totalorder %s43, %s45
    %p52 = scmp.eq.s32.totalorder %s14, 1
    %p53 = por %p51, %p52
    %p54 = scmp.ne.s32.totalorder %s45, %s46
    %p55 = scmp.eq.s32.totalorder %s14, 0
    %p56 = por %p54, %p55
    %p57 = scmp.ne.s32.totalorder %s45, %s46
    %p58 = scmp.eq.s32.totalorder %s15, 1
    %p59 = por %p57, %p58
    %p61 = scmp.ne.s32.totalorder %s46, %s60
    %p62 = scmp.eq.s32.totalorder %s15, 0
    %p63 = por %p61, %p62
    %s65 = sadd.s32 %s64, 1
    %p68 = scmp.eq.s32.totalorder %s9, 1
    %p69 = scmp.ne.s32.totalorder %s64, %s66
    %p70 = scmp.eq.s32.totalorder %s9, 0
    %p71 = por %p69, %p70
    %p72 = scmp.ne.s32.totalorder %s64, %s66
    %p73 = scmp.eq.s32.totalorder %s14, 1
    %p74 = por %p72, %p73
    %p75 = scmp.ne.s32.totalorder %s66, %s67
    %p76 = scmp.eq.s32.totalorder %s14, 0
    %p77 = por %p75, %p76
    %p78 = scmp.ne.s32.totalorder %s66, %s67
    %p79 = scmp.eq.s32.totalorder %s15, 1
    %p80 = por %p78, %p79
    %p82 = scmp.ne.s32.totalorder %s67, %s81
    %p83 = scmp.eq.s32.totalorder %s15, 0
    %p84 = por %p82, %p83
    %s85 = ssub.s32 %s9, %s16
    %p86 = scmp.eq.s32.totalorder %s85, 0
    %s88 = sadd.s32 %s87, 1
    %s89 = scalar_select %p86, %s87, %s88
    %p92 = pneg %p86
    %p93 = scmp.eq.s32.totalorder %s9, 1
    %p94 = por %p92, %p93
    %p95 = scmp.ne.s32.totalorder %s87, %s90
    %p96 = scmp.eq.s32.totalorder %s9, 0
    %p97 = por %p95, %p96
    %p98 = scmp.ne.s32.totalorder %s87, %s90
    %p99 = scmp.eq.s32.totalorder %s14, 1
    %p100 = por %p98, %p99
    %p101 = scmp.ne.s32.totalorder %s90, %s91
    %p102 = scmp.eq.s32.totalorder %s14, 0
    %p103 = por %p101, %p102
    %p104 = scmp.ne.s32.totalorder %s90, %s91
    %p105 = scmp.eq.s32.totalorder %s15, 1
    %p106 = por %p104, %p105
    %p108 = scmp.ne.s32.totalorder %s91, %s107
    %p109 = scmp.eq.s32.totalorder %s15, 0
    %p110 = por %p108, %p109
    %p111 = scmp.le.s32.totalorder 1, %s9
    %p112 = scmp.lt.s32.totalorder %s9, 3
    %p113 = pnand %p111, %p112
    %p114 = pneg %p113
    // Predicated region
    $region9: #{double_conv_forward.5} parent=5 // pred_check
      _
    $region10: #{double_conv_forward.5} parent=5 // pred_check_branch
      %116 = sbr.rel (%p113) target = $region12
    $region11: #{double_conv_forward.5} parent=5 // pred_region
      %s117 = ssub.s32 %s9, 1
      // Predicated region
      $region13: #{double_conv_forward.5} parent=11 // pred_check
        %p118 = pneg %p56
      $region14: #{double_conv_forward.5} parent=11 // pred_check_branch
        %120 = sbr.rel (%p118) target = $region16
      $region15: #{double_conv_forward.5} parent=11 // pred_region
        _
      $region16: #{double_conv_forward.5} parent=11 // pred_fallthru
        _
      // Predicated region
      $region17: #{double_conv_forward.5} parent=11 // pred_check
        %p121 = pneg %p77
      $region18: #{double_conv_forward.5} parent=11 // pred_check_branch
        %123 = sbr.rel (%p121) target = $region20
      $region19: #{double_conv_forward.5} parent=11 // pred_region
        _
      $region20: #{double_conv_forward.5} parent=11 // pred_fallthru
        _
    $region12: #{double_conv_forward.5} parent=5 // pred_fallthru
      _
    %p124 = scmp.lt.s32.totalorder %s9, 2
    // Predicated region
    $region21: #{double_conv_forward.5} parent=5 // pred_check
      %p125 = pneg %p124
    $region22: #{double_conv_forward.5} parent=5 // pred_check_branch
      %127 = sbr.rel (%p125) target = $region24
    $region23: #{double_conv_forward.5} parent=5 // pred_region
      // Predicated region
      $region25: #{double_conv_forward.5} parent=23 // pred_check
        %p128 = pneg %p29
      $region26: #{double_conv_forward.5} parent=23 // pred_check_branch
        %130 = sbr.rel (%p128) target = $region28
      $region27: #{double_conv_forward.5} parent=23 // pred_region
        %p131 = scmp.lt.s32.totalorder %s9, 1
        %s132 = scalar_select %p131, %s9, 1
        %s133 = smul.addr %s132, 32
        %s134 = smul.addr %s133, 8
        %s135 = scalar_lea.vmem %s0, %s134
      $region28: #{double_conv_forward.5} parent=23 // pred_fallthru
        _
    $region24: #{double_conv_forward.5} parent=5 // pred_fallthru
      _
    %p136 = scmp.le.s32.totalorder 1, %s9
    %p137 = scmp.lt.s32.totalorder %s9, 3
    %p138 = pnand %p136, %p137
    %p139 = pneg %p138
    // Predicated region
    $region29: #{double_conv_forward.5} parent=5 // pred_check
      _
    $region30: #{double_conv_forward.5} parent=5 // pred_check_branch
      %141 = sbr.rel (%p138) target = $region32
    $region31: #{double_conv_forward.5} parent=5 // pred_region
      %s142 = ssub.s32 %s9, 1
      %p143 = scmp.lt.s32.totalorder %s14, 1
      %s144 = scalar_select %p143, %s14, 1
      %s145 = smul.addr %s144, 32
      %s146 = smul.addr %s145, 8
      %s147 = scalar_lea.vmem %s0, %s146
      %p148 = pneg %p35
      %p149 = pneg %p32
      %p150 = pneg %p56
      %p151 = pneg %p53
      %p152 = pneg %p77
      %p153 = pneg %p74
      %p154 = pneg %p103
      %p155 = pneg %p100
      %p156 = scmp.lt.s32.totalorder %s14, 1
      %s157 = scalar_select %p156, %s14, 1
      %s158 = smul.addr %s157, 2
      %s159 = smul.addr %s158, 8
      %s160 = scalar_lea.vmem %s3, %s159
      %p161 = scmp.lt.s32.totalorder %s14, 1
      %s162 = scalar_select %p161, %s14, 1
      %s163 = smul.addr %s162, 32
      %s164 = smul.addr %s163, 8
      %s165 = scalar_lea.vmem %s0, %s164
      %p166 = scmp.lt.s32.totalorder %s14, 1
      %s167 = scalar_select %p166, %s14, 1
      %s168 = smul.addr %s167, 2
      %s169 = smul.addr %s168, 8
      %s170 = scalar_lea.vmem %s3, %s169
      %v171 = vld [vmem:[%s165] sm:$0xff]
      %v172 = vld [vmem:[%s165 + $0x8] sm:$0xff]
      %v173 = vld [vmem:[%s165 + $0x10] sm:$0xff]
      %v174 = vld [vmem:[%s165 + $0x18] sm:$0xff]
      %v175 = vld [vmem:[%s165 + $0x20] sm:$0xff]
      %v176 = vld [vmem:[%s165 + $0x28] sm:$0xff]
      %v177 = vld [vmem:[%s165 + $0x30] sm:$0xff]
      %v178 = vld [vmem:[%s165 + $0x38] sm:$0xff]
      %v179 = vld [vmem:[%s165 + $0x40] sm:$0xff]
      %v180 = vld [vmem:[%s165 + $0x48] sm:$0xff]
      %v181 = vld [vmem:[%s165 + $0x50] sm:$0xff]
      %v182 = vld [vmem:[%s165 + $0x58] sm:$0xff]
      %v183 = vld [vmem:[%s165 + $0x60] sm:$0xff]
      %v184 = vld [vmem:[%s165 + $0x68] sm:$0xff]
      %v185 = vld [vmem:[%s165 + $0x70] sm:$0xff]
      %v186 = vld [vmem:[%s165 + $0x78] sm:$0xff]
      %v187 = vld [vmem:[%s165 + $0x80] sm:$0xff]
      %v188 = vld [vmem:[%s165 + $0x88] sm:$0xff]
      %v189 = vld [vmem:[%s165 + $0x90] sm:$0xff]
      %v190 = vld [vmem:[%s165 + $0x98] sm:$0xff]
      %v191 = vld [vmem:[%s165 + $0xa0] sm:$0xff]
      %v192 = vld [vmem:[%s165 + $0xa8] sm:$0xff]
      %v193 = vld [vmem:[%s165 + $0xb0] sm:$0xff]
      %v194 = vld [vmem:[%s165 + $0xb8] sm:$0xff]
      %v195 = vld [vmem:[%s165 + $0xc0] sm:$0xff]
      %v196 = vld [vmem:[%s165 + $0xc8] sm:$0xff]
      %v197 = vld [vmem:[%s165 + $0xd0] sm:$0xff]
      %v198 = vld [vmem:[%s165 + $0xd8] sm:$0xff]
      %v199 = vld [vmem:[%s165 + $0xe0] sm:$0xff]
      %v200 = vld [vmem:[%s165 + $0xe8] sm:$0xff]
      %v201 = vld [vmem:[%s165 + $0xf0] sm:$0xff]
      %v202 = vld [vmem:[%s165 + $0xf8] sm:$0xff]
      %v203 = vld [vmem:[%s1] sm:$0x1]
      %v205 = vperm.slane %v203, 0
      %v207 = vmul.f32 %v171, %v205
      %v208 = vmul.f32 %v172, %v205
      %v209 = vmul.f32 %v173, %v205
      %v210 = vmul.f32 %v174, %v205
      %v211 = vmul.f32 %v175, %v205
      %v212 = vmul.f32 %v176, %v205
      %v213 = vmul.f32 %v177, %v205
      %v214 = vmul.f32 %v178, %v205
      %v215 = vmul.f32 %v179, %v205
      %v216 = vmul.f32 %v180, %v205
      %v217 = vmul.f32 %v181, %v205
      %v218 = vmul.f32 %v182, %v205
      %v219 = vmul.f32 %v183, %v205
      %v220 = vmul.f32 %v184, %v205
      %v221 = vmul.f32 %v185, %v205
      %v222 = vmul.f32 %v186, %v205
      %v223 = vmul.f32 %v187, %v205
      %v224 = vmul.f32 %v188, %v205
      %v225 = vmul.f32 %v189, %v205
      %v226 = vmul.f32 %v190, %v205
      %v227 = vmul.f32 %v191, %v205
      %v228 = vmul.f32 %v192, %v205
      %v229 = vmul.f32 %v193, %v205
      %v230 = vmul.f32 %v194, %v205
      %v231 = vmul.f32 %v195, %v205
      %v232 = vmul.f32 %v196, %v205
      %v233 = vmul.f32 %v197, %v205
      %v234 = vmul.f32 %v198, %v205
      %v235 = vmul.f32 %v199, %v205
      %v236 = vmul.f32 %v200, %v205
      %v237 = vmul.f32 %v201, %v205
      %v238 = vmul.f32 %v202, %v205
      %v239 = vld [vmem:[%s2] sm:$0x1]
      %v241 = vperm.slane %v239, 0
      %v243 = vadd.f32 %v207, %v241
      %v244 = vadd.f32 %v208, %v241
      %v245 = vadd.f32 %v209, %v241
      %v246 = vadd.f32 %v210, %v241
      %v247 = vadd.f32 %v211, %v241
      %v248 = vadd.f32 %v212, %v241
      %v249 = vadd.f32 %v213, %v241
      %v250 = vadd.f32 %v214, %v241
      %v251 = vadd.f32 %v215, %v241
      %v252 = vadd.f32 %v216, %v241
      %v253 = vadd.f32 %v217, %v241
      %v254 = vadd.f32 %v218, %v241
      %v255 = vadd.f32 %v219, %v241
      %v256 = vadd.f32 %v220, %v241
      %v257 = vadd.f32 %v221, %v241
      %v258 = vadd.f32 %v222, %v241
      %v259 = vadd.f32 %v223, %v241
      %v260 = vadd.f32 %v224, %v241
      %v261 = vadd.f32 %v225, %v241
      %v262 = vadd.f32 %v226, %v241
      %v263 = vadd.f32 %v227, %v241
      %v264 = vadd.f32 %v228, %v241
      %v265 = vadd.f32 %v229, %v241
      %v266 = vadd.f32 %v230, %v241
      %v267 = vadd.f32 %v231, %v241
      %v268 = vadd.f32 %v232, %v241
      %v269 = vadd.f32 %v233, %v241
      %v270 = vadd.f32 %v234, %v241
      %v271 = vadd.f32 %v235, %v241
      %v272 = vadd.f32 %v236, %v241
      %v273 = vadd.f32 %v237, %v241
      %v274 = vadd.f32 %v238, %v241
      %v275 = vmax.f32 %v243, 0.0
      %v276 = vmax.f32 %v244, 0.0
      %v277 = vmax.f32 %v245, 0.0
      %v278 = vmax.f32 %v246, 0.0
      %v279 = vmax.f32 %v247, 0.0
      %v280 = vmax.f32 %v248, 0.0
      %v281 = vmax.f32 %v249, 0.0
      %v282 = vmax.f32 %v250, 0.0
      %v283 = vmax.f32 %v251, 0.0
      %v284 = vmax.f32 %v252, 0.0
      %v285 = vmax.f32 %v253, 0.0
      %v286 = vmax.f32 %v254, 0.0
      %v287 = vmax.f32 %v255, 0.0
      %v288 = vmax.f32 %v256, 0.0
      %v289 = vmax.f32 %v257, 0.0
      %v290 = vmax.f32 %v258, 0.0
      %v291 = vmax.f32 %v259, 0.0
      %v292 = vmax.f32 %v260, 0.0
      %v293 = vmax.f32 %v261, 0.0
      %v294 = vmax.f32 %v262, 0.0
      %v295 = vmax.f32 %v263, 0.0
      %v296 = vmax.f32 %v264, 0.0
      %v297 = vmax.f32 %v265, 0.0
      %v298 = vmax.f32 %v266, 0.0
      %v299 = vmax.f32 %v267, 0.0
      %v300 = vmax.f32 %v268, 0.0
      %v301 = vmax.f32 %v269, 0.0
      %v302 = vmax.f32 %v270, 0.0
      %v303 = vmax.f32 %v271, 0.0
      %v304 = vmax.f32 %v272, 0.0
      %v305 = vmax.f32 %v273, 0.0
      %v306 = vmax.f32 %v274, 0.0
      %307 = vxpose.xlu0.b32.start [1/16] %v275, 128
      %308 = vxpose.xlu0.b32.cont [2/16] %v276, 128
      %309 = vxpose.xlu0.b32.cont [3/16] %v277, 128
      %310 = vxpose.xlu0.b32.cont [4/16] %v278, 128
      %311 = vxpose.xlu0.b32.cont [5/16] %v279, 128
      %312 = vxpose.xlu0.b32.cont [6/16] %v280, 128
      %313 = vxpose.xlu0.b32.cont [7/16] %v281, 128
      %314 = vxpose.xlu0.b32.cont [8/16] %v282, 128
      %315 = vxpose.xlu0.b32.cont [9/16] %v283, 128
      %316 = vxpose.xlu0.b32.cont [10/16] %v284, 128
      %317 = vxpose.xlu0.b32.cont [11/16] %v285, 128
      %318 = vxpose.xlu0.b32.cont [12/16] %v286, 128
      %319 = vxpose.xlu0.b32.cont [13/16] %v287, 128
      %320 = vxpose.xlu0.b32.cont [14/16] %v288, 128
      %321 = vxpose.xlu0.b32.cont [15/16] %v289, 128
      %322 = vxpose.xlu0.b32.end [16/16] %v290, 128
      %v323 = vpop.trf.xlu0
      %v324 = vpop.trf.xlu0
      %v325 = vpop.trf.xlu0
      %v326 = vpop.trf.xlu0
      %v327 = vpop.trf.xlu0
      %v328 = vpop.trf.xlu0
      %v329 = vpop.trf.xlu0
      %v330 = vpop.trf.xlu0
      %v331 = vpop.trf.xlu0
      %v332 = vpop.trf.xlu0
      %v333 = vpop.trf.xlu0
      %v334 = vpop.trf.xlu0
      %v335 = vpop.trf.xlu0
      %v336 = vpop.trf.xlu0
      %v337 = vpop.trf.xlu0
      %v338 = vpop.trf.xlu0
      %339 = vxpose.xlu0.b32.start [1/16] %v291, 128
      %340 = vxpose.xlu0.b32.cont [2/16] %v292, 128
      %341 = vxpose.xlu0.b32.cont [3/16] %v293, 128
      %342 = vxpose.xlu0.b32.cont [4/16] %v294, 128
      %343 = vxpose.xlu0.b32.cont [5/16] %v295, 128
      %344 = vxpose.xlu0.b32.cont [6/16] %v296, 128
      %345 = vxpose.xlu0.b32.cont [7/16] %v297, 128
      %346 = vxpose.xlu0.b32.cont [8/16] %v298, 128
      %347 = vxpose.xlu0.b32.cont [9/16] %v299, 128
      %348 = vxpose.xlu0.b32.cont [10/16] %v300, 128
      %349 = vxpose.xlu0.b32.cont [11/16] %v301, 128
      %350 = vxpose.xlu0.b32.cont [12/16] %v302, 128
      %351 = vxpose.xlu0.b32.cont [13/16] %v303, 128
      %352 = vxpose.xlu0.b32.cont [14/16] %v304, 128
      %353 = vxpose.xlu0.b32.cont [15/16] %v305, 128
      %354 = vxpose.xlu0.b32.end [16/16] %v306, 128
      %v355 = vpop.trf.xlu0
      %v356 = vpop.trf.xlu0
      %v357 = vpop.trf.xlu0
      %v358 = vpop.trf.xlu0
      %v359 = vpop.trf.xlu0
      %v360 = vpop.trf.xlu0
      %v361 = vpop.trf.xlu0
      %v362 = vpop.trf.xlu0
      %v363 = vpop.trf.xlu0
      %v364 = vpop.trf.xlu0
      %v365 = vpop.trf.xlu0
      %v366 = vpop.trf.xlu0
      %v367 = vpop.trf.xlu0
      %v368 = vpop.trf.xlu0
      %v369 = vpop.trf.xlu0
      %v370 = vpop.trf.xlu0
      %371 = vst [vmem:[%s170] sm:$0xff] %v323
      %372 = vst [vmem:[%s170 + $0x8] sm:$0xff] %v355
      %p373 = scmp.lt.s32.totalorder %s14, 1
      %s374 = scalar_select %p373, %s14, 1
      %s375 = smul.addr %s374, 2
      %s376 = smul.addr %s375, 8
      %s377 = scalar_lea.vmem %s3, %s376
      // Predicated region
      $region33: #{double_conv_forward.5} parent=31 // pred_check
        %p378 = pneg %p100
      $region34: #{double_conv_forward.5} parent=31 // pred_check_branch
        %380 = sbr.rel (%p378) target = $region36
      $region35: #{double_conv_forward.5} parent=31 // pred_region
        _
      $region36: #{double_conv_forward.5} parent=31 // pred_fallthru
        _
    $region32: #{double_conv_forward.5} parent=5 // pred_fallthru
      _
    %p381 = scmp.le.s32.totalorder 2, %s9
    // Predicated region
    $region37: #{double_conv_forward.5} parent=5 // pred_check
      %p382 = pneg %p381
    $region38: #{double_conv_forward.5} parent=5 // pred_check_branch
      %384 = sbr.rel (%p382) target = $region40
    $region39: #{double_conv_forward.5} parent=5 // pred_region
      %s385 = ssub.s32 %s9, 2
      // Predicated region
      $region41: #{double_conv_forward.5} parent=39 // pred_check
        %p386 = pneg %p106
      $region42: #{double_conv_forward.5} parent=39 // pred_check_branch
        %388 = sbr.rel (%p386) target = $region44
      $region43: #{double_conv_forward.5} parent=39 // pred_region
        %p389 = scmp.lt.s32.totalorder %s15, 1
        %s390 = scalar_select %p389, %s15, 1
        %s391 = smul.addr %s390, 2
        %s392 = smul.addr %s391, 8
        %s393 = scalar_lea.vmem %s3, %s392
      $region44: #{double_conv_forward.5} parent=39 // pred_fallthru
        _
    $region40: #{double_conv_forward.5} parent=5 // pred_fallthru
      _
  $region6: #{double_conv_forward.5} parent=0 // loop_footer
    %s13 = sadd.s32 1, %s9
  $region7: #{double_conv_forward.5} parent=0 // loop_footer_branch
    %8 = sbr.rel target = $region3
  $region8: #{double_conv_forward.5} parent=0 // loop_exit
    _

// kernel: double_conv_forward.3
$region0: #{double_conv_forward.3}
  #allocation0 [shape = 'u32[]', space=smem, size = 0x4, offset = 0x4, fixed_abs, tag = 'smem constant byte address 0x4 - core index']
  #allocation1 [shape = 'u32[72,128]{1,0:T(1,128)}', space=vmem, size = 0x9000, scoped, tag = 'internal scratch']
  %s0 = inlined_call_operand.vmem [shape: f32[2,16,16,4], index: 0, kind: input, shape index: {}]
  %s1 = inlined_call_operand.vmem [shape: f32[36,8], index: 1, kind: input, shape index: {}]
  %s2 = inlined_call_operand.vmem [shape: f32[2,256,8], index: 2, kind: output, shape index: {0}]
  %s3 = inlined_call_operand.vmem [shape: f32[2,2,8], index: 3, kind: output, shape index: {1}]
  %4 = xla_tuple %s2, %s3
  %s5 = sld [smem:[#allocation0]]
  $region49: #{double_conv_forward.3} parent=0
    _
  %s7 = ssub.s32 1, %s5
  %s8 = scalar_select 0, %s7, %s5
  loop: start=0, step=1, limit=4
  $region2: #{double_conv_forward.3} parent=0 // loop_pre_header
    _
  $region3: #{double_conv_forward.3} parent=0 // loop_header
    %s10 = sphi 0, %s14
    %p11 = scmp.ge.s32.totalorder %s10, 4
    %s20 = sphi 0, %s22
    %s23 = sphi 0, %s20
    %s24 = sphi 0, %s23
    %s40 = sphi 0, %s24
    %s44 = sphi 0, %s44
    %s46 = sphi 0, %s44
    %s47 = sphi 0, %s46
    %s61 = sphi 0, %s47
    %s67 = sphi 0, %s69
    %s70 = sphi 0, %s67
    %s71 = sphi 0, %s70
    %s87 = sphi 0, %s71
    %s93 = sphi 0, %s95
    %s96 = sphi 0, %s93
    %s97 = sphi 0, %s96
    %s113 = sphi 0, %s97
  $region4: #{double_conv_forward.3} parent=0 // loop_header_branch
    %13 = sbr.rel (%p11) target = $region8
  $region5: #{double_conv_forward.3} parent=0 // loop_body
    %s15 = ssub.s32 %s10, 1
    %s16 = ssub.s32 %s10, 2
    %s17 = sadd.s32 %s10, 1
    %s18 = ssub.s32 %s10, %s17
    %p19 = scmp.eq.s32.totalorder %s18, 0
    %s21 = sadd.s32 %s20, 1
    %s22 = scalar_select %p19, %s20, %s21
    %p25 = pneg %p19
    %p26 = scmp.eq.s32.totalorder %s10, 1
    %p27 = por %p25, %p26
    %p28 = scmp.ne.s32.totalorder %s20, %s23
    %p29 = scmp.eq.s32.totalorder %s10, 0
    %p30 = por %p28, %p29
    %p31 = scmp.ne.s32.totalorder %s20, %s23
    %p32 = scmp.eq.s32.totalorder %s15, 1
    %p33 = por %p31, %p32
    %p34 = scmp.ne.s32.totalorder %s23, %s24
    %p35 = scmp.eq.s32.totalorder %s15, 0
    %p36 = por %p34, %p35
    %p37 = scmp.ne.s32.totalorder %s23, %s24
    %p38 = scmp.eq.s32.totalorder %s16, 1
    %p39 = por %p37, %p38
    %p41 = scmp.ne.s32.totalorder %s24, %s40
    %p42 = scmp.eq.s32.totalorder %s16, 0
    %p43 = por %p41, %p42
    %s45 = sadd.s32 %s44, 1
    %p48 = scmp.eq.s32.totalorder %s10, 1
    %p49 = scmp.ne.s32.totalorder %s44, %s46
    %p50 = scmp.eq.s32.totalorder %s10, 0
    %p51 = por %p49, %p50
    %p52 = scmp.ne.s32.totalorder %s44, %s46
    %p53 = scmp.eq.s32.totalorder %s15, 1
    %p54 = por %p52, %p53
    %p55 = scmp.ne.s32.totalorder %s46, %s47
    %p56 = scmp.eq.s32.totalorder %s15, 0
    %p57 = por %p55, %p56
    %p58 = scmp.ne.s32.totalorder %s46, %s47
    %p59 = scmp.eq.s32.totalorder %s16, 1
    %p60 = por %p58, %p59
    %p62 = scmp.ne.s32.totalorder %s47, %s61
    %p63 = scmp.eq.s32.totalorder %s16, 0
    %p64 = por %p62, %p63
    %s65 = ssub.s32 %s10, %s17
    %p66 = scmp.eq.s32.totalorder %s65, 0
    %s68 = sadd.s32 %s67, 1
    %s69 = scalar_select %p66, %s67, %s68
    %p72 = pneg %p66
    %p73 = scmp.eq.s32.totalorder %s10, 1
    %p74 = por %p72, %p73
    %p75 = scmp.ne.s32.totalorder %s67, %s70
    %p76 = scmp.eq.s32.totalorder %s10, 0
    %p77 = por %p75, %p76
    %p78 = scmp.ne.s32.totalorder %s67, %s70
    %p79 = scmp.eq.s32.totalorder %s15, 1
    %p80 = por %p78, %p79
    %p81 = scmp.ne.s32.totalorder %s70, %s71
    %p82 = scmp.eq.s32.totalorder %s15, 0
    %p83 = por %p81, %p82
    %p84 = scmp.ne.s32.totalorder %s70, %s71
    %p85 = scmp.eq.s32.totalorder %s16, 1
    %p86 = por %p84, %p85
    %p88 = scmp.ne.s32.totalorder %s71, %s87
    %p89 = scmp.eq.s32.totalorder %s16, 0
    %p90 = por %p88, %p89
    %s91 = ssub.s32 %s10, %s17
    %p92 = scmp.eq.s32.totalorder %s91, 0
    %s94 = sadd.s32 %s93, 1
    %s95 = scalar_select %p92, %s93, %s94
    %p98 = pneg %p92
    %p99 = scmp.eq.s32.totalorder %s10, 1
    %p100 = por %p98, %p99
    %p101 = scmp.ne.s32.totalorder %s93, %s96
    %p102 = scmp.eq.s32.totalorder %s10, 0
    %p103 = por %p101, %p102
    %p104 = scmp.ne.s32.totalorder %s93, %s96
    %p105 = scmp.eq.s32.totalorder %s15, 1
    %p106 = por %p104, %p105
    %p107 = scmp.ne.s32.totalorder %s96, %s97
    %p108 = scmp.eq.s32.totalorder %s15, 0
    %p109 = por %p107, %p108
    %p110 = scmp.ne.s32.totalorder %s96, %s97
    %p111 = scmp.eq.s32.totalorder %s16, 1
    %p112 = por %p110, %p111
    %p114 = scmp.ne.s32.totalorder %s97, %s113
    %p115 = scmp.eq.s32.totalorder %s16, 0
    %p116 = por %p114, %p115
    %p117 = scmp.le.s32.totalorder 1, %s10
    %p118 = scmp.lt.s32.totalorder %s10, 3
    %p119 = pnand %p117, %p118
    %p120 = pneg %p119
    // Predicated region
    $region9: #{double_conv_forward.3} parent=5 // pred_check
      _
    $region10: #{double_conv_forward.3} parent=5 // pred_check_branch
      %122 = sbr.rel (%p119) target = $region12
    $region11: #{double_conv_forward.3} parent=5 // pred_region
      %s123 = ssub.s32 %s10, 1
      // Predicated region
      $region13: #{double_conv_forward.3} parent=11 // pred_check
        %p124 = pneg %p57
      $region14: #{double_conv_forward.3} parent=11 // pred_check_branch
        %126 = sbr.rel (%p124) target = $region16
      $region15: #{double_conv_forward.3} parent=11 // pred_region
        _
      $region16: #{double_conv_forward.3} parent=11 // pred_fallthru
        _
    $region12: #{double_conv_forward.3} parent=5 // pred_fallthru
      _
    %p127 = scmp.lt.s32.totalorder %s10, 2
    // Predicated region
    $region17: #{double_conv_forward.3} parent=5 // pred_check
      %p128 = pneg %p127
    $region18: #{double_conv_forward.3} parent=5 // pred_check_branch
      %130 = sbr.rel (%p128) target = $region20
    $region19: #{double_conv_forward.3} parent=5 // pred_region
      // Predicated region
      $region21: #{double_conv_forward.3} parent=19 // pred_check
        %p131 = pneg %p30
      $region22: #{double_conv_forward.3} parent=19 // pred_check_branch
        %133 = sbr.rel (%p131) target = $region24
      $region23: #{double_conv_forward.3} parent=19 // pred_region
        %p134 = scmp.lt.s32.totalorder %s10, 1
        %s135 = scalar_select %p134, %s10, 1
        %s136 = smul.addr %s135, 32
        %s137 = smul.addr %s136, 8
        %s138 = scalar_lea.vmem %s0, %s137
      $region24: #{double_conv_forward.3} parent=19 // pred_fallthru
        _
    $region20: #{double_conv_forward.3} parent=5 // pred_fallthru
      _
    %p139 = scmp.le.s32.totalorder 1, %s10
    %p140 = scmp.lt.s32.totalorder %s10, 3
    %p141 = pnand %p139, %p140
    %p142 = pneg %p141
    // Predicated region
    $region25: #{double_conv_forward.3} parent=5 // pred_check
      _
    $region26: #{double_conv_forward.3} parent=5 // pred_check_branch
      %144 = sbr.rel (%p141) target = $region28
    $region27: #{double_conv_forward.3} parent=5 // pred_region
      %s145 = ssub.s32 %s10, 1
      %p146 = scmp.lt.s32.totalorder %s15, 1
      %s147 = scalar_select %p146, %s15, 1
      %s148 = smul.addr %s147, 32
      %s149 = smul.addr %s148, 8
      %s150 = scalar_lea.vmem %s0, %s149
      %p151 = pneg %p36
      %p152 = pneg %p33
      %p153 = pneg %p57
      %p154 = pneg %p54
      %p155 = pneg %p83
      %p156 = pneg %p80
      %p157 = scmp.lt.s32.totalorder %s15, 1
      %s158 = scalar_select %p157, %s15, 1
      %s159 = smul.addr %s158, 32
      %s160 = smul.addr %s159, 8
      %s161 = scalar_lea.vmem %s2, %s160
      %p162 = pneg %p109
      %p163 = pneg %p106
      %p164 = scmp.lt.s32.totalorder %s15, 1
      %s165 = scalar_select %p164, %s15, 1
      %s166 = smul.addr %s165, 2
      %s167 = scalar_lea.vmem %s3, %s166
      %p168 = scmp.lt.s32.totalorder %s15, 1
      %s169 = scalar_select %p168, %s15, 1
      %s170 = smul.addr %s169, 32
      %s171 = smul.addr %s170, 8
      %s172 = scalar_lea.vmem %s0, %s171
      %p173 = scmp.lt.s32.totalorder %s15, 1
      %s174 = scalar_select %p173, %s15, 1
      %s175 = smul.addr %s174, 32
      %s176 = smul.addr %s175, 8
      %s177 = scalar_lea.vmem %s2, %s176
      %p178 = scmp.lt.s32.totalorder %s15, 1
      %s179 = scalar_select %p178, %s15, 1
      %s180 = smul.addr %s179, 2
      %s181 = scalar_lea.vmem %s3, %s180
      %v182 = vld [vmem:[%s172] sm:$0xff]
      %v183 = vld [vmem:[%s172 + $0x8] sm:$0xff]
      %v184 = vld [vmem:[%s172 + $0x10] sm:$0xff]
      %v185 = vld [vmem:[%s172 + $0x18] sm:$0xff]
      %v186 = vld [vmem:[%s172 + $0x20] sm:$0xff]
      %v187 = vld [vmem:[%s172 + $0x28] sm:$0xff]
      %v188 = vld [vmem:[%s172 + $0x30] sm:$0xff]
      %v189 = vld [vmem:[%s172 + $0x38] sm:$0xff]
      %v190 = vld [vmem:[%s172 + $0x40] sm:$0xff]
      %v191 = vld [vmem:[%s172 + $0x48] sm:$0xff]
      %v192 = vld [vmem:[%s172 + $0x50] sm:$0xff]
      %v193 = vld [vmem:[%s172 + $0x58] sm:$0xff]
      %v194 = vld [vmem:[%s172 + $0x60] sm:$0xff]
      %v195 = vld [vmem:[%s172 + $0x68] sm:$0xff]
      %v196 = vld [vmem:[%s172 + $0x70] sm:$0xff]
      %v197 = vld [vmem:[%s172 + $0x78] sm:$0xff]
      %v198 = vld [vmem:[%s172 + $0x80] sm:$0xff]
      %v199 = vld [vmem:[%s172 + $0x88] sm:$0xff]
      %v200 = vld [vmem:[%s172 + $0x90] sm:$0xff]
      %v201 = vld [vmem:[%s172 + $0x98] sm:$0xff]
      %v202 = vld [vmem:[%s172 + $0xa0] sm:$0xff]
      %v203 = vld [vmem:[%s172 + $0xa8] sm:$0xff]
      %v204 = vld [vmem:[%s172 + $0xb0] sm:$0xff]
      %v205 = vld [vmem:[%s172 + $0xb8] sm:$0xff]
      %v206 = vld [vmem:[%s172 + $0xc0] sm:$0xff]
      %v207 = vld [vmem:[%s172 + $0xc8] sm:$0xff]
      %v208 = vld [vmem:[%s172 + $0xd0] sm:$0xff]
      %v209 = vld [vmem:[%s172 + $0xd8] sm:$0xff]
      %v210 = vld [vmem:[%s172 + $0xe0] sm:$0xff]
      %v211 = vld [vmem:[%s172 + $0xe8] sm:$0xff]
      %v212 = vld [vmem:[%s172 + $0xf0] sm:$0xff]
      %v213 = vld [vmem:[%s172 + $0xf8] sm:$0xff]
      %v214 = vld [vmem:[%s1] sm:$0xff]
      %v215 = vld [vmem:[%s1 + $0x8] sm:$0xff]
      %v216 = vld [vmem:[%s1 + $0x10] sm:$0xff]
      %v217 = vld [vmem:[%s1 + $0x18] sm:$0xff]
      %v218 = vld [vmem:[%s1 + $0x20] sm:$0xf]
      %vm252 = vcmask 1040384
      %v253 = vrot.slane 0.0, 7
      %v254 = vsel %vm252, %v253, %v253
      %v255 = vrot.slane %v182, 7
      %v256 = vrot.slane %v183, 7
      %v257 = vsel %vm252, %v255, %v256
      %v258 = vrot.slane %v184, 7
      %v259 = vrot.slane %v185, 7
      %v260 = vsel %vm252, %v258, %v259
      %v261 = vrot.slane %v186, 7
      %v262 = vrot.slane %v187, 7
      %v263 = vsel %vm252, %v261, %v262
      %v264 = vrot.slane %v188, 7
      %v265 = vrot.slane %v189, 7
      %v266 = vsel %vm252, %v264, %v265
      %v267 = vrot.slane %v190, 7
      %v268 = vrot.slane %v191, 7
      %v269 = vsel %vm252, %v267, %v268
      %v270 = vrot.slane %v192, 7
      %v271 = vrot.slane %v193, 7
      %v272 = vsel %vm252, %v270, %v271
      %v273 = vrot.slane %v194, 7
      %v274 = vrot.slane %v195, 7
      %v275 = vsel %vm252, %v273, %v274
      %v276 = vrot.slane %v196, 7
      %v277 = vrot.slane %v197, 7
      %v278 = vsel %vm252, %v276, %v277
      %v279 = vrot.slane %v198, 7
      %v280 = vrot.slane %v199, 7
      %v281 = vsel %vm252, %v279, %v280
      %v282 = vrot.slane %v200, 7
      %v283 = vrot.slane %v201, 7
      %v284 = vsel %vm252, %v282, %v283
      %v285 = vrot.slane %v202, 7
      %v286 = vrot.slane %v203, 7
      %v287 = vsel %vm252, %v285, %v286
      %v288 = vrot.slane %v204, 7
      %v289 = vrot.slane %v205, 7
      %v290 = vsel %vm252, %v288, %v289
      %v291 = vrot.slane %v206, 7
      %v292 = vrot.slane %v207, 7
      %v293 = vsel %vm252, %v291, %v292
      %v294 = vrot.slane %v208, 7
      %v295 = vrot.slane %v209, 7
      %v296 = vsel %vm252, %v294, %v295
      %v297 = vrot.slane %v210, 7
      %v298 = vrot.slane %v211, 7
      %v299 = vsel %vm252, %v297, %v298
      %v300 = vrot.slane %v212, 7
      %v301 = vrot.slane %v213, 7
      %v302 = vsel %vm252, %v300, %v301
      %v353 = vsel %vm252, 0.0, %v253
      %v354 = vsel %vm252, 0.0, %v255
      %v355 = vsel %vm252, 0.0, %v258
      %v356 = vsel %vm252, 0.0, %v261
      %v357 = vsel %vm252, 0.0, %v264
      %v358 = vsel %vm252, 0.0, %v267
      %v359 = vsel %vm252, 0.0, %v270
      %v360 = vsel %vm252, 0.0, %v273
      %v361 = vsel %vm252, 0.0, %v276
      %v362 = vsel %vm252, 0.0, %v279
      %v363 = vsel %vm252, 0.0, %v282
      %v364 = vsel %vm252, 0.0, %v285
      %v365 = vsel %vm252, 0.0, %v288
      %v366 = vsel %vm252, 0.0, %v291
      %v367 = vsel %vm252, 0.0, %v294
      %v368 = vsel %vm252, 0.0, %v297
      %v369 = vsel %vm252, 0.0, %v300
      %v370 = vsel %vm252, %v253, 0.0
      %v371 = vsel %vm252, %v256, 0.0
      %v372 = vsel %vm252, %v259, 0.0
      %v373 = vsel %vm252, %v262, 0.0
      %v374 = vsel %vm252, %v265, 0.0
      %v375 = vsel %vm252, %v268, 0.0
      %v376 = vsel %vm252, %v271, 0.0
      %v377 = vsel %vm252, %v274, 0.0
      %v378 = vsel %vm252, %v277, 0.0
      %v379 = vsel %vm252, %v280, 0.0
      %v380 = vsel %vm252, %v283, 0.0
      %v381 = vsel %vm252, %v286, 0.0
      %v382 = vsel %vm252, %v289, 0.0
      %v383 = vsel %vm252, %v292, 0.0
      %v384 = vsel %vm252, %v295, 0.0
      %v385 = vsel %vm252, %v298, 0.0
      %v386 = vsel %vm252, %v301, 0.0
      %vm421 = vcmask 1046528
      %v422 = vrot.slane %v353, 1
      %v423 = vrot.slane %v254, 1
      %v424 = vsel %vm421, %v422, %v423
      %v425 = vrot.slane %v370, 1
      %v426 = vsel %vm421, %v423, %v425
      %v427 = vrot.slane %v354, 1
      %v428 = vrot.slane %v257, 1
      %v429 = vsel %vm421, %v427, %v428
      %v430 = vrot.slane %v371, 1
      %v431 = vsel %vm421, %v428, %v430
      %v432 = vrot.slane %v355, 1
      %v433 = vrot.slane %v260, 1
      %v434 = vsel %vm421, %v432, %v433
      %v435 = vrot.slane %v372, 1
      %v436 = vsel %vm421, %v433, %v435
      %v437 = vrot.slane %v356, 1
      %v438 = vrot.slane %v263, 1
      %v439 = vsel %vm421, %v437, %v438
      %v440 = vrot.slane %v373, 1
      %v441 = vsel %vm421, %v438, %v440
      %v442 = vrot.slane %v357, 1
      %v443 = vrot.slane %v266, 1
      %v444 = vsel %vm421, %v442, %v443
      %v445 = vrot.slane %v374, 1
      %v446 = vsel %vm421, %v443, %v445
      %v447 = vrot.slane %v358, 1
      %v448 = vrot.slane %v269, 1
      %v449 = vsel %vm421, %v447, %v448
      %v450 = vrot.slane %v375, 1
      %v451 = vsel %vm421, %v448, %v450
      %v452 = vrot.slane %v359, 1
      %v453 = vrot.slane %v272, 1
      %v454 = vsel %vm421, %v452, %v453
      %v455 = vrot.slane %v376, 1
      %v456 = vsel %vm421, %v453, %v455
      %v457 = vrot.slane %v360, 1
      %v458 = vrot.slane %v275, 1
      %v459 = vsel %vm421, %v457, %v458
      %v460 = vrot.slane %v377, 1
      %v461 = vsel %vm421, %v458, %v460
      %v462 = vrot.slane %v361, 1
      %v463 = vrot.slane %v278, 1
      %v464 = vsel %vm421, %v462, %v463
      %v465 = vrot.slane %v378, 1
      %v466 = vsel %vm421, %v463, %v465
      %v467 = vrot.slane %v362, 1
      %v468 = vrot.slane %v281, 1
      %v469 = vsel %vm421, %v467, %v468
      %v470 = vrot.slane %v379, 1
      %v471 = vsel %vm421, %v468, %v470
      %v472 = vrot.slane %v363, 1
      %v473 = vrot.slane %v284, 1
      %v474 = vsel %vm421, %v472, %v473
      %v475 = vrot.slane %v380, 1
      %v476 = vsel %vm421, %v473, %v475
      %v477 = vrot.slane %v364, 1
      %v478 = vrot.slane %v287, 1
      %v479 = vsel %vm421, %v477, %v478
      %v480 = vrot.slane %v381, 1
      %v481 = vsel %vm421, %v478, %v480
      %v482 = vrot.slane %v365, 1
      %v483 = vrot.slane %v290, 1
      %v484 = vsel %vm421, %v482, %v483
      %v485 = vrot.slane %v382, 1
      %v486 = vsel %vm421, %v483, %v485
      %v487 = vrot.slane %v366, 1
      %v488 = vrot.slane %v293, 1
      %v489 = vsel %vm421, %v487, %v488
      %v490 = vrot.slane %v383, 1
      %v491 = vsel %vm421, %v488, %v490
      %v492 = vrot.slane %v367, 1
      %v493 = vrot.slane %v296, 1
      %v494 = vsel %vm421, %v492, %v493
      %v495 = vrot.slane %v384, 1
      %v496 = vsel %vm421, %v493, %v495
      %v497 = vrot.slane %v368, 1
      %v498 = vrot.slane %v299, 1
      %v499 = vsel %vm421, %v497, %v498
      %v500 = vrot.slane %v385, 1
      %v501 = vsel %vm421, %v498, %v500
      %v502 = vrot.slane %v369, 1
      %v503 = vrot.slane %v302, 1
      %v504 = vsel %vm421, %v502, %v503
      %v505 = vrot.slane %v386, 1
      %v506 = vsel %vm421, %v503, %v505
      %507 = vrot.lane.b32.xlu0 %v424, 4
      %v508 = vpop.permute.xlu0 %507
      %509 = vrot.lane.b32.xlu0 %v426, 4
      %v510 = vpop.permute.xlu0 %509
      %511 = vrot.lane.b32.xlu0 %v429, 4
      %v512 = vpop.permute.xlu0 %511
      %513 = vrot.lane.b32.xlu0 %v431, 4
      %v514 = vpop.permute.xlu0 %513
      %515 = vrot.lane.b32.xlu0 %v434, 4
      %v516 = vpop.permute.xlu0 %515
      %517 = vrot.lane.b32.xlu0 %v436, 4
      %v518 = vpop.permute.xlu0 %517
      %519 = vrot.lane.b32.xlu0 %v439, 4
      %v520 = vpop.permute.xlu0 %519
      %521 = vrot.lane.b32.xlu0 %v441, 4
      %v522 = vpop.permute.xlu0 %521
      %523 = vrot.lane.b32.xlu0 %v444, 4
      %v524 = vpop.permute.xlu0 %523
      %525 = vrot.lane.b32.xlu0 %v446, 4
      %v526 = vpop.permute.xlu0 %525
      %527 = vrot.lane.b32.xlu0 %v449, 4
      %v528 = vpop.permute.xlu0 %527
      %529 = vrot.lane.b32.xlu0 %v451, 4
      %v530 = vpop.permute.xlu0 %529
      %531 = vrot.lane.b32.xlu0 %v454, 4
      %v532 = vpop.permute.xlu0 %531
      %533 = vrot.lane.b32.xlu0 %v456, 4
      %v534 = vpop.permute.xlu0 %533
      %535 = vrot.lane.b32.xlu0 %v459, 4
      %v536 = vpop.permute.xlu0 %535
      %537 = vrot.lane.b32.xlu0 %v461, 4
      %v538 = vpop.permute.xlu0 %537
      %539 = vrot.lane.b32.xlu0 %v464, 4
      %v540 = vpop.permute.xlu0 %539
      %541 = vrot.lane.b32.xlu0 %v466, 4
      %v542 = vpop.permute.xlu0 %541
      %543 = vrot.lane.b32.xlu0 %v469, 4
      %v544 = vpop.permute.xlu0 %543
      %545 = vrot.lane.b32.xlu0 %v471, 4
      %v546 = vpop.permute.xlu0 %545
      %547 = vrot.lane.b32.xlu0 %v474, 4
      %v548 = vpop.permute.xlu0 %547
      %549 = vrot.lane.b32.xlu0 %v476, 4
      %v550 = vpop.permute.xlu0 %549
      %551 = vrot.lane.b32.xlu0 %v479, 4
      %v552 = vpop.permute.xlu0 %551
      %553 = vrot.lane.b32.xlu0 %v481, 4
      %v554 = vpop.permute.xlu0 %553
      %555 = vrot.lane.b32.xlu0 %v484, 4
      %v556 = vpop.permute.xlu0 %555
      %557 = vrot.lane.b32.xlu0 %v486, 4
      %v558 = vpop.permute.xlu0 %557
      %559 = vrot.lane.b32.xlu0 %v489, 4
      %v560 = vpop.permute.xlu0 %559
      %561 = vrot.lane.b32.xlu0 %v491, 4
      %v562 = vpop.permute.xlu0 %561
      %563 = vrot.lane.b32.xlu0 %v494, 4
      %v564 = vpop.permute.xlu0 %563
      %565 = vrot.lane.b32.xlu0 %v496, 4
      %v566 = vpop.permute.xlu0 %565
      %567 = vrot.lane.b32.xlu0 %v499, 4
      %v568 = vpop.permute.xlu0 %567
      %569 = vrot.lane.b32.xlu0 %v501, 4
      %v570 = vpop.permute.xlu0 %569
      %571 = vrot.lane.b32.xlu0 %v504, 4
      %v572 = vpop.permute.xlu0 %571
      %573 = vrot.lane.b32.xlu0 %v506, 4
      %v574 = vpop.permute.xlu0 %573
      %vm609 = vcmask 1045504
      %v610 = vrot.slane %v353, 2
      %v611 = vrot.slane %v254, 2
      %v612 = vsel %vm609, %v610, %v611
      %v613 = vrot.slane %v370, 2
      %v614 = vsel %vm609, %v611, %v613
      %v615 = vrot.slane %v354, 2
      %v616 = vrot.slane %v257, 2
      %v617 = vsel %vm609, %v615, %v616
      %v618 = vrot.slane %v371, 2
      %v619 = vsel %vm609, %v616, %v618
      %v620 = vrot.slane %v355, 2
      %v621 = vrot.slane %v260, 2
      %v622 = vsel %vm609, %v620, %v621
      %v623 = vrot.slane %v372, 2
      %v624 = vsel %vm609, %v621, %v623
      %v625 = vrot.slane %v356, 2
      %v626 = vrot.slane %v263, 2
      %v627 = vsel %vm609, %v625, %v626
      %v628 = vrot.slane %v373, 2
      %v629 = vsel %vm609, %v626, %v628
      %v630 = vrot.slane %v357, 2
      %v631 = vrot.slane %v266, 2
      %v632 = vsel %vm609, %v630, %v631
      %v633 = vrot.slane %v374, 2
      %v634 = vsel %vm609, %v631, %v633
      %v635 = vrot.slane %v358, 2
      %v636 = vrot.slane %v269, 2
      %v637 = vsel %vm609, %v635, %v636
      %v638 = vrot.slane %v375, 2
      %v639 = vsel %vm609, %v636, %v638
      %v640 = vrot.slane %v359, 2
      %v641 = vrot.slane %v272, 2
      %v642 = vsel %vm609, %v640, %v641
      %v643 = vrot.slane %v376, 2
      %v644 = vsel %vm609, %v641, %v643
      %v645 = vrot.slane %v360, 2
      %v646 = vrot.slane %v275, 2
      %v647 = vsel %vm609, %v645, %v646
      %v648 = vrot.slane %v377, 2
      %v649 = vsel %vm609, %v646, %v648
      %v650 = vrot.slane %v361, 2
      %v651 = vrot.slane %v278, 2
      %v652 = vsel %vm609, %v650, %v651
      %v653 = vrot.slane %v378, 2
      %v654 = vsel %vm609, %v651, %v653
      %v655 = vrot.slane %v362, 2
      %v656 = vrot.slane %v281, 2
      %v657 = vsel %vm609, %v655, %v656
      %v658 = vrot.slane %v379, 2
      %v659 = vsel %vm609, %v656, %v658
      %v660 = vrot.slane %v363, 2
      %v661 = vrot.slane %v284, 2
      %v662 = vsel %vm609, %v660, %v661
      %v663 = vrot.slane %v380, 2
      %v664 = vsel %vm609, %v661, %v663
      %v665 = vrot.slane %v364, 2
      %v666 = vrot.slane %v287, 2
      %v667 = vsel %vm609, %v665, %v666
      %v668 = vrot.slane %v381, 2
      %v669 = vsel %vm609, %v666, %v668
      %v670 = vrot.slane %v365, 2
      %v671 = vrot.slane %v290, 2
      %v672 = vsel %vm609, %v670, %v671
      %v673 = vrot.slane %v382, 2
      %v674 = vsel %vm609, %v671, %v673
      %v675 = vrot.slane %v366, 2
      %v676 = vrot.slane %v293, 2
      %v677 = vsel %vm609, %v675, %v676
      %v678 = vrot.slane %v383, 2
      %v679 = vsel %vm609, %v676, %v678
      %v680 = vrot.slane %v367, 2
      %v681 = vrot.slane %v296, 2
      %v682 = vsel %vm609, %v680, %v681
      %v683 = vrot.slane %v384, 2
      %v684 = vsel %vm609, %v681, %v683
      %v685 = vrot.slane %v368, 2
      %v686 = vrot.slane %v299, 2
      %v687 = vsel %vm609, %v685, %v686
      %v688 = vrot.slane %v385, 2
      %v689 = vsel %vm609, %v686, %v688
      %v690 = vrot.slane %v369, 2
      %v691 = vrot.slane %v302, 2
      %v692 = vsel %vm609, %v690, %v691
      %v693 = vrot.slane %v386, 2
      %v694 = vsel %vm609, %v691, %v693
      %695 = vrot.lane.b32.xlu0 %v612, 8
      %v696 = vpop.permute.xlu0 %695
      %697 = vrot.lane.b32.xlu0 %v614, 8
      %v698 = vpop.permute.xlu0 %697
      %699 = vrot.lane.b32.xlu0 %v617, 8
      %v700 = vpop.permute.xlu0 %699
      %701 = vrot.lane.b32.xlu0 %v619, 8
      %v702 = vpop.permute.xlu0 %701
      %703 = vrot.lane.b32.xlu0 %v622, 8
      %v704 = vpop.permute.xlu0 %703
      %705 = vrot.lane.b32.xlu0 %v624, 8
      %v706 = vpop.permute.xlu0 %705
      %707 = vrot.lane.b32.xlu0 %v627, 8
      %v708 = vpop.permute.xlu0 %707
      %709 = vrot.lane.b32.xlu0 %v629, 8
      %v710 = vpop.permute.xlu0 %709
      %711 = vrot.lane.b32.xlu0 %v632, 8
      %v712 = vpop.permute.xlu0 %711
      %713 = vrot.lane.b32.xlu0 %v634, 8
      %v714 = vpop.permute.xlu0 %713
      %715 = vrot.lane.b32.xlu0 %v637, 8
      %v716 = vpop.permute.xlu0 %715
      %717 = vrot.lane.b32.xlu0 %v639, 8
      %v718 = vpop.permute.xlu0 %717
      %719 = vrot.lane.b32.xlu0 %v642, 8
      %v720 = vpop.permute.xlu0 %719
      %721 = vrot.lane.b32.xlu0 %v644, 8
      %v722 = vpop.permute.xlu0 %721
      %723 = vrot.lane.b32.xlu0 %v647, 8
      %v724 = vpop.permute.xlu0 %723
      %725 = vrot.lane.b32.xlu0 %v649, 8
      %v726 = vpop.permute.xlu0 %725
      %727 = vrot.lane.b32.xlu0 %v652, 8
      %v728 = vpop.permute.xlu0 %727
      %729 = vrot.lane.b32.xlu0 %v654, 8
      %v730 = vpop.permute.xlu0 %729
      %731 = vrot.lane.b32.xlu0 %v657, 8
      %v732 = vpop.permute.xlu0 %731
      %733 = vrot.lane.b32.xlu0 %v659, 8
      %v734 = vpop.permute.xlu0 %733
      %735 = vrot.lane.b32.xlu0 %v662, 8
      %v736 = vpop.permute.xlu0 %735
      %737 = vrot.lane.b32.xlu0 %v664, 8
      %v738 = vpop.permute.xlu0 %737
      %739 = vrot.lane.b32.xlu0 %v667, 8
      %v740 = vpop.permute.xlu0 %739
      %741 = vrot.lane.b32.xlu0 %v669, 8
      %v742 = vpop.permute.xlu0 %741
      %743 = vrot.lane.b32.xlu0 %v672, 8
      %v744 = vpop.permute.xlu0 %743
      %745 = vrot.lane.b32.xlu0 %v674, 8
      %v746 = vpop.permute.xlu0 %745
      %747 = vrot.lane.b32.xlu0 %v677, 8
      %v748 = vpop.permute.xlu0 %747
      %749 = vrot.lane.b32.xlu0 %v679, 8
      %v750 = vpop.permute.xlu0 %749
      %751 = vrot.lane.b32.xlu0 %v682, 8
      %v752 = vpop.permute.xlu0 %751
      %753 = vrot.lane.b32.xlu0 %v684, 8
      %v754 = vpop.permute.xlu0 %753
      %755 = vrot.lane.b32.xlu0 %v687, 8
      %v756 = vpop.permute.xlu0 %755
      %757 = vrot.lane.b32.xlu0 %v689, 8
      %v758 = vpop.permute.xlu0 %757
      %759 = vrot.lane.b32.xlu0 %v692, 8
      %v760 = vpop.permute.xlu0 %759
      %761 = vrot.lane.b32.xlu0 %v694, 8
      %v762 = vpop.permute.xlu0 %761
      %vm797 = vcmask 31744
      %v798 = vsel %vm797, %v353, %v508
      %v799 = vsel %vm797, %v254, %v510
      %v800 = vsel %vm797, %v354, %v512
      %v801 = vsel %vm797, %v257, %v514
      %v802 = vsel %vm797, %v355, %v516
      %v803 = vsel %vm797, %v260, %v518
      %v804 = vsel %vm797, %v356, %v520
      %v805 = vsel %vm797, %v263, %v522
      %v806 = vsel %vm797, %v357, %v524
      %v807 = vsel %vm797, %v266, %v526
      %v808 = vsel %vm797, %v358, %v528
      %v809 = vsel %vm797, %v269, %v530
      %v810 = vsel %vm797, %v359, %v532
      %v811 = vsel %vm797, %v272, %v534
      %v812 = vsel %vm797, %v360, %v536
      %v813 = vsel %vm797, %v275, %v538
      %v814 = vsel %vm797, %v361, %v540
      %v815 = vsel %vm797, %v278, %v542
      %v816 = vsel %vm797, %v362, %v544
      %v817 = vsel %vm797, %v281, %v546
      %v818 = vsel %vm797, %v363, %v548
      %v819 = vsel %vm797, %v284, %v550
      %v820 = vsel %vm797, %v364, %v552
      %v821 = vsel %vm797, %v287, %v554
      %v822 = vsel %vm797, %v365, %v556
      %v823 = vsel %vm797, %v290, %v558
      %v824 = vsel %vm797, %v366, %v560
      %v825 = vsel %vm797, %v293, %v562
      %v826 = vsel %vm797, %v367, %v564
      %v827 = vsel %vm797, %v296, %v566
      %v828 = vsel %vm797, %v368, %v568
      %v829 = vsel %vm797, %v299, %v570
      %v830 = vsel %vm797, %v369, %v572
      %v831 = vsel %vm797, %v302, %v574
      %vm832 = vcmask 64512
      %v833 = vsel %vm832, %v798, %v696
      %v834 = vsel %vm832, %v799, %v698
      %v835 = vsel %vm832, %v800, %v700
      %v836 = vsel %vm832, %v801, %v702
      %v837 = vsel %vm832, %v802, %v704
      %v838 = vsel %vm832, %v803, %v706
      %v839 = vsel %vm832, %v804, %v708
      %v840 = vsel %vm832, %v805, %v710
      %v841 = vsel %vm832, %v806, %v712
      %v842 = vsel %vm832, %v807, %v714
      %v843 = vsel %vm832, %v808, %v716
      %v844 = vsel %vm832, %v809, %v718
      %v845 = vsel %vm832, %v810, %v720
      %v846 = vsel %vm832, %v811, %v722
      %v847 = vsel %vm832, %v812, %v724
      %v848 = vsel %vm832, %v813, %v726
      %v849 = vsel %vm832, %v814, %v728
      %v850 = vsel %vm832, %v815, %v730
      %v851 = vsel %vm832, %v816, %v732
      %v852 = vsel %vm832, %v817, %v734
      %v853 = vsel %vm832, %v818, %v736
      %v854 = vsel %vm832, %v819, %v738
      %v855 = vsel %vm832, %v820, %v740
      %v856 = vsel %vm832, %v821, %v742
      %v857 = vsel %vm832, %v822, %v744
      %v858 = vsel %vm832, %v823, %v746
      %v859 = vsel %vm832, %v824, %v748
      %v860 = vsel %vm832, %v825, %v750
      %v861 = vsel %vm832, %v826, %v752
      %v862 = vsel %vm832, %v827, %v754
      %v863 = vsel %vm832, %v828, %v756
      %v864 = vsel %vm832, %v829, %v758
      %v865 = vsel %vm832, %v830, %v760
      %v866 = vsel %vm832, %v831, %v762
      %vm869 = vcmask 1043456
      %v870 = vrot.slane %v215, 4
      %v871 = vrot.slane %v216, 4
      %v872 = vsel %vm869, %v870, %v871
      %vm874 = vcmask 97280
      %v876 = vsel %vm874, %v835, 0
      %v879 = vsel %vm874, %v836, 0
      %v882 = vsel %vm874, %v837, 0
      %v885 = vsel %vm874, %v838, 0
      %v888 = vsel %vm874, %v839, 0
      %v891 = vsel %vm874, %v840, 0
      %v894 = vsel %vm874, %v841, 0
      %v897 = vsel %vm874, %v842, 0
      %v900 = vsel %vm874, %v843, 0
      %v903 = vsel %vm874, %v844, 0
      %v906 = vsel %vm874, %v845, 0
      %v909 = vsel %vm874, %v846, 0
      %v912 = vsel %vm874, %v847, 0
      %v915 = vsel %vm874, %v848, 0
      %v918 = vsel %vm874, %v849, 0
      %v921 = vsel %vm874, %v850, 0
      %v924 = vsel %vm874, %v851, 0
      %v927 = vsel %vm874, %v852, 0
      %v930 = vsel %vm874, %v853, 0
      %v933 = vsel %vm874, %v854, 0
      %v936 = vsel %vm874, %v855, 0
      %v939 = vsel %vm874, %v856, 0
      %v942 = vsel %vm874, %v857, 0
      %v945 = vsel %vm874, %v858, 0
      %v948 = vsel %vm874, %v859, 0
      %v951 = vsel %vm874, %v860, 0
      %v954 = vsel %vm874, %v861, 0
      %v957 = vsel %vm874, %v862, 0
      %v960 = vsel %vm874, %v863, 0
      %v963 = vsel %vm874, %v864, 0
      %v966 = vsel %vm874, %v865, 0
      %v969 = vsel %vm874, %v866, 0
      %v971 = vsel %vm869, %v871, 0
      %973 = vmatpush.msra.mxu0 0.0
      %974 = vmatpush.msra.mxu0 0.0
      %975 = vmatpush.msra.mxu0 0.0
      %976 = vmatpush.msra.mxu0 0.0
      %977 = vmatpush.msra.mxu0 0.0
      %978 = vmatpush.msra.mxu0 0.0
      %979 = vmatpush.msra.mxu0 0.0
      %980 = vmatpush.msra.mxu0 0.0
      %981 = vmatpush.msra.mxu0 0.0
      %982 = vmatpush.msra.mxu0 0.0
      %983 = vmatpush.msra.mxu0 0.0
      %984 = vmatpush.msra.mxu0 0.0
      %985 = vmatpush.msra.mxu0 0.0
      %986 = vmatpush.msra.mxu0 0.0
      %987 = vmatpush.msra.mxu0 %v971
      %988 = vmatpush.msra.mxu0 %v872
      %989 = vmatmul.f32.gmra.mxu0 %v876
      %v990 = vpop.f32.mrf.mxu0
      %v991 = vadd.f32 0.0, %v990
      %992 = vmatmul.f32.gmra.mxu0 %v879
      %v993 = vpop.f32.mrf.mxu0
      %v994 = vadd.f32 0.0, %v993
      %995 = vmatmul.f32.gmra.mxu0 %v882
      %v996 = vpop.f32.mrf.mxu0
      %v997 = vadd.f32 0.0, %v996
      %998 = vmatmul.f32.gmra.mxu0 %v885
      %v999 = vpop.f32.mrf.mxu0
      %v1000 = vadd.f32 0.0, %v999
      %1001 = vmatmul.f32.gmra.mxu0 %v888
      %v1002 = vpop.f32.mrf.mxu0
      %v1003 = vadd.f32 0.0, %v1002
      %1004 = vmatmul.f32.gmra.mxu0 %v891
      %v1005 = vpop.f32.mrf.mxu0
      %v1006 = vadd.f32 0.0, %v1005
      %1007 = vmatmul.f32.gmra.mxu0 %v894
      %v1008 = vpop.f32.mrf.mxu0
      %v1009 = vadd.f32 0.0, %v1008
      %1010 = vmatmul.f32.gmra.mxu0 %v897
      %v1011 = vpop.f32.mrf.mxu0
      %v1012 = vadd.f32 0.0, %v1011
      %1013 = vmatmul.f32.gmra.mxu0 %v900
      %v1014 = vpop.f32.mrf.mxu0
      %v1015 = vadd.f32 0.0, %v1014
      %1016 = vmatmul.f32.gmra.mxu0 %v903
      %v1017 = vpop.f32.mrf.mxu0
      %v1018 = vadd.f32 0.0, %v1017
      %1019 = vmatmul.f32.gmra.mxu0 %v906
      %v1020 = vpop.f32.mrf.mxu0
      %v1021 = vadd.f32 0.0, %v1020
      %1022 = vmatmul.f32.gmra.mxu0 %v909
      %v1023 = vpop.f32.mrf.mxu0
      %v1024 = vadd.f32 0.0, %v1023
      %1025 = vmatmul.f32.gmra.mxu0 %v912
      %v1026 = vpop.f32.mrf.mxu0
      %v1027 = vadd.f32 0.0, %v1026
      %1028 = vmatmul.f32.gmra.mxu0 %v915
      %v1029 = vpop.f32.mrf.mxu0
      %v1030 = vadd.f32 0.0, %v1029
      %1031 = vmatmul.f32.gmra.mxu0 %v918
      %v1032 = vpop.f32.mrf.mxu0
      %v1033 = vadd.f32 0.0, %v1032
      %1034 = vmatmul.f32.gmra.mxu0 %v921
      %v1035 = vpop.f32.mrf.mxu0
      %v1036 = vadd.f32 0.0, %v1035
      %1037 = vmatmul.f32.gmra.mxu0 %v924
      %v1038 = vpop.f32.mrf.mxu0
      %v1039 = vadd.f32 0.0, %v1038
      %1040 = vmatmul.f32.gmra.mxu0 %v927
      %v1041 = vpop.f32.mrf.mxu0
      %v1042 = vadd.f32 0.0, %v1041
      %1043 = vmatmul.f32.gmra.mxu0 %v930
      %v1044 = vpop.f32.mrf.mxu0
      %v1045 = vadd.f32 0.0, %v1044
      %1046 = vmatmul.f32.gmra.mxu0 %v933
      %v1047 = vpop.f32.mrf.mxu0
      %v1048 = vadd.f32 0.0, %v1047
      %1049 = vmatmul.f32.gmra.mxu0 %v936
      %v1050 = vpop.f32.mrf.mxu0
      %v1051 = vadd.f32 0.0, %v1050
      %1052 = vmatmul.f32.gmra.mxu0 %v939
      %v1053 = vpop.f32.mrf.mxu0
      %v1054 = vadd.f32 0.0, %v1053
      %1055 = vmatmul.f32.gmra.mxu0 %v942
      %v1056 = vpop.f32.mrf.mxu0
      %v1057 = vadd.f32 0.0, %v1056
      %1058 = vmatmul.f32.gmra.mxu0 %v945
      %v1059 = vpop.f32.mrf.mxu0
      %v1060 = vadd.f32 0.0, %v1059
      %1061 = vmatmul.f32.gmra.mxu0 %v948
      %v1062 = vpop.f32.mrf.mxu0
      %v1063 = vadd.f32 0.0, %v1062
      %1064 = vmatmul.f32.gmra.mxu0 %v951
      %v1065 = vpop.f32.mrf.mxu0
      %v1066 = vadd.f32 0.0, %v1065
      %1067 = vmatmul.f32.gmra.mxu0 %v954
      %v1068 = vpop.f32.mrf.mxu0
      %v1069 = vadd.f32 0.0, %v1068
      %1070 = vmatmul.f32.gmra.mxu0 %v957
      %v1071 = vpop.f32.mrf.mxu0
      %v1072 = vadd.f32 0.0, %v1071
      %1073 = vmatmul.f32.gmra.mxu0 %v960
      %v1074 = vpop.f32.mrf.mxu0
      %v1075 = vadd.f32 0.0, %v1074
      %1076 = vmatmul.f32.gmra.mxu0 %v963
      %v1077 = vpop.f32.mrf.mxu0
      %v1078 = vadd.f32 0.0, %v1077
      %1079 = vmatmul.f32.gmra.mxu0 %v966
      %v1080 = vpop.f32.mrf.mxu0
      %v1081 = vadd.f32 0.0, %v1080
      %1082 = vmatmul.f32.gmra.mxu0 %v969
      %v1083 = vpop.f32.mrf.mxu0
      %v1084 = vadd.f32 0.0, %v1083
      %1085 = vdwg.mxu0
      %v1087 = vsel %vm874, %v833, 0
      %v1090 = vsel %vm874, %v834, 0
      %v1092 = vsel %vm869, %v215, 0
      %1094 = vmatpush.msra.mxu0 0.0
      %1095 = vmatpush.msra.mxu0 0.0
      %1096 = vmatpush.msra.mxu0 0.0
      %1097 = vmatpush.msra.mxu0 0.0
      %1098 = vmatpush.msra.mxu0 0.0
      %1099 = vmatpush.msra.mxu0 0.0
      %1100 = vmatpush.msra.mxu0 0.0
      %1101 = vmatpush.msra.mxu0 0.0
      %1102 = vmatpush.msra.mxu0 0.0
      %1103 = vmatpush.msra.mxu0 0.0
      %1104 = vmatpush.msra.mxu0 0.0
      %1105 = vmatpush.msra.mxu0 0.0
      %1106 = vmatpush.msra.mxu0 0.0
      %1107 = vmatpush.msra.mxu0 0.0
      %1108 = vmatpush.msra.mxu0 %v1092
      %1109 = vmatpush.msra.mxu0 %v214
      %1110 = vmatmul.f32.gmra.mxu0 %v1087
      %v1111 = vpop.f32.mrf.mxu0
      %v1112 = vadd.f32 %v991, %v1111
      %1113 = vmatmul.f32.gmra.mxu0 %v1090
      %v1114 = vpop.f32.mrf.mxu0
      %v1115 = vadd.f32 %v994, %v1114
      %1116 = vmatmul.f32.gmra.mxu0 %v876
      %v1117 = vpop.f32.mrf.mxu0
      %v1118 = vadd.f32 %v997, %v1117
      %1119 = vmatmul.f32.gmra.mxu0 %v879
      %v1120 = vpop.f32.mrf.mxu0
      %v1121 = vadd.f32 %v1000, %v1120
      %1122 = vmatmul.f32.gmra.mxu0 %v882
      %v1123 = vpop.f32.mrf.mxu0
      %v1124 = vadd.f32 %v1003, %v1123
      %1125 = vmatmul.f32.gmra.mxu0 %v885
      %v1126 = vpop.f32.mrf.mxu0
      %v1127 = vadd.f32 %v1006, %v1126
      %1128 = vmatmul.f32.gmra.mxu0 %v888
      %v1129 = vpop.f32.mrf.mxu0
      %v1130 = vadd.f32 %v1009, %v1129
      %1131 = vmatmul.f32.gmra.mxu0 %v891
      %v1132 = vpop.f32.mrf.mxu0
      %v1133 = vadd.f32 %v1012, %v1132
      %1134 = vmatmul.f32.gmra.mxu0 %v894
      %v1135 = vpop.f32.mrf.mxu0
      %v1136 = vadd.f32 %v1015, %v1135
      %1137 = vmatmul.f32.gmra.mxu0 %v897
      %v1138 = vpop.f32.mrf.mxu0
      %v1139 = vadd.f32 %v1018, %v1138
      %1140 = vmatmul.f32.gmra.mxu0 %v900
      %v1141 = vpop.f32.mrf.mxu0
      %v1142 = vadd.f32 %v1021, %v1141
      %1143 = vmatmul.f32.gmra.mxu0 %v903
      %v1144 = vpop.f32.mrf.mxu0
      %v1145 = vadd.f32 %v1024, %v1144
      %1146 = vmatmul.f32.gmra.mxu0 %v906
      %v1147 = vpop.f32.mrf.mxu0
      %v1148 = vadd.f32 %v1027, %v1147
      %1149 = vmatmul.f32.gmra.mxu0 %v909
      %v1150 = vpop.f32.mrf.mxu0
      %v1151 = vadd.f32 %v1030, %v1150
      %1152 = vmatmul.f32.gmra.mxu0 %v912
      %v1153 = vpop.f32.mrf.mxu0
      %v1154 = vadd.f32 %v1033, %v1153
      %1155 = vmatmul.f32.gmra.mxu0 %v915
      %v1156 = vpop.f32.mrf.mxu0
      %v1157 = vadd.f32 %v1036, %v1156
      %1158 = vmatmul.f32.gmra.mxu0 %v918
      %v1159 = vpop.f32.mrf.mxu0
      %v1160 = vadd.f32 %v1039, %v1159
      %1161 = vmatmul.f32.gmra.mxu0 %v921
      %v1162 = vpop.f32.mrf.mxu0
      %v1163 = vadd.f32 %v1042, %v1162
      %1164 = vmatmul.f32.gmra.mxu0 %v924
      %v1165 = vpop.f32.mrf.mxu0
      %v1166 = vadd.f32 %v1045, %v1165
      %1167 = vmatmul.f32.gmra.mxu0 %v927
      %v1168 = vpop.f32.mrf.mxu0
      %v1169 = vadd.f32 %v1048, %v1168
      %1170 = vmatmul.f32.gmra.mxu0 %v930
      %v1171 = vpop.f32.mrf.mxu0
      %v1172 = vadd.f32 %v1051, %v1171
      %1173 = vmatmul.f32.gmra.mxu0 %v933
      %v1174 = vpop.f32.mrf.mxu0
      %v1175 = vadd.f32 %v1054, %v1174
      %1176 = vmatmul.f32.gmra.mxu0 %v936
      %v1177 = vpop.f32.mrf.mxu0
      %v1178 = vadd.f32 %v1057, %v1177
      %1179 = vmatmul.f32.gmra.mxu0 %v939
      %v1180 = vpop.f32.mrf.mxu0
      %v1181 = vadd.f32 %v1060, %v1180
      %1182 = vmatmul.f32.gmra.mxu0 %v942
      %v1183 = vpop.f32.mrf.mxu0
      %v1184 = vadd.f32 %v1063, %v1183
      %1185 = vmatmul.f32.gmra.mxu0 %v945
      %v1186 = vpop.f32.mrf.mxu0
      %v1187 = vadd.f32 %v1066, %v1186
      %1188 = vmatmul.f32.gmra.mxu0 %v948
      %v1189 = vpop.f32.mrf.mxu0
      %v1190 = vadd.f32 %v1069, %v1189
      %1191 = vmatmul.f32.gmra.mxu0 %v951
      %v1192 = vpop.f32.mrf.mxu0
      %v1193 = vadd.f32 %v1072, %v1192
      %1194 = vmatmul.f32.gmra.mxu0 %v954
      %v1195 = vpop.f32.mrf.mxu0
      %v1196 = vadd.f32 %v1075, %v1195
      %1197 = vmatmul.f32.gmra.mxu0 %v957
      %v1198 = vpop.f32.mrf.mxu0
      %v1199 = vadd.f32 %v1078, %v1198
      %1200 = vmatmul.f32.gmra.mxu0 %v960
      %v1201 = vpop.f32.mrf.mxu0
      %v1202 = vadd.f32 %v1081, %v1201
      %1203 = vmatmul.f32.gmra.mxu0 %v963
      %v1204 = vpop.f32.mrf.mxu0
      %v1205 = vadd.f32 %v1084, %v1204
      %1206 = vdwg.mxu0
      %v1208 = vsel %vm869, %v218, 0
      %1210 = vmatpush.msra.mxu0 0.0
      %1211 = vmatpush.msra.mxu0 0.0
      %1212 = vmatpush.msra.mxu0 0.0
      %1213 = vmatpush.msra.mxu0 0.0
      %1214 = vmatpush.msra.mxu0 0.0
      %1215 = vmatpush.msra.mxu0 0.0
      %1216 = vmatpush.msra.mxu0 0.0
      %1217 = vmatpush.msra.mxu0 0.0
      %1218 = vmatpush.msra.mxu0 0.0
      %1219 = vmatpush.msra.mxu0 0.0
      %1220 = vmatpush.msra.mxu0 0.0
      %1221 = vmatpush.msra.mxu0 0.0
      %1222 = vmatpush.msra.mxu0 0.0
      %1223 = vmatpush.msra.mxu0 0.0
      %1224 = vmatpush.msra.mxu0 %v1208
      %1225 = vmatpush.msra.mxu0 %v217
      %1226 = vmatmul.f32.gmra.mxu0 %v882
      %v1227 = vpop.f32.mrf.mxu0
      %v1228 = vadd.f32 0.0, %v1227
      %1229 = vmatmul.f32.gmra.mxu0 %v885
      %v1230 = vpop.f32.mrf.mxu0
      %v1231 = vadd.f32 0.0, %v1230
      %1232 = vmatmul.f32.gmra.mxu0 %v888
      %v1233 = vpop.f32.mrf.mxu0
      %v1234 = vadd.f32 0.0, %v1233
      %1235 = vmatmul.f32.gmra.mxu0 %v891
      %v1236 = vpop.f32.mrf.mxu0
      %v1237 = vadd.f32 0.0, %v1236
      %1238 = vmatmul.f32.gmra.mxu0 %v894
      %v1239 = vpop.f32.mrf.mxu0
      %v1240 = vadd.f32 0.0, %v1239
      %1241 = vmatmul.f32.gmra.mxu0 %v897
      %v1242 = vpop.f32.mrf.mxu0
      %v1243 = vadd.f32 0.0, %v1242
      %1244 = vmatmul.f32.gmra.mxu0 %v900
      %v1245 = vpop.f32.mrf.mxu0
      %v1246 = vadd.f32 0.0, %v1245
      %1247 = vmatmul.f32.gmra.mxu0 %v903
      %v1248 = vpop.f32.mrf.mxu0
      %v1249 = vadd.f32 0.0, %v1248
      %1250 = vmatmul.f32.gmra.mxu0 %v906
      %v1251 = vpop.f32.mrf.mxu0
      %v1252 = vadd.f32 0.0, %v1251
      %1253 = vmatmul.f32.gmra.mxu0 %v909
      %v1254 = vpop.f32.mrf.mxu0
      %v1255 = vadd.f32 0.0, %v1254
      %1256 = vmatmul.f32.gmra.mxu0 %v912
      %v1257 = vpop.f32.mrf.mxu0
      %v1258 = vadd.f32 0.0, %v1257
      %1259 = vmatmul.f32.gmra.mxu0 %v915
      %v1260 = vpop.f32.mrf.mxu0
      %v1261 = vadd.f32 0.0, %v1260
      %1262 = vmatmul.f32.gmra.mxu0 %v918
      %v1263 = vpop.f32.mrf.mxu0
      %v1264 = vadd.f32 0.0, %v1263
      %1265 = vmatmul.f32.gmra.mxu0 %v921
      %v1266 = vpop.f32.mrf.mxu0
      %v1267 = vadd.f32 0.0, %v1266
      %1268 = vmatmul.f32.gmra.mxu0 %v924
      %v1269 = vpop.f32.mrf.mxu0
      %v1270 = vadd.f32 0.0, %v1269
      %1271 = vmatmul.f32.gmra.mxu0 %v927
      %v1272 = vpop.f32.mrf.mxu0
      %v1273 = vadd.f32 0.0, %v1272
      %1274 = vmatmul.f32.gmra.mxu0 %v930
      %v1275 = vpop.f32.mrf.mxu0
      %v1276 = vadd.f32 0.0, %v1275
      %1277 = vmatmul.f32.gmra.mxu0 %v933
      %v1278 = vpop.f32.mrf.mxu0
      %v1279 = vadd.f32 0.0, %v1278
      %1280 = vmatmul.f32.gmra.mxu0 %v936
      %v1281 = vpop.f32.mrf.mxu0
      %v1282 = vadd.f32 0.0, %v1281
      %1283 = vmatmul.f32.gmra.mxu0 %v939
      %v1284 = vpop.f32.mrf.mxu0
      %v1285 = vadd.f32 0.0, %v1284
      %1286 = vmatmul.f32.gmra.mxu0 %v942
      %v1287 = vpop.f32.mrf.mxu0
      %v1288 = vadd.f32 0.0, %v1287
      %1289 = vmatmul.f32.gmra.mxu0 %v945
      %v1290 = vpop.f32.mrf.mxu0
      %v1291 = vadd.f32 0.0, %v1290
      %1292 = vmatmul.f32.gmra.mxu0 %v948
      %v1293 = vpop.f32.mrf.mxu0
      %v1294 = vadd.f32 0.0, %v1293
      %1295 = vmatmul.f32.gmra.mxu0 %v951
      %v1296 = vpop.f32.mrf.mxu0
      %v1297 = vadd.f32 0.0, %v1296
      %1298 = vmatmul.f32.gmra.mxu0 %v954
      %v1299 = vpop.f32.mrf.mxu0
      %v1300 = vadd.f32 0.0, %v1299
      %1301 = vmatmul.f32.gmra.mxu0 %v957
      %v1302 = vpop.f32.mrf.mxu0
      %v1303 = vadd.f32 0.0, %v1302
      %1304 = vmatmul.f32.gmra.mxu0 %v960
      %v1305 = vpop.f32.mrf.mxu0
      %v1306 = vadd.f32 0.0, %v1305
      %1307 = vmatmul.f32.gmra.mxu0 %v963
      %v1308 = vpop.f32.mrf.mxu0
      %v1309 = vadd.f32 0.0, %v1308
      %1310 = vmatmul.f32.gmra.mxu0 %v966
      %v1311 = vpop.f32.mrf.mxu0
      %v1312 = vadd.f32 0.0, %v1311
      %1313 = vmatmul.f32.gmra.mxu0 %v969
      %v1314 = vpop.f32.mrf.mxu0
      %v1315 = vadd.f32 0.0, %v1314
      %1316 = vmatmul.f32.gmra.mxu0 %v1087
      %v1317 = vpop.f32.mrf.mxu0
      %v1318 = vadd.f32 0.0, %v1317
      %1319 = vmatmul.f32.gmra.mxu0 %v1090
      %v1320 = vpop.f32.mrf.mxu0
      %v1321 = vadd.f32 0.0, %v1320
      %1322 = vdwg.mxu0
      %v1323 = vadd.f32 %v1112, %v1228
      %v1324 = vadd.f32 %v1115, %v1231
      %v1325 = vadd.f32 %v1118, %v1234
      %v1326 = vadd.f32 %v1121, %v1237
      %v1327 = vadd.f32 %v1124, %v1240
      %v1328 = vadd.f32 %v1127, %v1243
      %v1329 = vadd.f32 %v1130, %v1246
      %v1330 = vadd.f32 %v1133, %v1249
      %v1331 = vadd.f32 %v1136, %v1252
      %v1332 = vadd.f32 %v1139, %v1255
      %v1333 = vadd.f32 %v1142, %v1258
      %v1334 = vadd.f32 %v1145, %v1261
      %v1335 = vadd.f32 %v1148, %v1264
      %v1336 = vadd.f32 %v1151, %v1267
      %v1337 = vadd.f32 %v1154, %v1270
      %v1338 = vadd.f32 %v1157, %v1273
      %v1339 = vadd.f32 %v1160, %v1276
      %v1340 = vadd.f32 %v1163, %v1279
      %v1341 = vadd.f32 %v1166, %v1282
      %v1342 = vadd.f32 %v1169, %v1285
      %v1343 = vadd.f32 %v1172, %v1288
      %v1344 = vadd.f32 %v1175, %v1291
      %v1345 = vadd.f32 %v1178, %v1294
      %v1346 = vadd.f32 %v1181, %v1297
      %v1347 = vadd.f32 %v1184, %v1300
      %v1348 = vadd.f32 %v1187, %v1303
      %v1349 = vadd.f32 %v1190, %v1306
      %v1350 = vadd.f32 %v1193, %v1309
      %v1351 = vadd.f32 %v1196, %v1312
      %v1352 = vadd.f32 %v1199, %v1315
      %v1353 = vadd.f32 %v1202, %v1318
      %v1354 = vadd.f32 %v1205, %v1321
      %1355 = vst.msk [vmem:[%s177] sm:$0xff] %vm832, %v1323
      %1356 = vst.msk [vmem:[%s177 + $0x8] sm:$0xff] %vm832, %v1324
      %1357 = vst.msk [vmem:[%s177 + $0x10] sm:$0xff] %vm832, %v1325
      %1358 = vst.msk [vmem:[%s177 + $0x18] sm:$0xff] %vm832, %v1326
      %1359 = vst.msk [vmem:[%s177 + $0x20] sm:$0xff] %vm832, %v1327
      %1360 = vst.msk [vmem:[%s177 + $0x28] sm:$0xff] %vm832, %v1328
      %1361 = vst.msk [vmem:[%s177 + $0x30] sm:$0xff] %vm832, %v1329
      %1362 = vst.msk [vmem:[%s177 + $0x38] sm:$0xff] %vm832, %v1330
      %1363 = vst.msk [vmem:[%s177 + $0x40] sm:$0xff] %vm832, %v1331
      %1364 = vst.msk [vmem:[%s177 + $0x48] sm:$0xff] %vm832, %v1332
      %1365 = vst.msk [vmem:[%s177 + $0x50] sm:$0xff] %vm832, %v1333
      %1366 = vst.msk [vmem:[%s177 + $0x58] sm:$0xff] %vm832, %v1334
      %1367 = vst.msk [vmem:[%s177 + $0x60] sm:$0xff] %vm832, %v1335
      %1368 = vst.msk [vmem:[%s177 + $0x68] sm:$0xff] %vm832, %v1336
      %1369 = vst.msk [vmem:[%s177 + $0x70] sm:$0xff] %vm832, %v1337
      %1370 = vst.msk [vmem:[%s177 + $0x78] sm:$0xff] %vm832, %v1338
      %1371 = vst.msk [vmem:[%s177 + $0x80] sm:$0xff] %vm832, %v1339
      %1372 = vst.msk [vmem:[%s177 + $0x88] sm:$0xff] %vm832, %v1340
      %1373 = vst.msk [vmem:[%s177 + $0x90] sm:$0xff] %vm832, %v1341
      %1374 = vst.msk [vmem:[%s177 + $0x98] sm:$0xff] %vm832, %v1342
      %1375 = vst.msk [vmem:[%s177 + $0xa0] sm:$0xff] %vm832, %v1343
      %1376 = vst.msk [vmem:[%s177 + $0xa8] sm:$0xff] %vm832, %v1344
      %1377 = vst.msk [vmem:[%s177 + $0xb0] sm:$0xff] %vm832, %v1345
      %1378 = vst.msk [vmem:[%s177 + $0xb8] sm:$0xff] %vm832, %v1346
      %1379 = vst.msk [vmem:[%s177 + $0xc0] sm:$0xff] %vm832, %v1347
      %1380 = vst.msk [vmem:[%s177 + $0xc8] sm:$0xff] %vm832, %v1348
      %1381 = vst.msk [vmem:[%s177 + $0xd0] sm:$0xff] %vm832, %v1349
      %1382 = vst.msk [vmem:[%s177 + $0xd8] sm:$0xff] %vm832, %v1350
      %1383 = vst.msk [vmem:[%s177 + $0xe0] sm:$0xff] %vm832, %v1351
      %1384 = vst.msk [vmem:[%s177 + $0xe8] sm:$0xff] %vm832, %v1352
      %1385 = vst.msk [vmem:[%s177 + $0xf0] sm:$0xff] %vm832, %v1353
      %1386 = vst.msk [vmem:[%s177 + $0xf8] sm:$0xff] %vm832, %v1354
      %v1387 = vsel %vm832, %v1323, 0.0
      %v1388 = vsel %vm832, %v1324, 0.0
      %v1389 = vadd.f32 %v1387, %v1388
      %v1390 = vsel %vm832, %v1325, 0.0
      %v1391 = vadd.f32 %v1389, %v1390
      %v1392 = vsel %vm832, %v1326, 0.0
      %v1393 = vadd.f32 %v1391, %v1392
      %v1394 = vsel %vm832, %v1327, 0.0
      %v1395 = vadd.f32 %v1393, %v1394
      %v1396 = vsel %vm832, %v1328, 0.0
      %v1397 = vadd.f32 %v1395, %v1396
      %v1398 = vsel %vm832, %v1329, 0.0
      %v1399 = vadd.f32 %v1397, %v1398
      %v1400 = vsel %vm832, %v1330, 0.0
      %v1401 = vadd.f32 %v1399, %v1400
      %v1402 = vsel %vm832, %v1331, 0.0
      %v1403 = vadd.f32 %v1401, %v1402
      %v1404 = vsel %vm832, %v1332, 0.0
      %v1405 = vadd.f32 %v1403, %v1404
      %v1406 = vsel %vm832, %v1333, 0.0
      %v1407 = vadd.f32 %v1405, %v1406
      %v1408 = vsel %vm832, %v1334, 0.0
      %v1409 = vadd.f32 %v1407, %v1408
      %v1410 = vsel %vm832, %v1335, 0.0
      %v1411 = vadd.f32 %v1409, %v1410
      %v1412 = vsel %vm832, %v1336, 0.0
      %v1413 = vadd.f32 %v1411, %v1412
      %v1414 = vsel %vm832, %v1337, 0.0
      %v1415 = vadd.f32 %v1413, %v1414
      %v1416 = vsel %vm832, %v1338, 0.0
      %v1417 = vadd.f32 %v1415, %v1416
      %v1418 = vsel %vm832, %v1339, 0.0
      %v1419 = vadd.f32 %v1417, %v1418
      %v1420 = vsel %vm832, %v1340, 0.0
      %v1421 = vadd.f32 %v1419, %v1420
      %v1422 = vsel %vm832, %v1341, 0.0
      %v1423 = vadd.f32 %v1421, %v1422
      %v1424 = vsel %vm832, %v1342, 0.0
      %v1425 = vadd.f32 %v1423, %v1424
      %v1426 = vsel %vm832, %v1343, 0.0
      %v1427 = vadd.f32 %v1425, %v1426
      %v1428 = vsel %vm832, %v1344, 0.0
      %v1429 = vadd.f32 %v1427, %v1428
      %v1430 = vsel %vm832, %v1345, 0.0
      %v1431 = vadd.f32 %v1429, %v1430
      %v1432 = vsel %vm832, %v1346, 0.0
      %v1433 = vadd.f32 %v1431, %v1432
      %v1434 = vsel %vm832, %v1347, 0.0
      %v1435 = vadd.f32 %v1433, %v1434
      %v1436 = vsel %vm832, %v1348, 0.0
      %v1437 = vadd.f32 %v1435, %v1436
      %v1438 = vsel %vm832, %v1349, 0.0
      %v1439 = vadd.f32 %v1437, %v1438
      %v1440 = vsel %vm832, %v1350, 0.0
      %v1441 = vadd.f32 %v1439, %v1440
      %v1442 = vsel %vm832, %v1351, 0.0
      %v1443 = vadd.f32 %v1441, %v1442
      %v1444 = vsel %vm832, %v1352, 0.0
      %v1445 = vadd.f32 %v1443, %v1444
      %v1446 = vsel %vm832, %v1353, 0.0
      %v1447 = vadd.f32 %v1445, %v1446
      %v1448 = vsel %vm832, %v1354, 0.0
      %v1449 = vadd.f32 %v1447, %v1448
      %v1450 = vrot.slane %v1449, 4
      %v1451 = vadd.f32 %v1449, %v1450
      %v1452 = vrot.slane %v1451, 2
      %v1453 = vadd.f32 %v1451, %v1452
      %v1454 = vrot.slane %v1453, 1
      %v1455 = vadd.f32 %v1453, %v1454
      %v1456 = vmul.f32 %v1455, 0.00390625
      %v1457 = vsub.f32 %v1323, %v1456
      %v1458 = vsub.f32 %v1324, %v1456
      %v1459 = vsub.f32 %v1325, %v1456
      %v1460 = vsub.f32 %v1326, %v1456
      %v1461 = vsub.f32 %v1327, %v1456
      %v1462 = vsub.f32 %v1328, %v1456
      %v1463 = vsub.f32 %v1329, %v1456
      %v1464 = vsub.f32 %v1330, %v1456
      %v1465 = vsub.f32 %v1331, %v1456
      %v1466 = vsub.f32 %v1332, %v1456
      %v1467 = vsub.f32 %v1333, %v1456
      %v1468 = vsub.f32 %v1334, %v1456
      %v1469 = vsub.f32 %v1335, %v1456
      %v1470 = vsub.f32 %v1336, %v1456
      %v1471 = vsub.f32 %v1337, %v1456
      %v1472 = vsub.f32 %v1338, %v1456
      %v1473 = vsub.f32 %v1339, %v1456
      %v1474 = vsub.f32 %v1340, %v1456
      %v1475 = vsub.f32 %v1341, %v1456
      %v1476 = vsub.f32 %v1342, %v1456
      %v1477 = vsub.f32 %v1343, %v1456
      %v1478 = vsub.f32 %v1344, %v1456
      %v1479 = vsub.f32 %v1345, %v1456
      %v1480 = vsub.f32 %v1346, %v1456
      %v1481 = vsub.f32 %v1347, %v1456
      %v1482 = vsub.f32 %v1348, %v1456
      %v1483 = vsub.f32 %v1349, %v1456
      %v1484 = vsub.f32 %v1350, %v1456
      %v1485 = vsub.f32 %v1351, %v1456
      %v1486 = vsub.f32 %v1352, %v1456
      %v1487 = vsub.f32 %v1353, %v1456
      %v1488 = vsub.f32 %v1354, %v1456
      %v1489 = vmul.f32 %v1457, %v1457
      %v1490 = vmul.f32 %v1458, %v1458
      %v1491 = vmul.f32 %v1459, %v1459
      %v1492 = vmul.f32 %v1460, %v1460
      %v1493 = vmul.f32 %v1461, %v1461
      %v1494 = vmul.f32 %v1462, %v1462
      %v1495 = vmul.f32 %v1463, %v1463
      %v1496 = vmul.f32 %v1464, %v1464
      %v1497 = vmul.f32 %v1465, %v1465
      %v1498 = vmul.f32 %v1466, %v1466
      %v1499 = vmul.f32 %v1467, %v1467
      %v1500 = vmul.f32 %v1468, %v1468
      %v1501 = vmul.f32 %v1469, %v1469
      %v1502 = vmul.f32 %v1470, %v1470
      %v1503 = vmul.f32 %v1471, %v1471
      %v1504 = vmul.f32 %v1472, %v1472
      %v1505 = vmul.f32 %v1473, %v1473
      %v1506 = vmul.f32 %v1474, %v1474
      %v1507 = vmul.f32 %v1475, %v1475
      %v1508 = vmul.f32 %v1476, %v1476
      %v1509 = vmul.f32 %v1477, %v1477
      %v1510 = vmul.f32 %v1478, %v1478
      %v1511 = vmul.f32 %v1479, %v1479
      %v1512 = vmul.f32 %v1480, %v1480
      %v1513 = vmul.f32 %v1481, %v1481
      %v1514 = vmul.f32 %v1482, %v1482
      %v1515 = vmul.f32 %v1483, %v1483
      %v1516 = vmul.f32 %v1484, %v1484
      %v1517 = vmul.f32 %v1485, %v1485
      %v1518 = vmul.f32 %v1486, %v1486
      %v1519 = vmul.f32 %v1487, %v1487
      %v1520 = vmul.f32 %v1488, %v1488
      %v1521 = vsel %vm832, %v1489, 0.0
      %v1522 = vsel %vm832, %v1490, 0.0
      %v1523 = vadd.f32 %v1521, %v1522
      %v1524 = vsel %vm832, %v1491, 0.0
      %v1525 = vadd.f32 %v1523, %v1524
      %v1526 = vsel %vm832, %v1492, 0.0
      %v1527 = vadd.f32 %v1525, %v1526
      %v1528 = vsel %vm832, %v1493, 0.0
      %v1529 = vadd.f32 %v1527, %v1528
      %v1530 = vsel %vm832, %v1494, 0.0
      %v1531 = vadd.f32 %v1529, %v1530
      %v1532 = vsel %vm832, %v1495, 0.0
      %v1533 = vadd.f32 %v1531, %v1532
      %v1534 = vsel %vm832, %v1496, 0.0
      %v1535 = vadd.f32 %v1533, %v1534
      %v1536 = vsel %vm832, %v1497, 0.0
      %v1537 = vadd.f32 %v1535, %v1536
      %v1538 = vsel %vm832, %v1498, 0.0
      %v1539 = vadd.f32 %v1537, %v1538
      %v1540 = vsel %vm832, %v1499, 0.0
      %v1541 = vadd.f32 %v1539, %v1540
      %v1542 = vsel %vm832, %v1500, 0.0
      %v1543 = vadd.f32 %v1541, %v1542
      %v1544 = vsel %vm832, %v1501, 0.0
      %v1545 = vadd.f32 %v1543, %v1544
      %v1546 = vsel %vm832, %v1502, 0.0
      %v1547 = vadd.f32 %v1545, %v1546
      %v1548 = vsel %vm832, %v1503, 0.0
      %v1549 = vadd.f32 %v1547, %v1548
      %v1550 = vsel %vm832, %v1504, 0.0
      %v1551 = vadd.f32 %v1549, %v1550
      %v1552 = vsel %vm832, %v1505, 0.0
      %v1553 = vadd.f32 %v1551, %v1552
      %v1554 = vsel %vm832, %v1506, 0.0
      %v1555 = vadd.f32 %v1553, %v1554
      %v1556 = vsel %vm832, %v1507, 0.0
      %v1557 = vadd.f32 %v1555, %v1556
      %v1558 = vsel %vm832, %v1508, 0.0
      %v1559 = vadd.f32 %v1557, %v1558
      %v1560 = vsel %vm832, %v1509, 0.0
      %v1561 = vadd.f32 %v1559, %v1560
      %v1562 = vsel %vm832, %v1510, 0.0
      %v1563 = vadd.f32 %v1561, %v1562
      %v1564 = vsel %vm832, %v1511, 0.0
      %v1565 = vadd.f32 %v1563, %v1564
      %v1566 = vsel %vm832, %v1512, 0.0
      %v1567 = vadd.f32 %v1565, %v1566
      %v1568 = vsel %vm832, %v1513, 0.0
      %v1569 = vadd.f32 %v1567, %v1568
      %v1570 = vsel %vm832, %v1514, 0.0
      %v1571 = vadd.f32 %v1569, %v1570
      %v1572 = vsel %vm832, %v1515, 0.0
      %v1573 = vadd.f32 %v1571, %v1572
      %v1574 = vsel %vm832, %v1516, 0.0
      %v1575 = vadd.f32 %v1573, %v1574
      %v1576 = vsel %vm832, %v1517, 0.0
      %v1577 = vadd.f32 %v1575, %v1576
      %v1578 = vsel %vm832, %v1518, 0.0
      %v1579 = vadd.f32 %v1577, %v1578
      %v1580 = vsel %vm832, %v1519, 0.0
      %v1581 = vadd.f32 %v1579, %v1580
      %v1582 = vsel %vm832, %v1520, 0.0
      %v1583 = vadd.f32 %v1581, %v1582
      %v1584 = vrot.slane %v1583, 4
      %v1585 = vadd.f32 %v1583, %v1584
      %v1586 = vrot.slane %v1585, 2
      %v1587 = vadd.f32 %v1585, %v1586
      %v1588 = vrot.slane %v1587, 1
      %v1589 = vadd.f32 %v1587, %v1588
      %v1590 = vsel %vm252, %v1455, %v1589
      %vm1591 = vcmask 58368
      %1592 = vst.msk [vmem:[%s181] sm:$0x3] %vm1591, %v1590
      %p1593 = scmp.lt.s32.totalorder %s15, 1
      %s1594 = scalar_select %p1593, %s15, 1
      %s1595 = smul.addr %s1594, 32
      %s1596 = smul.addr %s1595, 8
      %s1597 = scalar_lea.vmem %s2, %s1596
      %p1598 = scmp.lt.s32.totalorder %s15, 1
      %s1599 = scalar_select %p1598, %s15, 1
      %s1600 = smul.addr %s1599, 2
      %s1601 = scalar_lea.vmem %s3, %s1600
      // Predicated region
      $region29: #{double_conv_forward.3} parent=27 // pred_check
        %p1602 = pneg %p80
      $region30: #{double_conv_forward.3} parent=27 // pred_check_branch
        %1604 = sbr.rel (%p1602) target = $region32
      $region31: #{double_conv_forward.3} parent=27 // pred_region
        _
      $region32: #{double_conv_forward.3} parent=27 // pred_fallthru
        _
      // Predicated region
      $region33: #{double_conv_forward.3} parent=27 // pred_check
        %p1605 = pneg %p106
      $region34: #{double_conv_forward.3} parent=27 // pred_check_branch
        %1607 = sbr.rel (%p1605) target = $region36
      $region35: #{double_conv_forward.3} parent=27 // pred_region
        _
      $region36: #{double_conv_forward.3} parent=27 // pred_fallthru
        _
    $region28: #{double_conv_forward.3} parent=5 // pred_fallthru
      _
    %p1608 = scmp.le.s32.totalorder 2, %s10
    // Predicated region
    $region37: #{double_conv_forward.3} parent=5 // pred_check
      %p1609 = pneg %p1608
    $region38: #{double_conv_forward.3} parent=5 // pred_check_branch
      %1611 = sbr.rel (%p1609) target = $region40
    $region39: #{double_conv_forward.3} parent=5 // pred_region
      %s1612 = ssub.s32 %s10, 2
      // Predicated region
      $region41: #{double_conv_forward.3} parent=39 // pred_check
        %p1613 = pneg %p86
      $region42: #{double_conv_forward.3} parent=39 // pred_check_branch
        %1615 = sbr.rel (%p1613) target = $region44
      $region43: #{double_conv_forward.3} parent=39 // pred_region
        %p1616 = scmp.lt.s32.totalorder %s16, 1
        %s1617 = scalar_select %p1616, %s16, 1
        %s1618 = smul.addr %s1617, 32
        %s1619 = smul.addr %s1618, 8
        %s1620 = scalar_lea.vmem %s2, %s1619
      $region44: #{double_conv_forward.3} parent=39 // pred_fallthru
        _
      // Predicated region
      $region45: #{double_conv_forward.3} parent=39 // pred_check
        %p1621 = pneg %p112
      $region46: #{double_conv_forward.3} parent=39 // pred_check_branch
        %1623 = sbr.rel (%p1621) target = $region48
      $region47: #{double_conv_forward.3} parent=39 // pred_region
        %p1624 = scmp.lt.s32.totalorder %s16, 1
        %s1625 = scalar_select %p1624, %s16, 1
        %s1626 = smul.addr %s1625, 2
        %s1627 = scalar_lea.vmem %s3, %s1626
      $region48: #{double_conv_forward.3} parent=39 // pred_fallthru
        _
    $region40: #{double_conv_forward.3} parent=5 // pred_fallthru
      _
  $region6: #{double_conv_forward.3} parent=0 // loop_footer
    %s14 = sadd.s32 1, %s10
  $region7: #{double_conv_forward.3} parent=0 // loop_footer_branch
    %9 = sbr.rel target = $region3
  $region8: #{double_conv_forward.3} parent=0 // loop_exit
    _

// kernel: double_conv_forward.4
$region0: #{double_conv_forward.4}
  #allocation0 [shape = 'u32[]', space=smem, size = 0x4, offset = 0x4, fixed_abs, tag = 'smem constant byte address 0x4 - core index']
  #allocation1 [shape = 'u32[72,128]{1,0:T(1,128)}', space=vmem, size = 0x9000, scoped, tag = 'internal scratch']
  %s0 = inlined_call_operand.vmem [shape: f32[2,256,8], index: 0, kind: input, shape index: {}]
  %s1 = inlined_call_operand.vmem [shape: f32[1,8], index: 1, kind: input, shape index: {}]
  %s2 = inlined_call_operand.vmem [shape: f32[1,8], index: 2, kind: input, shape index: {}]
  %s3 = inlined_call_operand.vmem [shape: f32[72,8], index: 3, kind: input, shape index: {}]
  %s4 = inlined_call_operand.vmem [shape: f32[2,256,8], index: 4, kind: output, shape index: {0}]
  %s5 = inlined_call_operand.vmem [shape: f32[2,2,8], index: 5, kind: output, shape index: {1}]
  %6 = xla_tuple %s4, %s5
  %s7 = sld [smem:[#allocation0]]
  $region57: #{double_conv_forward.4} parent=0
    _
  %s9 = ssub.s32 1, %s7
  %s10 = scalar_select 0, %s9, %s7
  loop: start=0, step=1, limit=4
  $region2: #{double_conv_forward.4} parent=0 // loop_pre_header
    _
  $region3: #{double_conv_forward.4} parent=0 // loop_header
    %s12 = sphi 0, %s16
    %p13 = scmp.ge.s32.totalorder %s12, 4
    %s22 = sphi 0, %s24
    %s25 = sphi 0, %s22
    %s26 = sphi 0, %s25
    %s42 = sphi 0, %s26
    %s46 = sphi 0, %s46
    %s48 = sphi 0, %s46
    %s49 = sphi 0, %s48
    %s63 = sphi 0, %s49
    %s67 = sphi 0, %s67
    %s69 = sphi 0, %s67
    %s70 = sphi 0, %s69
    %s84 = sphi 0, %s70
    %s88 = sphi 0, %s88
    %s90 = sphi 0, %s88
    %s91 = sphi 0, %s90
    %s105 = sphi 0, %s91
    %s111 = sphi 0, %s113
    %s114 = sphi 0, %s111
    %s115 = sphi 0, %s114
    %s131 = sphi 0, %s115
    %s137 = sphi 0, %s139
    %s140 = sphi 0, %s137
    %s141 = sphi 0, %s140
    %s157 = sphi 0, %s141
  $region4: #{double_conv_forward.4} parent=0 // loop_header_branch
    %15 = sbr.rel (%p13) target = $region8
  $region5: #{double_conv_forward.4} parent=0 // loop_body
    %s17 = ssub.s32 %s12, 1
    %s18 = ssub.s32 %s12, 2
    %s19 = sadd.s32 %s12, 1
    %s20 = ssub.s32 %s12, %s19
    %p21 = scmp.eq.s32.totalorder %s20, 0
    %s23 = sadd.s32 %s22, 1
    %s24 = scalar_select %p21, %s22, %s23
    %p27 = pneg %p21
    %p28 = scmp.eq.s32.totalorder %s12, 1
    %p29 = por %p27, %p28
    %p30 = scmp.ne.s32.totalorder %s22, %s25
    %p31 = scmp.eq.s32.totalorder %s12, 0
    %p32 = por %p30, %p31
    %p33 = scmp.ne.s32.totalorder %s22, %s25
    %p34 = scmp.eq.s32.totalorder %s17, 1
    %p35 = por %p33, %p34
    %p36 = scmp.ne.s32.totalorder %s25, %s26
    %p37 = scmp.eq.s32.totalorder %s17, 0
    %p38 = por %p36, %p37
    %p39 = scmp.ne.s32.totalorder %s25, %s26
    %p40 = scmp.eq.s32.totalorder %s18, 1
    %p41 = por %p39, %p40
    %p43 = scmp.ne.s32.totalorder %s26, %s42
    %p44 = scmp.eq.s32.totalorder %s18, 0
    %p45 = por %p43, %p44
    %s47 = sadd.s32 %s46, 1
    %p50 = scmp.eq.s32.totalorder %s12, 1
    %p51 = scmp.ne.s32.totalorder %s46, %s48
    %p52 = scmp.eq.s32.totalorder %s12, 0
    %p53 = por %p51, %p52
    %p54 = scmp.ne.s32.totalorder %s46, %s48
    %p55 = scmp.eq.s32.totalorder %s17, 1
    %p56 = por %p54, %p55
    %p57 = scmp.ne.s32.totalorder %s48, %s49
    %p58 = scmp.eq.s32.totalorder %s17, 0
    %p59 = por %p57, %p58
    %p60 = scmp.ne.s32.totalorder %s48, %s49
    %p61 = scmp.eq.s32.totalorder %s18, 1
    %p62 = por %p60, %p61
    %p64 = scmp.ne.s32.totalorder %s49, %s63
    %p65 = scmp.eq.s32.totalorder %s18, 0
    %p66 = por %p64, %p65
    %s68 = sadd.s32 %s67, 1
    %p71 = scmp.eq.s32.totalorder %s12, 1
    %p72 = scmp.ne.s32.totalorder %s67, %s69
    %p73 = scmp.eq.s32.totalorder %s12, 0
    %p74 = por %p72, %p73
    %p75 = scmp.ne.s32.totalorder %s67, %s69
    %p76 = scmp.eq.s32.totalorder %s17, 1
    %p77 = por %p75, %p76
    %p78 = scmp.ne.s32.totalorder %s69, %s70
    %p79 = scmp.eq.s32.totalorder %s17, 0
    %p80 = por %p78, %p79
    %p81 = scmp.ne.s32.totalorder %s69, %s70
    %p82 = scmp.eq.s32.totalorder %s18, 1
    %p83 = por %p81, %p82
    %p85 = scmp.ne.s32.totalorder %s70, %s84
    %p86 = scmp.eq.s32.totalorder %s18, 0
    %p87 = por %p85, %p86
    %s89 = sadd.s32 %s88, 1
    %p92 = scmp.eq.s32.totalorder %s12, 1
    %p93 = scmp.ne.s32.totalorder %s88, %s90
    %p94 = scmp.eq.s32.totalorder %s12, 0
    %p95 = por %p93, %p94
    %p96 = scmp.ne.s32.totalorder %s88, %s90
    %p97 = scmp.eq.s32.totalorder %s17, 1
    %p98 = por %p96, %p97
    %p99 = scmp.ne.s32.totalorder %s90, %s91
    %p100 = scmp.eq.s32.totalorder %s17, 0
    %p101 = por %p99, %p100
    %p102 = scmp.ne.s32.totalorder %s90, %s91
    %p103 = scmp.eq.s32.totalorder %s18, 1
    %p104 = por %p102, %p103
    %p106 = scmp.ne.s32.totalorder %s91, %s105
    %p107 = scmp.eq.s32.totalorder %s18, 0
    %p108 = por %p106, %p107
    %s109 = ssub.s32 %s12, %s19
    %p110 = scmp.eq.s32.totalorder %s109, 0
    %s112 = sadd.s32 %s111, 1
    %s113 = scalar_select %p110, %s111, %s112
    %p116 = pneg %p110
    %p117 = scmp.eq.s32.totalorder %s12, 1
    %p118 = por %p116, %p117
    %p119 = scmp.ne.s32.totalorder %s111, %s114
    %p120 = scmp.eq.s32.totalorder %s12, 0
    %p121 = por %p119, %p120
    %p122 = scmp.ne.s32.totalorder %s111, %s114
    %p123 = scmp.eq.s32.totalorder %s17, 1
    %p124 = por %p122, %p123
    %p125 = scmp.ne.s32.totalorder %s114, %s115
    %p126 = scmp.eq.s32.totalorder %s17, 0
    %p127 = por %p125, %p126
    %p128 = scmp.ne.s32.totalorder %s114, %s115
    %p129 = scmp.eq.s32.totalorder %s18, 1
    %p130 = por %p128, %p129
    %p132 = scmp.ne.s32.totalorder %s115, %s131
    %p133 = scmp.eq.s32.totalorder %s18, 0
    %p134 = por %p132, %p133
    %s135 = ssub.s32 %s12, %s19
    %p136 = scmp.eq.s32.totalorder %s135, 0
    %s138 = sadd.s32 %s137, 1
    %s139 = scalar_select %p136, %s137, %s138
    %p142 = pneg %p136
    %p143 = scmp.eq.s32.totalorder %s12, 1
    %p144 = por %p142, %p143
    %p145 = scmp.ne.s32.totalorder %s137, %s140
    %p146 = scmp.eq.s32.totalorder %s12, 0
    %p147 = por %p145, %p146
    %p148 = scmp.ne.s32.totalorder %s137, %s140
    %p149 = scmp.eq.s32.totalorder %s17, 1
    %p150 = por %p148, %p149
    %p151 = scmp.ne.s32.totalorder %s140, %s141
    %p152 = scmp.eq.s32.totalorder %s17, 0
    %p153 = por %p151, %p152
    %p154 = scmp.ne.s32.totalorder %s140, %s141
    %p155 = scmp.eq.s32.totalorder %s18, 1
    %p156 = por %p154, %p155
    %p158 = scmp.ne.s32.totalorder %s141, %s157
    %p159 = scmp.eq.s32.totalorder %s18, 0
    %p160 = por %p158, %p159
    %p161 = scmp.le.s32.totalorder 1, %s12
    %p162 = scmp.lt.s32.totalorder %s12, 3
    %p163 = pnand %p161, %p162
    %p164 = pneg %p163
    // Predicated region
    $region9: #{double_conv_forward.4} parent=5 // pred_check
      _
    $region10: #{double_conv_forward.4} parent=5 // pred_check_branch
      %166 = sbr.rel (%p163) target = $region12
    $region11: #{double_conv_forward.4} parent=5 // pred_region
      %s167 = ssub.s32 %s12, 1
      // Predicated region
      $region13: #{double_conv_forward.4} parent=11 // pred_check
        %p168 = pneg %p59
      $region14: #{double_conv_forward.4} parent=11 // pred_check_branch
        %170 = sbr.rel (%p168) target = $region16
      $region15: #{double_conv_forward.4} parent=11 // pred_region
        _
      $region16: #{double_conv_forward.4} parent=11 // pred_fallthru
        _
      // Predicated region
      $region17: #{double_conv_forward.4} parent=11 // pred_check
        %p171 = pneg %p80
      $region18: #{double_conv_forward.4} parent=11 // pred_check_branch
        %173 = sbr.rel (%p171) target = $region20
      $region19: #{double_conv_forward.4} parent=11 // pred_region
        _
      $region20: #{double_conv_forward.4} parent=11 // pred_fallthru
        _
      // Predicated region
      $region21: #{double_conv_forward.4} parent=11 // pred_check
        %p174 = pneg %p101
      $region22: #{double_conv_forward.4} parent=11 // pred_check_branch
        %176 = sbr.rel (%p174) target = $region24
      $region23: #{double_conv_forward.4} parent=11 // pred_region
        _
      $region24: #{double_conv_forward.4} parent=11 // pred_fallthru
        _
    $region12: #{double_conv_forward.4} parent=5 // pred_fallthru
      _
    %p177 = scmp.lt.s32.totalorder %s12, 2
    // Predicated region
    $region25: #{double_conv_forward.4} parent=5 // pred_check
      %p178 = pneg %p177
    $region26: #{double_conv_forward.4} parent=5 // pred_check_branch
      %180 = sbr.rel (%p178) target = $region28
    $region27: #{double_conv_forward.4} parent=5 // pred_region
      // Predicated region
      $region29: #{double_conv_forward.4} parent=27 // pred_check
        %p181 = pneg %p32
      $region30: #{double_conv_forward.4} parent=27 // pred_check_branch
        %183 = sbr.rel (%p181) target = $region32
      $region31: #{double_conv_forward.4} parent=27 // pred_region
        %p184 = scmp.lt.s32.totalorder %s12, 1
        %s185 = scalar_select %p184, %s12, 1
        %s186 = smul.addr %s185, 32
        %s187 = smul.addr %s186, 8
        %s188 = scalar_lea.vmem %s0, %s187
      $region32: #{double_conv_forward.4} parent=27 // pred_fallthru
        _
    $region28: #{double_conv_forward.4} parent=5 // pred_fallthru
      _
    %p189 = scmp.le.s32.totalorder 1, %s12
    %p190 = scmp.lt.s32.totalorder %s12, 3
    %p191 = pnand %p189, %p190
    %p192 = pneg %p191
    // Predicated region
    $region33: #{double_conv_forward.4} parent=5 // pred_check
      _
    $region34: #{double_conv_forward.4} parent=5 // pred_check_branch
      %194 = sbr.rel (%p191) target = $region36
    $region35: #{double_conv_forward.4} parent=5 // pred_region
      %s195 = ssub.s32 %s12, 1
      %p196 = scmp.lt.s32.totalorder %s17, 1
      %s197 = scalar_select %p196, %s17, 1
      %s198 = smul.addr %s197, 32
      %s199 = smul.addr %s198, 8
      %s200 = scalar_lea.vmem %s0, %s199
      %p201 = pneg %p38
      %p202 = pneg %p35
      %p203 = pneg %p59
      %p204 = pneg %p56
      %p205 = pneg %p80
      %p206 = pneg %p77
      %p207 = pneg %p101
      %p208 = pneg %p98
      %p209 = pneg %p127
      %p210 = pneg %p124
      %p211 = scmp.lt.s32.totalorder %s17, 1
      %s212 = scalar_select %p211, %s17, 1
      %s213 = smul.addr %s212, 32
      %s214 = smul.addr %s213, 8
      %s215 = scalar_lea.vmem %s4, %s214
      %p216 = pneg %p153
      %p217 = pneg %p150
      %p218 = scmp.lt.s32.totalorder %s17, 1
      %s219 = scalar_select %p218, %s17, 1
      %s220 = smul.addr %s219, 2
      %s221 = scalar_lea.vmem %s5, %s220
      %p222 = scmp.lt.s32.totalorder %s17, 1
      %s223 = scalar_select %p222, %s17, 1
      %s224 = smul.addr %s223, 32
      %s225 = smul.addr %s224, 8
      %s226 = scalar_lea.vmem %s0, %s225
      %p227 = scmp.lt.s32.totalorder %s17, 1
      %s228 = scalar_select %p227, %s17, 1
      %s229 = smul.addr %s228, 32
      %s230 = smul.addr %s229, 8
      %s231 = scalar_lea.vmem %s4, %s230
      %p232 = scmp.lt.s32.totalorder %s17, 1
      %s233 = scalar_select %p232, %s17, 1
      %s234 = smul.addr %s233, 2
      %s235 = scalar_lea.vmem %s5, %s234
      %v236 = vld [vmem:[%s226] sm:$0xff]
      %v237 = vld [vmem:[%s226 + $0x8] sm:$0xff]
      %v238 = vld [vmem:[%s226 + $0x10] sm:$0xff]
      %v239 = vld [vmem:[%s226 + $0x18] sm:$0xff]
      %v240 = vld [vmem:[%s226 + $0x20] sm:$0xff]
      %v241 = vld [vmem:[%s226 + $0x28] sm:$0xff]
      %v242 = vld [vmem:[%s226 + $0x30] sm:$0xff]
      %v243 = vld [vmem:[%s226 + $0x38] sm:$0xff]
      %v244 = vld [vmem:[%s226 + $0x40] sm:$0xff]
      %v245 = vld [vmem:[%s226 + $0x48] sm:$0xff]
      %v246 = vld [vmem:[%s226 + $0x50] sm:$0xff]
      %v247 = vld [vmem:[%s226 + $0x58] sm:$0xff]
      %v248 = vld [vmem:[%s226 + $0x60] sm:$0xff]
      %v249 = vld [vmem:[%s226 + $0x68] sm:$0xff]
      %v250 = vld [vmem:[%s226 + $0x70] sm:$0xff]
      %v251 = vld [vmem:[%s226 + $0x78] sm:$0xff]
      %v252 = vld [vmem:[%s226 + $0x80] sm:$0xff]
      %v253 = vld [vmem:[%s226 + $0x88] sm:$0xff]
      %v254 = vld [vmem:[%s226 + $0x90] sm:$0xff]
      %v255 = vld [vmem:[%s226 + $0x98] sm:$0xff]
      %v256 = vld [vmem:[%s226 + $0xa0] sm:$0xff]
      %v257 = vld [vmem:[%s226 + $0xa8] sm:$0xff]
      %v258 = vld [vmem:[%s226 + $0xb0] sm:$0xff]
      %v259 = vld [vmem:[%s226 + $0xb8] sm:$0xff]
      %v260 = vld [vmem:[%s226 + $0xc0] sm:$0xff]
      %v261 = vld [vmem:[%s226 + $0xc8] sm:$0xff]
      %v262 = vld [vmem:[%s226 + $0xd0] sm:$0xff]
      %v263 = vld [vmem:[%s226 + $0xd8] sm:$0xff]
      %v264 = vld [vmem:[%s226 + $0xe0] sm:$0xff]
      %v265 = vld [vmem:[%s226 + $0xe8] sm:$0xff]
      %v266 = vld [vmem:[%s226 + $0xf0] sm:$0xff]
      %v267 = vld [vmem:[%s226 + $0xf8] sm:$0xff]
      %v268 = vld [vmem:[%s1] sm:$0x1]
      %v270 = vperm.slane %v268, 0
      %v272 = vmul.f32 %v236, %v270
      %v273 = vmul.f32 %v237, %v270
      %v274 = vmul.f32 %v238, %v270
      %v275 = vmul.f32 %v239, %v270
      %v276 = vmul.f32 %v240, %v270
      %v277 = vmul.f32 %v241, %v270
      %v278 = vmul.f32 %v242, %v270
      %v279 = vmul.f32 %v243, %v270
      %v280 = vmul.f32 %v244, %v270
      %v281 = vmul.f32 %v245, %v270
      %v282 = vmul.f32 %v246, %v270
      %v283 = vmul.f32 %v247, %v270
      %v284 = vmul.f32 %v248, %v270
      %v285 = vmul.f32 %v249, %v270
      %v286 = vmul.f32 %v250, %v270
      %v287 = vmul.f32 %v251, %v270
      %v288 = vmul.f32 %v252, %v270
      %v289 = vmul.f32 %v253, %v270
      %v290 = vmul.f32 %v254, %v270
      %v291 = vmul.f32 %v255, %v270
      %v292 = vmul.f32 %v256, %v270
      %v293 = vmul.f32 %v257, %v270
      %v294 = vmul.f32 %v258, %v270
      %v295 = vmul.f32 %v259, %v270
      %v296 = vmul.f32 %v260, %v270
      %v297 = vmul.f32 %v261, %v270
      %v298 = vmul.f32 %v262, %v270
      %v299 = vmul.f32 %v263, %v270
      %v300 = vmul.f32 %v264, %v270
      %v301 = vmul.f32 %v265, %v270
      %v302 = vmul.f32 %v266, %v270
      %v303 = vmul.f32 %v267, %v270
      %v304 = vld [vmem:[%s2] sm:$0x1]
      %v306 = vperm.slane %v304, 0
      %v308 = vadd.f32 %v272, %v306
      %v309 = vadd.f32 %v273, %v306
      %v310 = vadd.f32 %v274, %v306
      %v311 = vadd.f32 %v275, %v306
      %v312 = vadd.f32 %v276, %v306
      %v313 = vadd.f32 %v277, %v306
      %v314 = vadd.f32 %v278, %v306
      %v315 = vadd.f32 %v279, %v306
      %v316 = vadd.f32 %v280, %v306
      %v317 = vadd.f32 %v281, %v306
      %v318 = vadd.f32 %v282, %v306
      %v319 = vadd.f32 %v283, %v306
      %v320 = vadd.f32 %v284, %v306
      %v321 = vadd.f32 %v285, %v306
      %v322 = vadd.f32 %v286, %v306
      %v323 = vadd.f32 %v287, %v306
      %v324 = vadd.f32 %v288, %v306
      %v325 = vadd.f32 %v289, %v306
      %v326 = vadd.f32 %v290, %v306
      %v327 = vadd.f32 %v291, %v306
      %v328 = vadd.f32 %v292, %v306
      %v329 = vadd.f32 %v293, %v306
      %v330 = vadd.f32 %v294, %v306
      %v331 = vadd.f32 %v295, %v306
      %v332 = vadd.f32 %v296, %v306
      %v333 = vadd.f32 %v297, %v306
      %v334 = vadd.f32 %v298, %v306
      %v335 = vadd.f32 %v299, %v306
      %v336 = vadd.f32 %v300, %v306
      %v337 = vadd.f32 %v301, %v306
      %v338 = vadd.f32 %v302, %v306
      %v339 = vadd.f32 %v303, %v306
      %v340 = vmax.f32 %v308, 0.0
      %v341 = vmax.f32 %v309, 0.0
      %v342 = vmax.f32 %v310, 0.0
      %v343 = vmax.f32 %v311, 0.0
      %v344 = vmax.f32 %v312, 0.0
      %v345 = vmax.f32 %v313, 0.0
      %v346 = vmax.f32 %v314, 0.0
      %v347 = vmax.f32 %v315, 0.0
      %v348 = vmax.f32 %v316, 0.0
      %v349 = vmax.f32 %v317, 0.0
      %v350 = vmax.f32 %v318, 0.0
      %v351 = vmax.f32 %v319, 0.0
      %v352 = vmax.f32 %v320, 0.0
      %v353 = vmax.f32 %v321, 0.0
      %v354 = vmax.f32 %v322, 0.0
      %v355 = vmax.f32 %v323, 0.0
      %v356 = vmax.f32 %v324, 0.0
      %v357 = vmax.f32 %v325, 0.0
      %v358 = vmax.f32 %v326, 0.0
      %v359 = vmax.f32 %v327, 0.0
      %v360 = vmax.f32 %v328, 0.0
      %v361 = vmax.f32 %v329, 0.0
      %v362 = vmax.f32 %v330, 0.0
      %v363 = vmax.f32 %v331, 0.0
      %v364 = vmax.f32 %v332, 0.0
      %v365 = vmax.f32 %v333, 0.0
      %v366 = vmax.f32 %v334, 0.0
      %v367 = vmax.f32 %v335, 0.0
      %v368 = vmax.f32 %v336, 0.0
      %v369 = vmax.f32 %v337, 0.0
      %v370 = vmax.f32 %v338, 0.0
      %v371 = vmax.f32 %v339, 0.0
      %v372 = vld [vmem:[%s3] sm:$0xff]
      %v373 = vld [vmem:[%s3 + $0x8] sm:$0xff]
      %v374 = vld [vmem:[%s3 + $0x10] sm:$0xff]
      %v375 = vld [vmem:[%s3 + $0x18] sm:$0xff]
      %v376 = vld [vmem:[%s3 + $0x20] sm:$0xff]
      %v377 = vld [vmem:[%s3 + $0x28] sm:$0xff]
      %v378 = vld [vmem:[%s3 + $0x30] sm:$0xff]
      %v379 = vld [vmem:[%s3 + $0x38] sm:$0xff]
      %v380 = vld [vmem:[%s3 + $0x40] sm:$0xff]
      %vm414 = vcmask 1040384
      %v415 = vrot.slane 0.0, 7
      %v416 = vsel %vm414, %v415, %v415
      %v417 = vrot.slane %v340, 7
      %v418 = vrot.slane %v341, 7
      %v419 = vsel %vm414, %v417, %v418
      %v420 = vrot.slane %v342, 7
      %v421 = vrot.slane %v343, 7
      %v422 = vsel %vm414, %v420, %v421
      %v423 = vrot.slane %v344, 7
      %v424 = vrot.slane %v345, 7
      %v425 = vsel %vm414, %v423, %v424
      %v426 = vrot.slane %v346, 7
      %v427 = vrot.slane %v347, 7
      %v428 = vsel %vm414, %v426, %v427
      %v429 = vrot.slane %v348, 7
      %v430 = vrot.slane %v349, 7
      %v431 = vsel %vm414, %v429, %v430
      %v432 = vrot.slane %v350, 7
      %v433 = vrot.slane %v351, 7
      %v434 = vsel %vm414, %v432, %v433
      %v435 = vrot.slane %v352, 7
      %v436 = vrot.slane %v353, 7
      %v437 = vsel %vm414, %v435, %v436
      %v438 = vrot.slane %v354, 7
      %v439 = vrot.slane %v355, 7
      %v440 = vsel %vm414, %v438, %v439
      %v441 = vrot.slane %v356, 7
      %v442 = vrot.slane %v357, 7
      %v443 = vsel %vm414, %v441, %v442
      %v444 = vrot.slane %v358, 7
      %v445 = vrot.slane %v359, 7
      %v446 = vsel %vm414, %v444, %v445
      %v447 = vrot.slane %v360, 7
      %v448 = vrot.slane %v361, 7
      %v449 = vsel %vm414, %v447, %v448
      %v450 = vrot.slane %v362, 7
      %v451 = vrot.slane %v363, 7
      %v452 = vsel %vm414, %v450, %v451
      %v453 = vrot.slane %v364, 7
      %v454 = vrot.slane %v365, 7
      %v455 = vsel %vm414, %v453, %v454
      %v456 = vrot.slane %v366, 7
      %v457 = vrot.slane %v367, 7
      %v458 = vsel %vm414, %v456, %v457
      %v459 = vrot.slane %v368, 7
      %v460 = vrot.slane %v369, 7
      %v461 = vsel %vm414, %v459, %v460
      %v462 = vrot.slane %v370, 7
      %v463 = vrot.slane %v371, 7
      %v464 = vsel %vm414, %v462, %v463
      %v515 = vsel %vm414, 0.0, %v415
      %v516 = vsel %vm414, 0.0, %v417
      %v517 = vsel %vm414, 0.0, %v420
      %v518 = vsel %vm414, 0.0, %v423
      %v519 = vsel %vm414, 0.0, %v426
      %v520 = vsel %vm414, 0.0, %v429
      %v521 = vsel %vm414, 0.0, %v432
      %v522 = vsel %vm414, 0.0, %v435
      %v523 = vsel %vm414, 0.0, %v438
      %v524 = vsel %vm414, 0.0, %v441
      %v525 = vsel %vm414, 0.0, %v444
      %v526 = vsel %vm414, 0.0, %v447
      %v527 = vsel %vm414, 0.0, %v450
      %v528 = vsel %vm414, 0.0, %v453
      %v529 = vsel %vm414, 0.0, %v456
      %v530 = vsel %vm414, 0.0, %v459
      %v531 = vsel %vm414, 0.0, %v462
      %v532 = vsel %vm414, %v415, 0.0
      %v533 = vsel %vm414, %v418, 0.0
      %v534 = vsel %vm414, %v421, 0.0
      %v535 = vsel %vm414, %v424, 0.0
      %v536 = vsel %vm414, %v427, 0.0
      %v537 = vsel %vm414, %v430, 0.0
      %v538 = vsel %vm414, %v433, 0.0
      %v539 = vsel %vm414, %v436, 0.0
      %v540 = vsel %vm414, %v439, 0.0
      %v541 = vsel %vm414, %v442, 0.0
      %v542 = vsel %vm414, %v445, 0.0
      %v543 = vsel %vm414, %v448, 0.0
      %v544 = vsel %vm414, %v451, 0.0
      %v545 = vsel %vm414, %v454, 0.0
      %v546 = vsel %vm414, %v457, 0.0
      %v547 = vsel %vm414, %v460, 0.0
      %v548 = vsel %vm414, %v463, 0.0
      %vm583 = vcmask 1046528
      %v584 = vrot.slane %v515, 1
      %v585 = vrot.slane %v416, 1
      %v586 = vsel %vm583, %v584, %v585
      %v587 = vrot.slane %v532, 1
      %v588 = vsel %vm583, %v585, %v587
      %v589 = vrot.slane %v516, 1
      %v590 = vrot.slane %v419, 1
      %v591 = vsel %vm583, %v589, %v590
      %v592 = vrot.slane %v533, 1
      %v593 = vsel %vm583, %v590, %v592
      %v594 = vrot.slane %v517, 1
      %v595 = vrot.slane %v422, 1
      %v596 = vsel %vm583, %v594, %v595
      %v597 = vrot.slane %v534, 1
      %v598 = vsel %vm583, %v595, %v597
      %v599 = vrot.slane %v518, 1
      %v600 = vrot.slane %v425, 1
      %v601 = vsel %vm583, %v599, %v600
      %v602 = vrot.slane %v535, 1
      %v603 = vsel %vm583, %v600, %v602
      %v604 = vrot.slane %v519, 1
      %v605 = vrot.slane %v428, 1
      %v606 = vsel %vm583, %v604, %v605
      %v607 = vrot.slane %v536, 1
      %v608 = vsel %vm583, %v605, %v607
      %v609 = vrot.slane %v520, 1
      %v610 = vrot.slane %v431, 1
      %v611 = vsel %vm583, %v609, %v610
      %v612 = vrot.slane %v537, 1
      %v613 = vsel %vm583, %v610, %v612
      %v614 = vrot.slane %v521, 1
      %v615 = vrot.slane %v434, 1
      %v616 = vsel %vm583, %v614, %v615
      %v617 = vrot.slane %v538, 1
      %v618 = vsel %vm583, %v615, %v617
      %v619 = vrot.slane %v522, 1
      %v620 = vrot.slane %v437, 1
      %v621 = vsel %vm583, %v619, %v620
      %v622 = vrot.slane %v539, 1
      %v623 = vsel %vm583, %v620, %v622
      %v624 = vrot.slane %v523, 1
      %v625 = vrot.slane %v440, 1
      %v626 = vsel %vm583, %v624, %v625
      %v627 = vrot.slane %v540, 1
      %v628 = vsel %vm583, %v625, %v627
      %v629 = vrot.slane %v524, 1
      %v630 = vrot.slane %v443, 1
      %v631 = vsel %vm583, %v629, %v630
      %v632 = vrot.slane %v541, 1
      %v633 = vsel %vm583, %v630, %v632
      %v634 = vrot.slane %v525, 1
      %v635 = vrot.slane %v446, 1
      %v636 = vsel %vm583, %v634, %v635
      %v637 = vrot.slane %v542, 1
      %v638 = vsel %vm583, %v635, %v637
      %v639 = vrot.slane %v526, 1
      %v640 = vrot.slane %v449, 1
      %v641 = vsel %vm583, %v639, %v640
      %v642 = vrot.slane %v543, 1
      %v643 = vsel %vm583, %v640, %v642
      %v644 = vrot.slane %v527, 1
      %v645 = vrot.slane %v452, 1
      %v646 = vsel %vm583, %v644, %v645
      %v647 = vrot.slane %v544, 1
      %v648 = vsel %vm583, %v645, %v647
      %v649 = vrot.slane %v528, 1
      %v650 = vrot.slane %v455, 1
      %v651 = vsel %vm583, %v649, %v650
      %v652 = vrot.slane %v545, 1
      %v653 = vsel %vm583, %v650, %v652
      %v654 = vrot.slane %v529, 1
      %v655 = vrot.slane %v458, 1
      %v656 = vsel %vm583, %v654, %v655
      %v657 = vrot.slane %v546, 1
      %v658 = vsel %vm583, %v655, %v657
      %v659 = vrot.slane %v530, 1
      %v660 = vrot.slane %v461, 1
      %v661 = vsel %vm583, %v659, %v660
      %v662 = vrot.slane %v547, 1
      %v663 = vsel %vm583, %v660, %v662
      %v664 = vrot.slane %v531, 1
      %v665 = vrot.slane %v464, 1
      %v666 = vsel %vm583, %v664, %v665
      %v667 = vrot.slane %v548, 1
      %v668 = vsel %vm583, %v665, %v667
      %669 = vrot.lane.b32.xlu0 %v586, 8
      %v670 = vpop.permute.xlu0 %669
      %671 = vrot.lane.b32.xlu0 %v588, 8
      %v672 = vpop.permute.xlu0 %671
      %673 = vrot.lane.b32.xlu0 %v591, 8
      %v674 = vpop.permute.xlu0 %673
      %675 = vrot.lane.b32.xlu0 %v593, 8
      %v676 = vpop.permute.xlu0 %675
      %677 = vrot.lane.b32.xlu0 %v596, 8
      %v678 = vpop.permute.xlu0 %677
      %679 = vrot.lane.b32.xlu0 %v598, 8
      %v680 = vpop.permute.xlu0 %679
      %681 = vrot.lane.b32.xlu0 %v601, 8
      %v682 = vpop.permute.xlu0 %681
      %683 = vrot.lane.b32.xlu0 %v603, 8
      %v684 = vpop.permute.xlu0 %683
      %685 = vrot.lane.b32.xlu0 %v606, 8
      %v686 = vpop.permute.xlu0 %685
      %687 = vrot.lane.b32.xlu0 %v608, 8
      %v688 = vpop.permute.xlu0 %687
      %689 = vrot.lane.b32.xlu0 %v611, 8
      %v690 = vpop.permute.xlu0 %689
      %691 = vrot.lane.b32.xlu0 %v613, 8
      %v692 = vpop.permute.xlu0 %691
      %693 = vrot.lane.b32.xlu0 %v616, 8
      %v694 = vpop.permute.xlu0 %693
      %695 = vrot.lane.b32.xlu0 %v618, 8
      %v696 = vpop.permute.xlu0 %695
      %697 = vrot.lane.b32.xlu0 %v621, 8
      %v698 = vpop.permute.xlu0 %697
      %699 = vrot.lane.b32.xlu0 %v623, 8
      %v700 = vpop.permute.xlu0 %699
      %701 = vrot.lane.b32.xlu0 %v626, 8
      %v702 = vpop.permute.xlu0 %701
      %703 = vrot.lane.b32.xlu0 %v628, 8
      %v704 = vpop.permute.xlu0 %703
      %705 = vrot.lane.b32.xlu0 %v631, 8
      %v706 = vpop.permute.xlu0 %705
      %707 = vrot.lane.b32.xlu0 %v633, 8
      %v708 = vpop.permute.xlu0 %707
      %709 = vrot.lane.b32.xlu0 %v636, 8
      %v710 = vpop.permute.xlu0 %709
      %711 = vrot.lane.b32.xlu0 %v638, 8
      %v712 = vpop.permute.xlu0 %711
      %713 = vrot.lane.b32.xlu0 %v641, 8
      %v714 = vpop.permute.xlu0 %713
      %715 = vrot.lane.b32.xlu0 %v643, 8
      %v716 = vpop.permute.xlu0 %715
      %717 = vrot.lane.b32.xlu0 %v646, 8
      %v718 = vpop.permute.xlu0 %717
      %719 = vrot.lane.b32.xlu0 %v648, 8
      %v720 = vpop.permute.xlu0 %719
      %721 = vrot.lane.b32.xlu0 %v651, 8
      %v722 = vpop.permute.xlu0 %721
      %723 = vrot.lane.b32.xlu0 %v653, 8
      %v724 = vpop.permute.xlu0 %723
      %725 = vrot.lane.b32.xlu0 %v656, 8
      %v726 = vpop.permute.xlu0 %725
      %727 = vrot.lane.b32.xlu0 %v658, 8
      %v728 = vpop.permute.xlu0 %727
      %729 = vrot.lane.b32.xlu0 %v661, 8
      %v730 = vpop.permute.xlu0 %729
      %731 = vrot.lane.b32.xlu0 %v663, 8
      %v732 = vpop.permute.xlu0 %731
      %733 = vrot.lane.b32.xlu0 %v666, 8
      %v734 = vpop.permute.xlu0 %733
      %735 = vrot.lane.b32.xlu0 %v668, 8
      %v736 = vpop.permute.xlu0 %735
      %vm771 = vcmask 1045504
      %v772 = vrot.slane %v515, 2
      %v773 = vrot.slane %v416, 2
      %v774 = vsel %vm771, %v772, %v773
      %v775 = vrot.slane %v532, 2
      %v776 = vsel %vm771, %v773, %v775
      %v777 = vrot.slane %v516, 2
      %v778 = vrot.slane %v419, 2
      %v779 = vsel %vm771, %v777, %v778
      %v780 = vrot.slane %v533, 2
      %v781 = vsel %vm771, %v778, %v780
      %v782 = vrot.slane %v517, 2
      %v783 = vrot.slane %v422, 2
      %v784 = vsel %vm771, %v782, %v783
      %v785 = vrot.slane %v534, 2
      %v786 = vsel %vm771, %v783, %v785
      %v787 = vrot.slane %v518, 2
      %v788 = vrot.slane %v425, 2
      %v789 = vsel %vm771, %v787, %v788
      %v790 = vrot.slane %v535, 2
      %v791 = vsel %vm771, %v788, %v790
      %v792 = vrot.slane %v519, 2
      %v793 = vrot.slane %v428, 2
      %v794 = vsel %vm771, %v792, %v793
      %v795 = vrot.slane %v536, 2
      %v796 = vsel %vm771, %v793, %v795
      %v797 = vrot.slane %v520, 2
      %v798 = vrot.slane %v431, 2
      %v799 = vsel %vm771, %v797, %v798
      %v800 = vrot.slane %v537, 2
      %v801 = vsel %vm771, %v798, %v800
      %v802 = vrot.slane %v521, 2
      %v803 = vrot.slane %v434, 2
      %v804 = vsel %vm771, %v802, %v803
      %v805 = vrot.slane %v538, 2
      %v806 = vsel %vm771, %v803, %v805
      %v807 = vrot.slane %v522, 2
      %v808 = vrot.slane %v437, 2
      %v809 = vsel %vm771, %v807, %v808
      %v810 = vrot.slane %v539, 2
      %v811 = vsel %vm771, %v808, %v810
      %v812 = vrot.slane %v523, 2
      %v813 = vrot.slane %v440, 2
      %v814 = vsel %vm771, %v812, %v813
      %v815 = vrot.slane %v540, 2
      %v816 = vsel %vm771, %v813, %v815
      %v817 = vrot.slane %v524, 2
      %v818 = vrot.slane %v443, 2
      %v819 = vsel %vm771, %v817, %v818
      %v820 = vrot.slane %v541, 2
      %v821 = vsel %vm771, %v818, %v820
      %v822 = vrot.slane %v525, 2
      %v823 = vrot.slane %v446, 2
      %v824 = vsel %vm771, %v822, %v823
      %v825 = vrot.slane %v542, 2
      %v826 = vsel %vm771, %v823, %v825
      %v827 = vrot.slane %v526, 2
      %v828 = vrot.slane %v449, 2
      %v829 = vsel %vm771, %v827, %v828
      %v830 = vrot.slane %v543, 2
      %v831 = vsel %vm771, %v828, %v830
      %v832 = vrot.slane %v527, 2
      %v833 = vrot.slane %v452, 2
      %v834 = vsel %vm771, %v832, %v833
      %v835 = vrot.slane %v544, 2
      %v836 = vsel %vm771, %v833, %v835
      %v837 = vrot.slane %v528, 2
      %v838 = vrot.slane %v455, 2
      %v839 = vsel %vm771, %v837, %v838
      %v840 = vrot.slane %v545, 2
      %v841 = vsel %vm771, %v838, %v840
      %v842 = vrot.slane %v529, 2
      %v843 = vrot.slane %v458, 2
      %v844 = vsel %vm771, %v842, %v843
      %v845 = vrot.slane %v546, 2
      %v846 = vsel %vm771, %v843, %v845
      %v847 = vrot.slane %v530, 2
      %v848 = vrot.slane %v461, 2
      %v849 = vsel %vm771, %v847, %v848
      %v850 = vrot.slane %v547, 2
      %v851 = vsel %vm771, %v848, %v850
      %v852 = vrot.slane %v531, 2
      %v853 = vrot.slane %v464, 2
      %v854 = vsel %vm771, %v852, %v853
      %v855 = vrot.slane %v548, 2
      %v856 = vsel %vm771, %v853, %v855
      %857 = vrot.lane.b32.xlu0 %v774, 16
      %v858 = vpop.permute.xlu0 %857
      %859 = vrot.lane.b32.xlu0 %v776, 16
      %v860 = vpop.permute.xlu0 %859
      %861 = vrot.lane.b32.xlu0 %v779, 16
      %v862 = vpop.permute.xlu0 %861
      %863 = vrot.lane.b32.xlu0 %v781, 16
      %v864 = vpop.permute.xlu0 %863
      %865 = vrot.lane.b32.xlu0 %v784, 16
      %v866 = vpop.permute.xlu0 %865
      %867 = vrot.lane.b32.xlu0 %v786, 16
      %v868 = vpop.permute.xlu0 %867
      %869 = vrot.lane.b32.xlu0 %v789, 16
      %v870 = vpop.permute.xlu0 %869
      %871 = vrot.lane.b32.xlu0 %v791, 16
      %v872 = vpop.permute.xlu0 %871
      %873 = vrot.lane.b32.xlu0 %v794, 16
      %v874 = vpop.permute.xlu0 %873
      %875 = vrot.lane.b32.xlu0 %v796, 16
      %v876 = vpop.permute.xlu0 %875
      %877 = vrot.lane.b32.xlu0 %v799, 16
      %v878 = vpop.permute.xlu0 %877
      %879 = vrot.lane.b32.xlu0 %v801, 16
      %v880 = vpop.permute.xlu0 %879
      %881 = vrot.lane.b32.xlu0 %v804, 16
      %v882 = vpop.permute.xlu0 %881
      %883 = vrot.lane.b32.xlu0 %v806, 16
      %v884 = vpop.permute.xlu0 %883
      %885 = vrot.lane.b32.xlu0 %v809, 16
      %v886 = vpop.permute.xlu0 %885
      %887 = vrot.lane.b32.xlu0 %v811, 16
      %v888 = vpop.permute.xlu0 %887
      %889 = vrot.lane.b32.xlu0 %v814, 16
      %v890 = vpop.permute.xlu0 %889
      %891 = vrot.lane.b32.xlu0 %v816, 16
      %v892 = vpop.permute.xlu0 %891
      %893 = vrot.lane.b32.xlu0 %v819, 16
      %v894 = vpop.permute.xlu0 %893
      %895 = vrot.lane.b32.xlu0 %v821, 16
      %v896 = vpop.permute.xlu0 %895
      %897 = vrot.lane.b32.xlu0 %v824, 16
      %v898 = vpop.permute.xlu0 %897
      %899 = vrot.lane.b32.xlu0 %v826, 16
      %v900 = vpop.permute.xlu0 %899
      %901 = vrot.lane.b32.xlu0 %v829, 16
      %v902 = vpop.permute.xlu0 %901
      %903 = vrot.lane.b32.xlu0 %v831, 16
      %v904 = vpop.permute.xlu0 %903
      %905 = vrot.lane.b32.xlu0 %v834, 16
      %v906 = vpop.permute.xlu0 %905
      %907 = vrot.lane.b32.xlu0 %v836, 16
      %v908 = vpop.permute.xlu0 %907
      %909 = vrot.lane.b32.xlu0 %v839, 16
      %v910 = vpop.permute.xlu0 %909
      %911 = vrot.lane.b32.xlu0 %v841, 16
      %v912 = vpop.permute.xlu0 %911
      %913 = vrot.lane.b32.xlu0 %v844, 16
      %v914 = vpop.permute.xlu0 %913
      %915 = vrot.lane.b32.xlu0 %v846, 16
      %v916 = vpop.permute.xlu0 %915
      %917 = vrot.lane.b32.xlu0 %v849, 16
      %v918 = vpop.permute.xlu0 %917
      %919 = vrot.lane.b32.xlu0 %v851, 16
      %v920 = vpop.permute.xlu0 %919
      %921 = vrot.lane.b32.xlu0 %v854, 16
      %v922 = vpop.permute.xlu0 %921
      %923 = vrot.lane.b32.xlu0 %v856, 16
      %v924 = vpop.permute.xlu0 %923
      %vm959 = vcmask 64512
      %v960 = vsel %vm959, %v515, %v670
      %v961 = vsel %vm959, %v416, %v672
      %v962 = vsel %vm959, %v516, %v674
      %v963 = vsel %vm959, %v419, %v676
      %v964 = vsel %vm959, %v517, %v678
      %v965 = vsel %vm959, %v422, %v680
      %v966 = vsel %vm959, %v518, %v682
      %v967 = vsel %vm959, %v425, %v684
      %v968 = vsel %vm959, %v519, %v686
      %v969 = vsel %vm959, %v428, %v688
      %v970 = vsel %vm959, %v520, %v690
      %v971 = vsel %vm959, %v431, %v692
      %v972 = vsel %vm959, %v521, %v694
      %v973 = vsel %vm959, %v434, %v696
      %v974 = vsel %vm959, %v522, %v698
      %v975 = vsel %vm959, %v437, %v700
      %v976 = vsel %vm959, %v523, %v702
      %v977 = vsel %vm959, %v440, %v704
      %v978 = vsel %vm959, %v524, %v706
      %v979 = vsel %vm959, %v443, %v708
      %v980 = vsel %vm959, %v525, %v710
      %v981 = vsel %vm959, %v446, %v712
      %v982 = vsel %vm959, %v526, %v714
      %v983 = vsel %vm959, %v449, %v716
      %v984 = vsel %vm959, %v527, %v718
      %v985 = vsel %vm959, %v452, %v720
      %v986 = vsel %vm959, %v528, %v722
      %v987 = vsel %vm959, %v455, %v724
      %v988 = vsel %vm959, %v529, %v726
      %v989 = vsel %vm959, %v458, %v728
      %v990 = vsel %vm959, %v530, %v730
      %v991 = vsel %vm959, %v461, %v732
      %v992 = vsel %vm959, %v531, %v734
      %v993 = vsel %vm959, %v464, %v736
      %vm994 = vcmask 130048
      %v995 = vsel %vm994, %v960, %v858
      %v996 = vsel %vm994, %v961, %v860
      %v997 = vsel %vm994, %v962, %v862
      %v998 = vsel %vm994, %v963, %v864
      %v999 = vsel %vm994, %v964, %v866
      %v1000 = vsel %vm994, %v965, %v868
      %v1001 = vsel %vm994, %v966, %v870
      %v1002 = vsel %vm994, %v967, %v872
      %v1003 = vsel %vm994, %v968, %v874
      %v1004 = vsel %vm994, %v969, %v876
      %v1005 = vsel %vm994, %v970, %v878
      %v1006 = vsel %vm994, %v971, %v880
      %v1007 = vsel %vm994, %v972, %v882
      %v1008 = vsel %vm994, %v973, %v884
      %v1009 = vsel %vm994, %v974, %v886
      %v1010 = vsel %vm994, %v975, %v888
      %v1011 = vsel %vm994, %v976, %v890
      %v1012 = vsel %vm994, %v977, %v892
      %v1013 = vsel %vm994, %v978, %v894
      %v1014 = vsel %vm994, %v979, %v896
      %v1015 = vsel %vm994, %v980, %v898
      %v1016 = vsel %vm994, %v981, %v900
      %v1017 = vsel %vm994, %v982, %v902
      %v1018 = vsel %vm994, %v983, %v904
      %v1019 = vsel %vm994, %v984, %v906
      %v1020 = vsel %vm994, %v985, %v908
      %v1021 = vsel %vm994, %v986, %v910
      %v1022 = vsel %vm994, %v987, %v912
      %v1023 = vsel %vm994, %v988, %v914
      %v1024 = vsel %vm994, %v989, %v916
      %v1025 = vsel %vm994, %v990, %v918
      %v1026 = vsel %vm994, %v991, %v920
      %v1027 = vsel %vm994, %v992, %v922
      %v1028 = vsel %vm994, %v993, %v924
      %vm1029 = vcmask 195584
      %v1031 = vsel %vm1029, %v997, 0
      %v1034 = vsel %vm1029, %v998, 0
      %v1037 = vsel %vm1029, %v999, 0
      %v1040 = vsel %vm1029, %v1000, 0
      %v1043 = vsel %vm1029, %v1001, 0
      %v1046 = vsel %vm1029, %v1002, 0
      %v1049 = vsel %vm1029, %v1003, 0
      %v1052 = vsel %vm1029, %v1004, 0
      %v1055 = vsel %vm1029, %v1005, 0
      %v1058 = vsel %vm1029, %v1006, 0
      %v1061 = vsel %vm1029, %v1007, 0
      %v1064 = vsel %vm1029, %v1008, 0
      %v1067 = vsel %vm1029, %v1009, 0
      %v1070 = vsel %vm1029, %v1010, 0
      %v1073 = vsel %vm1029, %v1011, 0
      %v1076 = vsel %vm1029, %v1012, 0
      %v1079 = vsel %vm1029, %v1013, 0
      %v1082 = vsel %vm1029, %v1014, 0
      %v1085 = vsel %vm1029, %v1015, 0
      %v1088 = vsel %vm1029, %v1016, 0
      %v1091 = vsel %vm1029, %v1017, 0
      %v1094 = vsel %vm1029, %v1018, 0
      %v1097 = vsel %vm1029, %v1019, 0
      %v1100 = vsel %vm1029, %v1020, 0
      %v1103 = vsel %vm1029, %v1021, 0
      %v1106 = vsel %vm1029, %v1022, 0
      %v1109 = vsel %vm1029, %v1023, 0
      %v1112 = vsel %vm1029, %v1024, 0
      %v1115 = vsel %vm1029, %v1025, 0
      %v1118 = vsel %vm1029, %v1026, 0
      %v1121 = vsel %vm1029, %v1027, 0
      %v1124 = vsel %vm1029, %v1028, 0
      %1126 = vmatpush.msra.mxu0 0.0
      %1127 = vmatpush.msra.mxu0 0.0
      %1128 = vmatpush.msra.mxu0 0.0
      %1129 = vmatpush.msra.mxu0 0.0
      %1130 = vmatpush.msra.mxu0 0.0
      %1131 = vmatpush.msra.mxu0 0.0
      %1132 = vmatpush.msra.mxu0 0.0
      %1133 = vmatpush.msra.mxu0 0.0
      %1134 = vmatpush.msra.mxu0 0.0
      %1135 = vmatpush.msra.mxu0 0.0
      %1136 = vmatpush.msra.mxu0 0.0
      %1137 = vmatpush.msra.mxu0 0.0
      %1138 = vmatpush.msra.mxu0 0.0
      %1139 = vmatpush.msra.mxu0 %v377
      %1140 = vmatpush.msra.mxu0 %v376
      %1141 = vmatpush.msra.mxu0 %v375
      %1142 = vmatmul.f32.gmra.mxu0 %v1031
      %v1143 = vpop.f32.mrf.mxu0
      %v1144 = vadd.f32 0.0, %v1143
      %1145 = vmatmul.f32.gmra.mxu0 %v1034
      %v1146 = vpop.f32.mrf.mxu0
      %v1147 = vadd.f32 0.0, %v1146
      %1148 = vmatmul.f32.gmra.mxu0 %v1037
      %v1149 = vpop.f32.mrf.mxu0
      %v1150 = vadd.f32 0.0, %v1149
      %1151 = vmatmul.f32.gmra.mxu0 %v1040
      %v1152 = vpop.f32.mrf.mxu0
      %v1153 = vadd.f32 0.0, %v1152
      %1154 = vmatmul.f32.gmra.mxu0 %v1043
      %v1155 = vpop.f32.mrf.mxu0
      %v1156 = vadd.f32 0.0, %v1155
      %1157 = vmatmul.f32.gmra.mxu0 %v1046
      %v1158 = vpop.f32.mrf.mxu0
      %v1159 = vadd.f32 0.0, %v1158
      %1160 = vmatmul.f32.gmra.mxu0 %v1049
      %v1161 = vpop.f32.mrf.mxu0
      %v1162 = vadd.f32 0.0, %v1161
      %1163 = vmatmul.f32.gmra.mxu0 %v1052
      %v1164 = vpop.f32.mrf.mxu0
      %v1165 = vadd.f32 0.0, %v1164
      %1166 = vmatmul.f32.gmra.mxu0 %v1055
      %v1167 = vpop.f32.mrf.mxu0
      %v1168 = vadd.f32 0.0, %v1167
      %1169 = vmatmul.f32.gmra.mxu0 %v1058
      %v1170 = vpop.f32.mrf.mxu0
      %v1171 = vadd.f32 0.0, %v1170
      %1172 = vmatmul.f32.gmra.mxu0 %v1061
      %v1173 = vpop.f32.mrf.mxu0
      %v1174 = vadd.f32 0.0, %v1173
      %1175 = vmatmul.f32.gmra.mxu0 %v1064
      %v1176 = vpop.f32.mrf.mxu0
      %v1177 = vadd.f32 0.0, %v1176
      %1178 = vmatmul.f32.gmra.mxu0 %v1067
      %v1179 = vpop.f32.mrf.mxu0
      %v1180 = vadd.f32 0.0, %v1179
      %1181 = vmatmul.f32.gmra.mxu0 %v1070
      %v1182 = vpop.f32.mrf.mxu0
      %v1183 = vadd.f32 0.0, %v1182
      %1184 = vmatmul.f32.gmra.mxu0 %v1073
      %v1185 = vpop.f32.mrf.mxu0
      %v1186 = vadd.f32 0.0, %v1185
      %1187 = vmatmul.f32.gmra.mxu0 %v1076
      %v1188 = vpop.f32.mrf.mxu0
      %v1189 = vadd.f32 0.0, %v1188
      %1190 = vmatmul.f32.gmra.mxu0 %v1079
      %v1191 = vpop.f32.mrf.mxu0
      %v1192 = vadd.f32 0.0, %v1191
      %1193 = vmatmul.f32.gmra.mxu0 %v1082
      %v1194 = vpop.f32.mrf.mxu0
      %v1195 = vadd.f32 0.0, %v1194
      %1196 = vmatmul.f32.gmra.mxu0 %v1085
      %v1197 = vpop.f32.mrf.mxu0
      %v1198 = vadd.f32 0.0, %v1197
      %1199 = vmatmul.f32.gmra.mxu0 %v1088
      %v1200 = vpop.f32.mrf.mxu0
      %v1201 = vadd.f32 0.0, %v1200
      %1202 = vmatmul.f32.gmra.mxu0 %v1091
      %v1203 = vpop.f32.mrf.mxu0
      %v1204 = vadd.f32 0.0, %v1203
      %1205 = vmatmul.f32.gmra.mxu0 %v1094
      %v1206 = vpop.f32.mrf.mxu0
      %v1207 = vadd.f32 0.0, %v1206
      %1208 = vmatmul.f32.gmra.mxu0 %v1097
      %v1209 = vpop.f32.mrf.mxu0
      %v1210 = vadd.f32 0.0, %v1209
      %1211 = vmatmul.f32.gmra.mxu0 %v1100
      %v1212 = vpop.f32.mrf.mxu0
      %v1213 = vadd.f32 0.0, %v1212
      %1214 = vmatmul.f32.gmra.mxu0 %v1103
      %v1215 = vpop.f32.mrf.mxu0
      %v1216 = vadd.f32 0.0, %v1215
      %1217 = vmatmul.f32.gmra.mxu0 %v1106
      %v1218 = vpop.f32.mrf.mxu0
      %v1219 = vadd.f32 0.0, %v1218
      %1220 = vmatmul.f32.gmra.mxu0 %v1109
      %v1221 = vpop.f32.mrf.mxu0
      %v1222 = vadd.f32 0.0, %v1221
      %1223 = vmatmul.f32.gmra.mxu0 %v1112
      %v1224 = vpop.f32.mrf.mxu0
      %v1225 = vadd.f32 0.0, %v1224
      %1226 = vmatmul.f32.gmra.mxu0 %v1115
      %v1227 = vpop.f32.mrf.mxu0
      %v1228 = vadd.f32 0.0, %v1227
      %1229 = vmatmul.f32.gmra.mxu0 %v1118
      %v1230 = vpop.f32.mrf.mxu0
      %v1231 = vadd.f32 0.0, %v1230
      %1232 = vmatmul.f32.gmra.mxu0 %v1121
      %v1233 = vpop.f32.mrf.mxu0
      %v1234 = vadd.f32 0.0, %v1233
      %1235 = vmatmul.f32.gmra.mxu0 %v1124
      %v1236 = vpop.f32.mrf.mxu0
      %v1237 = vadd.f32 0.0, %v1236
      %1238 = vdwg.mxu0
      %v1240 = vsel %vm1029, %v995, 0
      %v1243 = vsel %vm1029, %v996, 0
      %1245 = vmatpush.msra.mxu0 0.0
      %1246 = vmatpush.msra.mxu0 0.0
      %1247 = vmatpush.msra.mxu0 0.0
      %1248 = vmatpush.msra.mxu0 0.0
      %1249 = vmatpush.msra.mxu0 0.0
      %1250 = vmatpush.msra.mxu0 0.0
      %1251 = vmatpush.msra.mxu0 0.0
      %1252 = vmatpush.msra.mxu0 0.0
      %1253 = vmatpush.msra.mxu0 0.0
      %1254 = vmatpush.msra.mxu0 0.0
      %1255 = vmatpush.msra.mxu0 0.0
      %1256 = vmatpush.msra.mxu0 0.0
      %1257 = vmatpush.msra.mxu0 0.0
      %1258 = vmatpush.msra.mxu0 %v374
      %1259 = vmatpush.msra.mxu0 %v373
      %1260 = vmatpush.msra.mxu0 %v372
      %1261 = vmatmul.f32.gmra.mxu0 %v1240
      %v1262 = vpop.f32.mrf.mxu0
      %v1263 = vadd.f32 %v1144, %v1262
      %1264 = vmatmul.f32.gmra.mxu0 %v1243
      %v1265 = vpop.f32.mrf.mxu0
      %v1266 = vadd.f32 %v1147, %v1265
      %1267 = vmatmul.f32.gmra.mxu0 %v1031
      %v1268 = vpop.f32.mrf.mxu0
      %v1269 = vadd.f32 %v1150, %v1268
      %1270 = vmatmul.f32.gmra.mxu0 %v1034
      %v1271 = vpop.f32.mrf.mxu0
      %v1272 = vadd.f32 %v1153, %v1271
      %1273 = vmatmul.f32.gmra.mxu0 %v1037
      %v1274 = vpop.f32.mrf.mxu0
      %v1275 = vadd.f32 %v1156, %v1274
      %1276 = vmatmul.f32.gmra.mxu0 %v1040
      %v1277 = vpop.f32.mrf.mxu0
      %v1278 = vadd.f32 %v1159, %v1277
      %1279 = vmatmul.f32.gmra.mxu0 %v1043
      %v1280 = vpop.f32.mrf.mxu0
      %v1281 = vadd.f32 %v1162, %v1280
      %1282 = vmatmul.f32.gmra.mxu0 %v1046
      %v1283 = vpop.f32.mrf.mxu0
      %v1284 = vadd.f32 %v1165, %v1283
      %1285 = vmatmul.f32.gmra.mxu0 %v1049
      %v1286 = vpop.f32.mrf.mxu0
      %v1287 = vadd.f32 %v1168, %v1286
      %1288 = vmatmul.f32.gmra.mxu0 %v1052
      %v1289 = vpop.f32.mrf.mxu0
      %v1290 = vadd.f32 %v1171, %v1289
      %1291 = vmatmul.f32.gmra.mxu0 %v1055
      %v1292 = vpop.f32.mrf.mxu0
      %v1293 = vadd.f32 %v1174, %v1292
      %1294 = vmatmul.f32.gmra.mxu0 %v1058
      %v1295 = vpop.f32.mrf.mxu0
      %v1296 = vadd.f32 %v1177, %v1295
      %1297 = vmatmul.f32.gmra.mxu0 %v1061
      %v1298 = vpop.f32.mrf.mxu0
      %v1299 = vadd.f32 %v1180, %v1298
      %1300 = vmatmul.f32.gmra.mxu0 %v1064
      %v1301 = vpop.f32.mrf.mxu0
      %v1302 = vadd.f32 %v1183, %v1301
      %1303 = vmatmul.f32.gmra.mxu0 %v1067
      %v1304 = vpop.f32.mrf.mxu0
      %v1305 = vadd.f32 %v1186, %v1304
      %1306 = vmatmul.f32.gmra.mxu0 %v1070
      %v1307 = vpop.f32.mrf.mxu0
      %v1308 = vadd.f32 %v1189, %v1307
      %1309 = vmatmul.f32.gmra.mxu0 %v1073
      %v1310 = vpop.f32.mrf.mxu0
      %v1311 = vadd.f32 %v1192, %v1310
      %1312 = vmatmul.f32.gmra.mxu0 %v1076
      %v1313 = vpop.f32.mrf.mxu0
      %v1314 = vadd.f32 %v1195, %v1313
      %1315 = vmatmul.f32.gmra.mxu0 %v1079
      %v1316 = vpop.f32.mrf.mxu0
      %v1317 = vadd.f32 %v1198, %v1316
      %1318 = vmatmul.f32.gmra.mxu0 %v1082
      %v1319 = vpop.f32.mrf.mxu0
      %v1320 = vadd.f32 %v1201, %v1319
      %1321 = vmatmul.f32.gmra.mxu0 %v1085
      %v1322 = vpop.f32.mrf.mxu0
      %v1323 = vadd.f32 %v1204, %v1322
      %1324 = vmatmul.f32.gmra.mxu0 %v1088
      %v1325 = vpop.f32.mrf.mxu0
      %v1326 = vadd.f32 %v1207, %v1325
      %1327 = vmatmul.f32.gmra.mxu0 %v1091
      %v1328 = vpop.f32.mrf.mxu0
      %v1329 = vadd.f32 %v1210, %v1328
      %1330 = vmatmul.f32.gmra.mxu0 %v1094
      %v1331 = vpop.f32.mrf.mxu0
      %v1332 = vadd.f32 %v1213, %v1331
      %1333 = vmatmul.f32.gmra.mxu0 %v1097
      %v1334 = vpop.f32.mrf.mxu0
      %v1335 = vadd.f32 %v1216, %v1334
      %1336 = vmatmul.f32.gmra.mxu0 %v1100
      %v1337 = vpop.f32.mrf.mxu0
      %v1338 = vadd.f32 %v1219, %v1337
      %1339 = vmatmul.f32.gmra.mxu0 %v1103
      %v1340 = vpop.f32.mrf.mxu0
      %v1341 = vadd.f32 %v1222, %v1340
      %1342 = vmatmul.f32.gmra.mxu0 %v1106
      %v1343 = vpop.f32.mrf.mxu0
      %v1344 = vadd.f32 %v1225, %v1343
      %1345 = vmatmul.f32.gmra.mxu0 %v1109
      %v1346 = vpop.f32.mrf.mxu0
      %v1347 = vadd.f32 %v1228, %v1346
      %1348 = vmatmul.f32.gmra.mxu0 %v1112
      %v1349 = vpop.f32.mrf.mxu0
      %v1350 = vadd.f32 %v1231, %v1349
      %1351 = vmatmul.f32.gmra.mxu0 %v1115
      %v1352 = vpop.f32.mrf.mxu0
      %v1353 = vadd.f32 %v1234, %v1352
      %1354 = vmatmul.f32.gmra.mxu0 %v1118
      %v1355 = vpop.f32.mrf.mxu0
      %v1356 = vadd.f32 %v1237, %v1355
      %1357 = vdwg.mxu0
      %1358 = vmatpush.msra.mxu0 0.0
      %1359 = vmatpush.msra.mxu0 0.0
      %1360 = vmatpush.msra.mxu0 0.0
      %1361 = vmatpush.msra.mxu0 0.0
      %1362 = vmatpush.msra.mxu0 0.0
      %1363 = vmatpush.msra.mxu0 0.0
      %1364 = vmatpush.msra.mxu0 0.0
      %1365 = vmatpush.msra.mxu0 0.0
      %1366 = vmatpush.msra.mxu0 0.0
      %1367 = vmatpush.msra.mxu0 0.0
      %1368 = vmatpush.msra.mxu0 0.0
      %1369 = vmatpush.msra.mxu0 0.0
      %1370 = vmatpush.msra.mxu0 0.0
      %1371 = vmatpush.msra.mxu0 %v380
      %1372 = vmatpush.msra.mxu0 %v379
      %1373 = vmatpush.msra.mxu0 %v378
      %1374 = vmatmul.f32.gmra.mxu0 %v1037
      %v1375 = vpop.f32.mrf.mxu0
      %v1376 = vadd.f32 0.0, %v1375
      %1377 = vmatmul.f32.gmra.mxu0 %v1040
      %v1378 = vpop.f32.mrf.mxu0
      %v1379 = vadd.f32 0.0, %v1378
      %1380 = vmatmul.f32.gmra.mxu0 %v1043
      %v1381 = vpop.f32.mrf.mxu0
      %v1382 = vadd.f32 0.0, %v1381
      %1383 = vmatmul.f32.gmra.mxu0 %v1046
      %v1384 = vpop.f32.mrf.mxu0
      %v1385 = vadd.f32 0.0, %v1384
      %1386 = vmatmul.f32.gmra.mxu0 %v1049
      %v1387 = vpop.f32.mrf.mxu0
      %v1388 = vadd.f32 0.0, %v1387
      %1389 = vmatmul.f32.gmra.mxu0 %v1052
      %v1390 = vpop.f32.mrf.mxu0
      %v1391 = vadd.f32 0.0, %v1390
      %1392 = vmatmul.f32.gmra.mxu0 %v1055
      %v1393 = vpop.f32.mrf.mxu0
      %v1394 = vadd.f32 0.0, %v1393
      %1395 = vmatmul.f32.gmra.mxu0 %v1058
      %v1396 = vpop.f32.mrf.mxu0
      %v1397 = vadd.f32 0.0, %v1396
      %1398 = vmatmul.f32.gmra.mxu0 %v1061
      %v1399 = vpop.f32.mrf.mxu0
      %v1400 = vadd.f32 0.0, %v1399
      %1401 = vmatmul.f32.gmra.mxu0 %v1064
      %v1402 = vpop.f32.mrf.mxu0
      %v1403 = vadd.f32 0.0, %v1402
      %1404 = vmatmul.f32.gmra.mxu0 %v1067
      %v1405 = vpop.f32.mrf.mxu0
      %v1406 = vadd.f32 0.0, %v1405
      %1407 = vmatmul.f32.gmra.mxu0 %v1070
      %v1408 = vpop.f32.mrf.mxu0
      %v1409 = vadd.f32 0.0, %v1408
      %1410 = vmatmul.f32.gmra.mxu0 %v1073
      %v1411 = vpop.f32.mrf.mxu0
      %v1412 = vadd.f32 0.0, %v1411
      %1413 = vmatmul.f32.gmra.mxu0 %v1076
      %v1414 = vpop.f32.mrf.mxu0
      %v1415 = vadd.f32 0.0, %v1414
      %1416 = vmatmul.f32.gmra.mxu0 %v1079
      %v1417 = vpop.f32.mrf.mxu0
      %v1418 = vadd.f32 0.0, %v1417
      %1419 = vmatmul.f32.gmra.mxu0 %v1082
      %v1420 = vpop.f32.mrf.mxu0
      %v1421 = vadd.f32 0.0, %v1420
      %1422 = vmatmul.f32.gmra.mxu0 %v1085
      %v1423 = vpop.f32.mrf.mxu0
      %v1424 = vadd.f32 0.0, %v1423
      %1425 = vmatmul.f32.gmra.mxu0 %v1088
      %v1426 = vpop.f32.mrf.mxu0
      %v1427 = vadd.f32 0.0, %v1426
      %1428 = vmatmul.f32.gmra.mxu0 %v1091
      %v1429 = vpop.f32.mrf.mxu0
      %v1430 = vadd.f32 0.0, %v1429
      %1431 = vmatmul.f32.gmra.mxu0 %v1094
      %v1432 = vpop.f32.mrf.mxu0
      %v1433 = vadd.f32 0.0, %v1432
      %1434 = vmatmul.f32.gmra.mxu0 %v1097
      %v1435 = vpop.f32.mrf.mxu0
      %v1436 = vadd.f32 0.0, %v1435
      %1437 = vmatmul.f32.gmra.mxu0 %v1100
      %v1438 = vpop.f32.mrf.mxu0
      %v1439 = vadd.f32 0.0, %v1438
      %1440 = vmatmul.f32.gmra.mxu0 %v1103
      %v1441 = vpop.f32.mrf.mxu0
      %v1442 = vadd.f32 0.0, %v1441
      %1443 = vmatmul.f32.gmra.mxu0 %v1106
      %v1444 = vpop.f32.mrf.mxu0
      %v1445 = vadd.f32 0.0, %v1444
      %1446 = vmatmul.f32.gmra.mxu0 %v1109
      %v1447 = vpop.f32.mrf.mxu0
      %v1448 = vadd.f32 0.0, %v1447
      %1449 = vmatmul.f32.gmra.mxu0 %v1112
      %v1450 = vpop.f32.mrf.mxu0
      %v1451 = vadd.f32 0.0, %v1450
      %1452 = vmatmul.f32.gmra.mxu0 %v1115
      %v1453 = vpop.f32.mrf.mxu0
      %v1454 = vadd.f32 0.0, %v1453
      %1455 = vmatmul.f32.gmra.mxu0 %v1118
      %v1456 = vpop.f32.mrf.mxu0
      %v1457 = vadd.f32 0.0, %v1456
      %1458 = vmatmul.f32.gmra.mxu0 %v1121
      %v1459 = vpop.f32.mrf.mxu0
      %v1460 = vadd.f32 0.0, %v1459
      %1461 = vmatmul.f32.gmra.mxu0 %v1124
      %v1462 = vpop.f32.mrf.mxu0
      %v1463 = vadd.f32 0.0, %v1462
      %1464 = vmatmul.f32.gmra.mxu0 %v1240
      %v1465 = vpop.f32.mrf.mxu0
      %v1466 = vadd.f32 0.0, %v1465
      %1467 = vmatmul.f32.gmra.mxu0 %v1243
      %v1468 = vpop.f32.mrf.mxu0
      %v1469 = vadd.f32 0.0, %v1468
      %1470 = vdwg.mxu0
      %v1471 = vadd.f32 %v1263, %v1376
      %v1472 = vadd.f32 %v1266, %v1379
      %v1473 = vadd.f32 %v1269, %v1382
      %v1474 = vadd.f32 %v1272, %v1385
      %v1475 = vadd.f32 %v1275, %v1388
      %v1476 = vadd.f32 %v1278, %v1391
      %v1477 = vadd.f32 %v1281, %v1394
      %v1478 = vadd.f32 %v1284, %v1397
      %v1479 = vadd.f32 %v1287, %v1400
      %v1480 = vadd.f32 %v1290, %v1403
      %v1481 = vadd.f32 %v1293, %v1406
      %v1482 = vadd.f32 %v1296, %v1409
      %v1483 = vadd.f32 %v1299, %v1412
      %v1484 = vadd.f32 %v1302, %v1415
      %v1485 = vadd.f32 %v1305, %v1418
      %v1486 = vadd.f32 %v1308, %v1421
      %v1487 = vadd.f32 %v1311, %v1424
      %v1488 = vadd.f32 %v1314, %v1427
      %v1489 = vadd.f32 %v1317, %v1430
      %v1490 = vadd.f32 %v1320, %v1433
      %v1491 = vadd.f32 %v1323, %v1436
      %v1492 = vadd.f32 %v1326, %v1439
      %v1493 = vadd.f32 %v1329, %v1442
      %v1494 = vadd.f32 %v1332, %v1445
      %v1495 = vadd.f32 %v1335, %v1448
      %v1496 = vadd.f32 %v1338, %v1451
      %v1497 = vadd.f32 %v1341, %v1454
      %v1498 = vadd.f32 %v1344, %v1457
      %v1499 = vadd.f32 %v1347, %v1460
      %v1500 = vadd.f32 %v1350, %v1463
      %v1501 = vadd.f32 %v1353, %v1466
      %v1502 = vadd.f32 %v1356, %v1469
      %1503 = vst.msk [vmem:[%s231] sm:$0xff] %vm959, %v1471
      %1504 = vst.msk [vmem:[%s231 + $0x8] sm:$0xff] %vm959, %v1472
      %1505 = vst.msk [vmem:[%s231 + $0x10] sm:$0xff] %vm959, %v1473
      %1506 = vst.msk [vmem:[%s231 + $0x18] sm:$0xff] %vm959, %v1474
      %1507 = vst.msk [vmem:[%s231 + $0x20] sm:$0xff] %vm959, %v1475
      %1508 = vst.msk [vmem:[%s231 + $0x28] sm:$0xff] %vm959, %v1476
      %1509 = vst.msk [vmem:[%s231 + $0x30] sm:$0xff] %vm959, %v1477
      %1510 = vst.msk [vmem:[%s231 + $0x38] sm:$0xff] %vm959, %v1478
      %1511 = vst.msk [vmem:[%s231 + $0x40] sm:$0xff] %vm959, %v1479
      %1512 = vst.msk [vmem:[%s231 + $0x48] sm:$0xff] %vm959, %v1480
      %1513 = vst.msk [vmem:[%s231 + $0x50] sm:$0xff] %vm959, %v1481
      %1514 = vst.msk [vmem:[%s231 + $0x58] sm:$0xff] %vm959, %v1482
      %1515 = vst.msk [vmem:[%s231 + $0x60] sm:$0xff] %vm959, %v1483
      %1516 = vst.msk [vmem:[%s231 + $0x68] sm:$0xff] %vm959, %v1484
      %1517 = vst.msk [vmem:[%s231 + $0x70] sm:$0xff] %vm959, %v1485
      %1518 = vst.msk [vmem:[%s231 + $0x78] sm:$0xff] %vm959, %v1486
      %1519 = vst.msk [vmem:[%s231 + $0x80] sm:$0xff] %vm959, %v1487
      %1520 = vst.msk [vmem:[%s231 + $0x88] sm:$0xff] %vm959, %v1488
      %1521 = vst.msk [vmem:[%s231 + $0x90] sm:$0xff] %vm959, %v1489
      %1522 = vst.msk [vmem:[%s231 + $0x98] sm:$0xff] %vm959, %v1490
      %1523 = vst.msk [vmem:[%s231 + $0xa0] sm:$0xff] %vm959, %v1491
      %1524 = vst.msk [vmem:[%s231 + $0xa8] sm:$0xff] %vm959, %v1492
      %1525 = vst.msk [vmem:[%s231 + $0xb0] sm:$0xff] %vm959, %v1493
      %1526 = vst.msk [vmem:[%s231 + $0xb8] sm:$0xff] %vm959, %v1494
      %1527 = vst.msk [vmem:[%s231 + $0xc0] sm:$0xff] %vm959, %v1495
      %1528 = vst.msk [vmem:[%s231 + $0xc8] sm:$0xff] %vm959, %v1496
      %1529 = vst.msk [vmem:[%s231 + $0xd0] sm:$0xff] %vm959, %v1497
      %1530 = vst.msk [vmem:[%s231 + $0xd8] sm:$0xff] %vm959, %v1498
      %1531 = vst.msk [vmem:[%s231 + $0xe0] sm:$0xff] %vm959, %v1499
      %1532 = vst.msk [vmem:[%s231 + $0xe8] sm:$0xff] %vm959, %v1500
      %1533 = vst.msk [vmem:[%s231 + $0xf0] sm:$0xff] %vm959, %v1501
      %1534 = vst.msk [vmem:[%s231 + $0xf8] sm:$0xff] %vm959, %v1502
      %v1535 = vsel %vm959, %v1471, 0.0
      %v1536 = vsel %vm959, %v1472, 0.0
      %v1537 = vadd.f32 %v1535, %v1536
      %v1538 = vsel %vm959, %v1473, 0.0
      %v1539 = vadd.f32 %v1537, %v1538
      %v1540 = vsel %vm959, %v1474, 0.0
      %v1541 = vadd.f32 %v1539, %v1540
      %v1542 = vsel %vm959, %v1475, 0.0
      %v1543 = vadd.f32 %v1541, %v1542
      %v1544 = vsel %vm959, %v1476, 0.0
      %v1545 = vadd.f32 %v1543, %v1544
      %v1546 = vsel %vm959, %v1477, 0.0
      %v1547 = vadd.f32 %v1545, %v1546
      %v1548 = vsel %vm959, %v1478, 0.0
      %v1549 = vadd.f32 %v1547, %v1548
      %v1550 = vsel %vm959, %v1479, 0.0
      %v1551 = vadd.f32 %v1549, %v1550
      %v1552 = vsel %vm959, %v1480, 0.0
      %v1553 = vadd.f32 %v1551, %v1552
      %v1554 = vsel %vm959, %v1481, 0.0
      %v1555 = vadd.f32 %v1553, %v1554
      %v1556 = vsel %vm959, %v1482, 0.0
      %v1557 = vadd.f32 %v1555, %v1556
      %v1558 = vsel %vm959, %v1483, 0.0
      %v1559 = vadd.f32 %v1557, %v1558
      %v1560 = vsel %vm959, %v1484, 0.0
      %v1561 = vadd.f32 %v1559, %v1560
      %v1562 = vsel %vm959, %v1485, 0.0
      %v1563 = vadd.f32 %v1561, %v1562
      %v1564 = vsel %vm959, %v1486, 0.0
      %v1565 = vadd.f32 %v1563, %v1564
      %v1566 = vsel %vm959, %v1487, 0.0
      %v1567 = vadd.f32 %v1565, %v1566
      %v1568 = vsel %vm959, %v1488, 0.0
      %v1569 = vadd.f32 %v1567, %v1568
      %v1570 = vsel %vm959, %v1489, 0.0
      %v1571 = vadd.f32 %v1569, %v1570
      %v1572 = vsel %vm959, %v1490, 0.0
      %v1573 = vadd.f32 %v1571, %v1572
      %v1574 = vsel %vm959, %v1491, 0.0
      %v1575 = vadd.f32 %v1573, %v1574
      %v1576 = vsel %vm959, %v1492, 0.0
      %v1577 = vadd.f32 %v1575, %v1576
      %v1578 = vsel %vm959, %v1493, 0.0
      %v1579 = vadd.f32 %v1577, %v1578
      %v1580 = vsel %vm959, %v1494, 0.0
      %v1581 = vadd.f32 %v1579, %v1580
      %v1582 = vsel %vm959, %v1495, 0.0
      %v1583 = vadd.f32 %v1581, %v1582
      %v1584 = vsel %vm959, %v1496, 0.0
      %v1585 = vadd.f32 %v1583, %v1584
      %v1586 = vsel %vm959, %v1497, 0.0
      %v1587 = vadd.f32 %v1585, %v1586
      %v1588 = vsel %vm959, %v1498, 0.0
      %v1589 = vadd.f32 %v1587, %v1588
      %v1590 = vsel %vm959, %v1499, 0.0
      %v1591 = vadd.f32 %v1589, %v1590
      %v1592 = vsel %vm959, %v1500, 0.0
      %v1593 = vadd.f32 %v1591, %v1592
      %v1594 = vsel %vm959, %v1501, 0.0
      %v1595 = vadd.f32 %v1593, %v1594
      %v1596 = vsel %vm959, %v1502, 0.0
      %v1597 = vadd.f32 %v1595, %v1596
      %v1598 = vrot.slane %v1597, 4
      %v1599 = vadd.f32 %v1597, %v1598
      %v1600 = vrot.slane %v1599, 2
      %v1601 = vadd.f32 %v1599, %v1600
      %v1602 = vrot.slane %v1601, 1
      %v1603 = vadd.f32 %v1601, %v1602
      %v1604 = vmul.f32 %v1603, 0.00390625
      %v1605 = vsub.f32 %v1471, %v1604
      %v1606 = vsub.f32 %v1472, %v1604
      %v1607 = vsub.f32 %v1473, %v1604
      %v1608 = vsub.f32 %v1474, %v1604
      %v1609 = vsub.f32 %v1475, %v1604
      %v1610 = vsub.f32 %v1476, %v1604
      %v1611 = vsub.f32 %v1477, %v1604
      %v1612 = vsub.f32 %v1478, %v1604
      %v1613 = vsub.f32 %v1479, %v1604
      %v1614 = vsub.f32 %v1480, %v1604
      %v1615 = vsub.f32 %v1481, %v1604
      %v1616 = vsub.f32 %v1482, %v1604
      %v1617 = vsub.f32 %v1483, %v1604
      %v1618 = vsub.f32 %v1484, %v1604
      %v1619 = vsub.f32 %v1485, %v1604
      %v1620 = vsub.f32 %v1486, %v1604
      %v1621 = vsub.f32 %v1487, %v1604
      %v1622 = vsub.f32 %v1488, %v1604
      %v1623 = vsub.f32 %v1489, %v1604
      %v1624 = vsub.f32 %v1490, %v1604
      %v1625 = vsub.f32 %v1491, %v1604
      %v1626 = vsub.f32 %v1492, %v1604
      %v1627 = vsub.f32 %v1493, %v1604
      %v1628 = vsub.f32 %v1494, %v1604
      %v1629 = vsub.f32 %v1495, %v1604
      %v1630 = vsub.f32 %v1496, %v1604
      %v1631 = vsub.f32 %v1497, %v1604
      %v1632 = vsub.f32 %v1498, %v1604
      %v1633 = vsub.f32 %v1499, %v1604
      %v1634 = vsub.f32 %v1500, %v1604
      %v1635 = vsub.f32 %v1501, %v1604
      %v1636 = vsub.f32 %v1502, %v1604
      %v1637 = vmul.f32 %v1605, %v1605
      %v1638 = vmul.f32 %v1606, %v1606
      %v1639 = vmul.f32 %v1607, %v1607
      %v1640 = vmul.f32 %v1608, %v1608
      %v1641 = vmul.f32 %v1609, %v1609
      %v1642 = vmul.f32 %v1610, %v1610
      %v1643 = vmul.f32 %v1611, %v1611
      %v1644 = vmul.f32 %v1612, %v1612
      %v1645 = vmul.f32 %v1613, %v1613
      %v1646 = vmul.f32 %v1614, %v1614
      %v1647 = vmul.f32 %v1615, %v1615
      %v1648 = vmul.f32 %v1616, %v1616
      %v1649 = vmul.f32 %v1617, %v1617
      %v1650 = vmul.f32 %v1618, %v1618
      %v1651 = vmul.f32 %v1619, %v1619
      %v1652 = vmul.f32 %v1620, %v1620
      %v1653 = vmul.f32 %v1621, %v1621
      %v1654 = vmul.f32 %v1622, %v1622
      %v1655 = vmul.f32 %v1623, %v1623
      %v1656 = vmul.f32 %v1624, %v1624
      %v1657 = vmul.f32 %v1625, %v1625
      %v1658 = vmul.f32 %v1626, %v1626
      %v1659 = vmul.f32 %v1627, %v1627
      %v1660 = vmul.f32 %v1628, %v1628
      %v1661 = vmul.f32 %v1629, %v1629
      %v1662 = vmul.f32 %v1630, %v1630
      %v1663 = vmul.f32 %v1631, %v1631
      %v1664 = vmul.f32 %v1632, %v1632
      %v1665 = vmul.f32 %v1633, %v1633
      %v1666 = vmul.f32 %v1634, %v1634
      %v1667 = vmul.f32 %v1635, %v1635
      %v1668 = vmul.f32 %v1636, %v1636
      %v1669 = vsel %vm959, %v1637, 0.0
      %v1670 = vsel %vm959, %v1638, 0.0
      %v1671 = vadd.f32 %v1669, %v1670
      %v1672 = vsel %vm959, %v1639, 0.0
      %v1673 = vadd.f32 %v1671, %v1672
      %v1674 = vsel %vm959, %v1640, 0.0
      %v1675 = vadd.f32 %v1673, %v1674
      %v1676 = vsel %vm959, %v1641, 0.0
      %v1677 = vadd.f32 %v1675, %v1676
      %v1678 = vsel %vm959, %v1642, 0.0
      %v1679 = vadd.f32 %v1677, %v1678
      %v1680 = vsel %vm959, %v1643, 0.0
      %v1681 = vadd.f32 %v1679, %v1680
      %v1682 = vsel %vm959, %v1644, 0.0
      %v1683 = vadd.f32 %v1681, %v1682
      %v1684 = vsel %vm959, %v1645, 0.0
      %v1685 = vadd.f32 %v1683, %v1684
      %v1686 = vsel %vm959, %v1646, 0.0
      %v1687 = vadd.f32 %v1685, %v1686
      %v1688 = vsel %vm959, %v1647, 0.0
      %v1689 = vadd.f32 %v1687, %v1688
      %v1690 = vsel %vm959, %v1648, 0.0
      %v1691 = vadd.f32 %v1689, %v1690
      %v1692 = vsel %vm959, %v1649, 0.0
      %v1693 = vadd.f32 %v1691, %v1692
      %v1694 = vsel %vm959, %v1650, 0.0
      %v1695 = vadd.f32 %v1693, %v1694
      %v1696 = vsel %vm959, %v1651, 0.0
      %v1697 = vadd.f32 %v1695, %v1696
      %v1698 = vsel %vm959, %v1652, 0.0
      %v1699 = vadd.f32 %v1697, %v1698
      %v1700 = vsel %vm959, %v1653, 0.0
      %v1701 = vadd.f32 %v1699, %v1700
      %v1702 = vsel %vm959, %v1654, 0.0
      %v1703 = vadd.f32 %v1701, %v1702
      %v1704 = vsel %vm959, %v1655, 0.0
      %v1705 = vadd.f32 %v1703, %v1704
      %v1706 = vsel %vm959, %v1656, 0.0
      %v1707 = vadd.f32 %v1705, %v1706
      %v1708 = vsel %vm959, %v1657, 0.0
      %v1709 = vadd.f32 %v1707, %v1708
      %v1710 = vsel %vm959, %v1658, 0.0
      %v1711 = vadd.f32 %v1709, %v1710
      %v1712 = vsel %vm959, %v1659, 0.0
      %v1713 = vadd.f32 %v1711, %v1712
      %v1714 = vsel %vm959, %v1660, 0.0
      %v1715 = vadd.f32 %v1713, %v1714
      %v1716 = vsel %vm959, %v1661, 0.0
      %v1717 = vadd.f32 %v1715, %v1716
      %v1718 = vsel %vm959, %v1662, 0.0
      %v1719 = vadd.f32 %v1717, %v1718
      %v1720 = vsel %vm959, %v1663, 0.0
      %v1721 = vadd.f32 %v1719, %v1720
      %v1722 = vsel %vm959, %v1664, 0.0
      %v1723 = vadd.f32 %v1721, %v1722
      %v1724 = vsel %vm959, %v1665, 0.0
      %v1725 = vadd.f32 %v1723, %v1724
      %v1726 = vsel %vm959, %v1666, 0.0
      %v1727 = vadd.f32 %v1725, %v1726
      %v1728 = vsel %vm959, %v1667, 0.0
      %v1729 = vadd.f32 %v1727, %v1728
      %v1730 = vsel %vm959, %v1668, 0.0
      %v1731 = vadd.f32 %v1729, %v1730
      %v1732 = vrot.slane %v1731, 4
      %v1733 = vadd.f32 %v1731, %v1732
      %v1734 = vrot.slane %v1733, 2
      %v1735 = vadd.f32 %v1733, %v1734
      %v1736 = vrot.slane %v1735, 1
      %v1737 = vadd.f32 %v1735, %v1736
      %v1738 = vsel %vm414, %v1603, %v1737
      %vm1739 = vcmask 58368
      %1740 = vst.msk [vmem:[%s235] sm:$0x3] %vm1739, %v1738
      %p1741 = scmp.lt.s32.totalorder %s17, 1
      %s1742 = scalar_select %p1741, %s17, 1
      %s1743 = smul.addr %s1742, 32
      %s1744 = smul.addr %s1743, 8
      %s1745 = scalar_lea.vmem %s4, %s1744
      %p1746 = scmp.lt.s32.totalorder %s17, 1
      %s1747 = scalar_select %p1746, %s17, 1
      %s1748 = smul.addr %s1747, 2
      %s1749 = scalar_lea.vmem %s5, %s1748
      // Predicated region
      $region37: #{double_conv_forward.4} parent=35 // pred_check
        %p1750 = pneg %p124
      $region38: #{double_conv_forward.4} parent=35 // pred_check_branch
        %1752 = sbr.rel (%p1750) target = $region40
      $region39: #{double_conv_forward.4} parent=35 // pred_region
        _
      $region40: #{double_conv_forward.4} parent=35 // pred_fallthru
        _
      // Predicated region
      $region41: #{double_conv_forward.4} parent=35 // pred_check
        %p1753 = pneg %p150
      $region42: #{double_conv_forward.4} parent=35 // pred_check_branch
        %1755 = sbr.rel (%p1753) target = $region44
      $region43: #{double_conv_forward.4} parent=35 // pred_region
        _
      $region44: #{double_conv_forward.4} parent=35 // pred_fallthru
        _
    $region36: #{double_conv_forward.4} parent=5 // pred_fallthru
      _
    %p1756 = scmp.le.s32.totalorder 2, %s12
    // Predicated region
    $region45: #{double_conv_forward.4} parent=5 // pred_check
      %p1757 = pneg %p1756
    $region46: #{double_conv_forward.4} parent=5 // pred_check_branch
      %1759 = sbr.rel (%p1757) target = $region48
    $region47: #{double_conv_forward.4} parent=5 // pred_region
      %s1760 = ssub.s32 %s12, 2
      // Predicated region
      $region49: #{double_conv_forward.4} parent=47 // pred_check
        %p1761 = pneg %p130
      $region50: #{double_conv_forward.4} parent=47 // pred_check_branch
        %1763 = sbr.rel (%p1761) target = $region52
      $region51: #{double_conv_forward.4} parent=47 // pred_region
        %p1764 = scmp.lt.s32.totalorder %s18, 1
        %s1765 = scalar_select %p1764, %s18, 1
        %s1766 = smul.addr %s1765, 32
        %s1767 = smul.addr %s1766, 8
        %s1768 = scalar_lea.vmem %s4, %s1767
      $region52: #{double_conv_forward.4} parent=47 // pred_fallthru
        _
      // Predicated region
      $region53: #{double_conv_forward.4} parent=47 // pred_check
        %p1769 = pneg %p156
      $region54: #{double_conv_forward.4} parent=47 // pred_check_branch
        %1771 = sbr.rel (%p1769) target = $region56
      $region55: #{double_conv_forward.4} parent=47 // pred_region
        %p1772 = scmp.lt.s32.totalorder %s18, 1
        %s1773 = scalar_select %p1772, %s18, 1
        %s1774 = smul.addr %s1773, 2
        %s1775 = scalar_lea.vmem %s5, %s1774
      $region56: #{double_conv_forward.4} parent=47 // pred_fallthru
        _
    $region48: #{double_conv_forward.4} parent=5 // pred_fallthru
      _
  $region6: #{double_conv_forward.4} parent=0 // loop_footer
    %s16 = sadd.s32 1, %s12
  $region7: #{double_conv_forward.4} parent=0 // loop_footer_branch
    %11 = sbr.rel target = $region3
  $region8: #{double_conv_forward.4} parent=0 // loop_exit
    _

</llo_original>
